<compile_context>
chip_gen: v7x
topology: tpu7x:2x2x1
jax: 0.10.0
libtpu: 0.0.40
codegen_flags: <defaults>
</compile_context>

<pallas_src>
import numpy as np

import jax
import jax.numpy as jnp
from jax.experimental import pallas as pl
from jax.experimental.pallas import tpu as pltpu


# ------------------------------ Pallas kernel ------------------------------

def _lenet_kernel(x_ref,
                  w1b_ref, b1_ref, e1e_ref, e1o_ref, s1e_ref, s1o_ref,
                  w2b_ref, b2_ref, e2e_ref, e2o_ref, s2e_ref, s2o_ref,
                  wf1_ref, bf1_ref, wf2_ref, bf2_ref, wf3_ref, bf3_ref,
                  o_ref):
    f32 = jnp.float32
    bf16 = jnp.bfloat16

    # ---- conv1 (5x5, pad=2 already applied): (32,32) -> (28, 6*28) --------
    # acc1[y, co*28 + x] = sum_{di,dj} xpad[y+di, x+dj] * w1[co, 0, di, dj]
    acc1 = None
    for di in range(5):
        lhs = x_ref[0, di:di + 28, :].astype(bf16)              # (28, 32)
        d = jnp.dot(lhs, w1b_ref[di], preferred_element_type=f32)
        acc1 = d if acc1 is None else acc1 + d                  # (28, 168)

    # ---- maxpool 2x2 (rows, then columns, via 0/1 selection matmuls) ------
    h1 = jnp.maximum(jnp.dot(e1e_ref[...], acc1, preferred_element_type=f32),
                     jnp.dot(e1o_ref[...], acc1, preferred_element_type=f32))   # (14, 168)
    p1 = jnp.maximum(jnp.dot(h1, s1e_ref[...], preferred_element_type=f32),
                     jnp.dot(h1, s1o_ref[...], preferred_element_type=f32))     # (14, 84)
    # Per-channel bias + ReLU (max-pool commutes with bias add + ReLU).
    p1 = jnp.maximum(p1 + b1_ref[...], 0.0)                     # (14, 84), cols = ci*14 + x

    # ---- conv2 (5x5, 6 -> 16, no pad): (14, 6*14) -> (10, 16*10) ----------
    acc2 = None
    for ci in range(6):
        for di in range(5):
            lhs = p1[di:di + 10, ci * 14:(ci + 1) * 14].astype(bf16)   # (10, 14)
            d = jnp.dot(lhs, w2b_ref[ci, di], preferred_element_type=f32)
            acc2 = d if acc2 is None else acc2 + d              # (10, 160)

    # ---- maxpool 2x2 -------------------------------------------------------
    h2 = jnp.maximum(jnp.dot(e2e_ref[...], acc2, preferred_element_type=f32),
                     jnp.dot(e2o_ref[...], acc2, preferred_element_type=f32))   # (5, 160)
    p2 = jnp.maximum(jnp.dot(h2, s2e_ref[...], preferred_element_type=f32),
                     jnp.dot(h2, s2o_ref[...], preferred_element_type=f32))     # (5, 80)
    p2 = jnp.maximum(p2 + b2_ref[...], 0.0)                     # (5, 80), cols = co*5 + x

    # ---- fc1 (400 -> 120): weight pre-permuted to the (y, co*5+x) layout ---
    z1 = None
    for y in range(5):
        lhs = p2[y:y + 1, :].astype(bf16)                       # (1, 80)
        d = jnp.dot(lhs, wf1_ref[y], preferred_element_type=f32)
        z1 = d if z1 is None else z1 + d                        # (1, 120)
    z1 = jnp.maximum(z1 + bf1_ref[...], 0.0)

    # ---- fc2 (120 -> 84) + ReLU, fc3 (84 -> 10) ----------------------------
    z2 = jnp.maximum(
        jnp.dot(z1.astype(bf16), wf2_ref[...], preferred_element_type=f32) + bf2_ref[...],
        0.0)                                                    # (1, 84)
    z3 = (jnp.dot(z2.astype(bf16), wf3_ref[...], preferred_element_type=f32)
          + bf3_ref[...])                                       # (1, 10)

    o_ref[0] = z3


# --------------------------- host-side weight packing -----------------------

def init_params(key):
    """Torch-layout LeNet parameters (same init as the original version)."""
    ks = jax.random.split(key, 10)

    def u(k, shape, fan_in):
        bound = 1.0 / jnp.sqrt(fan_in)
        return jax.random.uniform(k, shape, jnp.float32, -bound, bound)

    return {
        "conv1_w": u(ks[0], (6, 1, 5, 5), 1 * 5 * 5),
        "conv1_b": u(ks[1], (6,), 1 * 5 * 5),
        "conv2_w": u(ks[2], (16, 6, 5, 5), 6 * 5 * 5),
        "conv2_b": u(ks[3], (16,), 6 * 5 * 5),
        "fc1_w": u(ks[4], (120, 400), 400),
        "fc1_b": u(ks[5], (120,), 400),
        "fc2_w": u(ks[6], (84, 120), 120),
        "fc2_b": u(ks[7], (84,), 120),
        "fc3_w": u(ks[8], (10, 84), 84),
        "fc3_b": u(ks[9], (10,), 84),
    }


def _sel_even_odd(n):
    """0/1 matrices (n, n//2) picking even / odd columns of an (., n) array."""
    m = n // 2
    e = np.zeros((n, m), np.float32)
    o = np.zeros((n, m), np.float32)
    e[2 * np.arange(m), np.arange(m)] = 1.0
    o[2 * np.arange(m) + 1, np.arange(m)] = 1.0
    return e, o


def pack_params(params):
    """One-time (outside jit) repack of torch-layout params for the kernel."""
    f = np.float32
    w1 = np.asarray(params["conv1_w"], f)    # (6, 1, 5, 5)
    b1 = np.asarray(params["conv1_b"], f)
    w2 = np.asarray(params["conv2_w"], f)    # (16, 6, 5, 5)
    b2 = np.asarray(params["conv2_b"], f)
    fw1 = np.asarray(params["fc1_w"], f)     # (120, 400)
    fb1 = np.asarray(params["fc1_b"], f)
    fw2 = np.asarray(params["fc2_w"], f)     # (84, 120)
    fb2 = np.asarray(params["fc2_b"], f)
    fw3 = np.asarray(params["fc3_w"], f)     # (10, 84)
    fb3 = np.asarray(params["fc3_b"], f)

    # Banded conv1 weights: out[y, co*28+x] = sum_di (xpad[y+di, :] @ w1b[di])[co*28+x]
    w1b = np.zeros((5, 32, 6 * 28), f)
    for co in range(6):
        for di in range(5):
            for dj in range(5):
                for x in range(28):
                    w1b[di, x + dj, co * 28 + x] = w1[co, 0, di, dj]

    # Banded conv2 weights: out[y, co*10+x] = sum_{ci,di} (p1[ci][y+di,:] @ w2b[ci,di])[co*10+x]
    w2b = np.zeros((6, 5, 14, 16 * 10), f)
    for co in range(16):
        for ci in range(6):
            for di in range(5):
                for dj in range(5):
                    for x in range(10):
                        w2b[ci, di, x + dj, co * 10 + x] = w2[co, ci, di, dj]

    # Max-pool selection matrices (even/odd rows and columns).
    s1e, s1o = _sel_even_odd(6 * 28)                  # (168, 84)
    e1c, e1d = _sel_even_odd(28)
    e1e, e1o = e1c.T.copy(), e1d.T.copy()             # (14, 28)
    s2e, s2o = _sel_even_odd(16 * 10)                 # (160, 80)
    e2c, e2d = _sel_even_odd(10)
    e2e, e2o = e2c.T.copy(), e2d.T.copy()             # (5, 10)

    # fc1 weight permuted to the kernel's pooled layout (y, co*5+x):
    # torch flatten index = co*25 + y*5 + x.
    wf1 = np.transpose(fw1.reshape(120, 16, 5, 5), (2, 1, 3, 0)).reshape(5, 80, 120)

    bf16 = jnp.bfloat16
    return {
        "w1b": jnp.asarray(w1b, bf16),
        "b1": jnp.asarray(np.repeat(b1, 14).reshape(1, 84)),
        "e1e": jnp.asarray(e1e), "e1o": jnp.asarray(e1o),
        "s1e": jnp.asarray(s1e), "s1o": jnp.asarray(s1o),
        "w2b": jnp.asarray(w2b, bf16),
        "b2": jnp.asarray(np.repeat(b2, 5).reshape(1, 80)),
        "e2e": jnp.asarray(e2e), "e2o": jnp.asarray(e2o),
        "s2e": jnp.asarray(s2e), "s2o": jnp.asarray(s2o),
        "wf1": jnp.asarray(wf1, bf16), "bf1": jnp.asarray(fb1.reshape(1, 120)),
        "wf2": jnp.asarray(fw2.T.copy(), bf16), "bf2": jnp.asarray(fb2.reshape(1, 84)),
        "wf3": jnp.asarray(fw3.T.copy(), bf16), "bf3": jnp.asarray(fb3.reshape(1, 10)),
    }


_PACKED_ORDER = ("w1b", "b1", "e1e", "e1o", "s1e", "s1o",
                 "w2b", "b2", "e2e", "e2o", "s2e", "s2o",
                 "wf1", "bf1", "wf2", "bf2", "wf3", "bf3")


def _full_spec(arr):
    nd = arr.ndim
    return pl.BlockSpec(arr.shape, lambda b, _nd=nd: (0,) * _nd)


# --------------------------------- forward ----------------------------------

@jax.jit
def lenet_forward(x_nchw, packed):
    """x_nchw: (B, 1, 28, 28) float32 -> logits (B, 10) float32."""
    B = x_nchw.shape[0]
    xpad = jnp.pad(x_nchw[:, 0, :, :], ((0, 0), (2, 2), (2, 2)))   # (B, 32, 32)
    weights = [packed[k] for k in _PACKED_ORDER]

    in_specs = [pl.BlockSpec((1, 32, 32), lambda b: (b, 0, 0))]
    in_specs += [_full_spec(w) for w in weights]

    out = pl.pallas_call(
        _lenet_kernel,
        out_shape=jax.ShapeDtypeStruct((B, 1, 10), jnp.float32),
        grid=(B,),
        in_specs=in_specs,
        out_specs=pl.BlockSpec((1, 1, 10), lambda b: (b, 0, 0)),
        compiler_params=pltpu.CompilerParams(
            dimension_semantics=("parallel",),
            vmem_limit_bytes=32 * 1024 * 1024,
        ),
    )(xpad, *weights)
    return out.reshape(B, 10)


# ----------------------------------- main ------------------------------------

if __name__ == "__main__":
    key = jax.random.PRNGKey(0)
    k_x, k_p = jax.random.split(key)
    # 28x28 single-channel input so the flatten yields 16*5*5 = 400.
    x = jax.random.normal(k_x, (2, 1, 28, 28), jnp.float32)

    params = init_params(k_p)
    packed = pack_params(params)          # one-time host-side weight packing

    out = lenet_forward(x, packed)
    out = jax.block_until_ready(out)
    assert out.shape == (2, 10) and out.dtype == jnp.float32
    assert bool(jnp.all(jnp.isfinite(out)))
    print("KERNEL_OK")
</pallas_src>

<mosaic_0001>
module attributes {stable_mosaic.version = 11 : i64} {
  func.func @_lenet_kernel(%arg0: i32, %arg1: memref<1x32x32xf32, #tpu.memory_space<vmem>>, %arg2: memref<5x32x168xbf16, #tpu.memory_space<vmem>>, %arg3: memref<1x84xf32, #tpu.memory_space<vmem>>, %arg4: memref<14x28xf32, #tpu.memory_space<vmem>>, %arg5: memref<14x28xf32, #tpu.memory_space<vmem>>, %arg6: memref<168x84xf32, #tpu.memory_space<vmem>>, %arg7: memref<168x84xf32, #tpu.memory_space<vmem>>, %arg8: memref<6x5x14x160xbf16, #tpu.memory_space<vmem>>, %arg9: memref<1x80xf32, #tpu.memory_space<vmem>>, %arg10: memref<5x10xf32, #tpu.memory_space<vmem>>, %arg11: memref<5x10xf32, #tpu.memory_space<vmem>>, %arg12: memref<160x80xf32, #tpu.memory_space<vmem>>, %arg13: memref<160x80xf32, #tpu.memory_space<vmem>>, %arg14: memref<5x80x120xbf16, #tpu.memory_space<vmem>>, %arg15: memref<1x120xf32, #tpu.memory_space<vmem>>, %arg16: memref<120x84xbf16, #tpu.memory_space<vmem>>, %arg17: memref<1x84xf32, #tpu.memory_space<vmem>>, %arg18: memref<84x10xbf16, #tpu.memory_space<vmem>>, %arg19: memref<1x10xf32, #tpu.memory_space<vmem>>, %arg20: memref<1x1x10xf32, #tpu.memory_space<vmem>>) attributes {dimension_semantics = [#tpu.dimension_semantics<parallel>], iteration_bounds = array<i64: 2>, scalar_prefetch = 0 : i64, scratch_operands = 0 : i64, tpu.core_type = #tpu.core_type<tc>, window_params = [{transform_indices = @transform_0, window_bounds = array<i64: 1, 32, 32>}, {pipeline_mode = #tpu.pipeline_mode<synchronous>, transform_indices = @transform_1, window_bounds = array<i64: 5, 32, 168>}, {pipeline_mode = #tpu.pipeline_mode<synchronous>, transform_indices = @transform_2, window_bounds = array<i64: 1, 84>}, {pipeline_mode = #tpu.pipeline_mode<synchronous>, transform_indices = @transform_3, window_bounds = array<i64: 14, 28>}, {pipeline_mode = #tpu.pipeline_mode<synchronous>, transform_indices = @transform_4, window_bounds = array<i64: 14, 28>}, {pipeline_mode = #tpu.pipeline_mode<synchronous>, transform_indices = @transform_5, window_bounds = array<i64: 168, 84>}, {pipeline_mode = #tpu.pipeline_mode<synchronous>, transform_indices = @transform_6, window_bounds = array<i64: 168, 84>}, {pipeline_mode = #tpu.pipeline_mode<synchronous>, transform_indices = @transform_7, window_bounds = array<i64: 6, 5, 14, 160>}, {pipeline_mode = #tpu.pipeline_mode<synchronous>, transform_indices = @transform_8, window_bounds = array<i64: 1, 80>}, {pipeline_mode = #tpu.pipeline_mode<synchronous>, transform_indices = @transform_9, window_bounds = array<i64: 5, 10>}, {pipeline_mode = #tpu.pipeline_mode<synchronous>, transform_indices = @transform_10, window_bounds = array<i64: 5, 10>}, {pipeline_mode = #tpu.pipeline_mode<synchronous>, transform_indices = @transform_11, window_bounds = array<i64: 160, 80>}, {pipeline_mode = #tpu.pipeline_mode<synchronous>, transform_indices = @transform_12, window_bounds = array<i64: 160, 80>}, {pipeline_mode = #tpu.pipeline_mode<synchronous>, transform_indices = @transform_13, window_bounds = array<i64: 5, 80, 120>}, {pipeline_mode = #tpu.pipeline_mode<synchronous>, transform_indices = @transform_14, window_bounds = array<i64: 1, 120>}, {pipeline_mode = #tpu.pipeline_mode<synchronous>, transform_indices = @transform_15, window_bounds = array<i64: 120, 84>}, {pipeline_mode = #tpu.pipeline_mode<synchronous>, transform_indices = @transform_16, window_bounds = array<i64: 1, 84>}, {pipeline_mode = #tpu.pipeline_mode<synchronous>, transform_indices = @transform_17, window_bounds = array<i64: 84, 10>}, {pipeline_mode = #tpu.pipeline_mode<synchronous>, transform_indices = @transform_18, window_bounds = array<i64: 1, 10>}, {transform_indices = @transform_19, window_bounds = array<i64: 1, 1, 10>}]} {
    %c0 = arith.constant 0 : index
    %c0_0 = arith.constant 0 : index
    %c0_1 = arith.constant 0 : index
    %0 = vector.load %arg1[%c0, %c0_0, %c0_1] : memref<1x32x32xf32, #tpu.memory_space<vmem>>, vector<1x28x32xf32>
    %1 = vector.shape_cast %0 : vector<1x28x32xf32> to vector<28x32xf32>
    %2 = arith.truncf %1 : vector<28x32xf32> to vector<28x32xbf16>
    %c0_2 = arith.constant 0 : index
    %c0_3 = arith.constant 0 : index
    %c0_4 = arith.constant 0 : index
    %3 = vector.load %arg2[%c0_2, %c0_3, %c0_4] : memref<5x32x168xbf16, #tpu.memory_space<vmem>>, vector<1x32x168xbf16>
    %4 = vector.shape_cast %3 : vector<1x32x168xbf16> to vector<32x168xbf16>
    %cst = arith.constant dense<0.000000e+00> : vector<28x168xf32>
    %5 = tpu.matmul %2, %4, %cst {dimension_numbers = #tpu.dot_dimension_numbers<[1], [0], [0], [1], [0, 0, 1, 1], [], []>} : vector<28x32xbf16>, vector<32x168xbf16>, vector<28x168xf32> -> vector<28x168xf32>
    %c0_5 = arith.constant 0 : index
    %c1 = arith.constant 1 : index
    %c0_6 = arith.constant 0 : index
    %6 = vector.load %arg1[%c0_5, %c1, %c0_6] : memref<1x32x32xf32, #tpu.memory_space<vmem>>, vector<1x28x32xf32>
    %7 = vector.shape_cast %6 : vector<1x28x32xf32> to vector<28x32xf32>
    %8 = arith.truncf %7 : vector<28x32xf32> to vector<28x32xbf16>
    %c1_7 = arith.constant 1 : index
    %c0_8 = arith.constant 0 : index
    %c0_9 = arith.constant 0 : index
    %9 = vector.load %arg2[%c1_7, %c0_8, %c0_9] : memref<5x32x168xbf16, #tpu.memory_space<vmem>>, vector<1x32x168xbf16>
    %10 = vector.shape_cast %9 : vector<1x32x168xbf16> to vector<32x168xbf16>
    %cst_10 = arith.constant dense<0.000000e+00> : vector<28x168xf32>
    %11 = tpu.matmul %8, %10, %cst_10 {dimension_numbers = #tpu.dot_dimension_numbers<[1], [0], [0], [1], [0, 0, 1, 1], [], []>} : vector<28x32xbf16>, vector<32x168xbf16>, vector<28x168xf32> -> vector<28x168xf32>
    %12 = arith.addf %5, %11 : vector<28x168xf32>
    %c0_11 = arith.constant 0 : index
    %c2 = arith.constant 2 : index
    %c0_12 = arith.constant 0 : index
    %13 = vector.load %arg1[%c0_11, %c2, %c0_12] : memref<1x32x32xf32, #tpu.memory_space<vmem>>, vector<1x28x32xf32>
    %14 = vector.shape_cast %13 : vector<1x28x32xf32> to vector<28x32xf32>
    %15 = arith.truncf %14 : vector<28x32xf32> to vector<28x32xbf16>
    %c2_13 = arith.constant 2 : index
    %c0_14 = arith.constant 0 : index
    %c0_15 = arith.constant 0 : index
    %16 = vector.load %arg2[%c2_13, %c0_14, %c0_15] : memref<5x32x168xbf16, #tpu.memory_space<vmem>>, vector<1x32x168xbf16>
    %17 = vector.shape_cast %16 : vector<1x32x168xbf16> to vector<32x168xbf16>
    %cst_16 = arith.constant dense<0.000000e+00> : vector<28x168xf32>
    %18 = tpu.matmul %15, %17, %cst_16 {dimension_numbers = #tpu.dot_dimension_numbers<[1], [0], [0], [1], [0, 0, 1, 1], [], []>} : vector<28x32xbf16>, vector<32x168xbf16>, vector<28x168xf32> -> vector<28x168xf32>
    %19 = arith.addf %12, %18 : vector<28x168xf32>
    %c0_17 = arith.constant 0 : index
    %c3 = arith.constant 3 : index
    %c0_18 = arith.constant 0 : index
    %20 = vector.load %arg1[%c0_17, %c3, %c0_18] : memref<1x32x32xf32, #tpu.memory_space<vmem>>, vector<1x28x32xf32>
    %21 = vector.shape_cast %20 : vector<1x28x32xf32> to vector<28x32xf32>
    %22 = arith.truncf %21 : vector<28x32xf32> to vector<28x32xbf16>
    %c3_19 = arith.constant 3 : index
    %c0_20 = arith.constant 0 : index
    %c0_21 = arith.constant 0 : index
    %23 = vector.load %arg2[%c3_19, %c0_20, %c0_21] : memref<5x32x168xbf16, #tpu.memory_space<vmem>>, vector<1x32x168xbf16>
    %24 = vector.shape_cast %23 : vector<1x32x168xbf16> to vector<32x168xbf16>
    %cst_22 = arith.constant dense<0.000000e+00> : vector<28x168xf32>
    %25 = tpu.matmul %22, %24, %cst_22 {dimension_numbers = #tpu.dot_dimension_numbers<[1], [0], [0], [1], [0, 0, 1, 1], [], []>} : vector<28x32xbf16>, vector<32x168xbf16>, vector<28x168xf32> -> vector<28x168xf32>
    %26 = arith.addf %19, %25 : vector<28x168xf32>
    %c0_23 = arith.constant 0 : index
    %c4 = arith.constant 4 : index
    %c0_24 = arith.constant 0 : index
    %27 = vector.load %arg1[%c0_23, %c4, %c0_24] : memref<1x32x32xf32, #tpu.memory_space<vmem>>, vector<1x28x32xf32>
    %28 = vector.shape_cast %27 : vector<1x28x32xf32> to vector<28x32xf32>
    %29 = arith.truncf %28 : vector<28x32xf32> to vector<28x32xbf16>
    %c4_25 = arith.constant 4 : index
    %c0_26 = arith.constant 0 : index
    %c0_27 = arith.constant 0 : index
    %30 = vector.load %arg2[%c4_25, %c0_26, %c0_27] : memref<5x32x168xbf16, #tpu.memory_space<vmem>>, vector<1x32x168xbf16>
    %31 = vector.shape_cast %30 : vector<1x32x168xbf16> to vector<32x168xbf16>
    %cst_28 = arith.constant dense<0.000000e+00> : vector<28x168xf32>
    %32 = tpu.matmul %29, %31, %cst_28 {dimension_numbers = #tpu.dot_dimension_numbers<[1], [0], [0], [1], [0, 0, 1, 1], [], []>} : vector<28x32xbf16>, vector<32x168xbf16>, vector<28x168xf32> -> vector<28x168xf32>
    %33 = arith.addf %26, %32 : vector<28x168xf32>
    %c0_29 = arith.constant 0 : index
    %c0_30 = arith.constant 0 : index
    %34 = vector.load %arg4[%c0_29, %c0_30] : memref<14x28xf32, #tpu.memory_space<vmem>>, vector<14x28xf32>
    %cst_31 = arith.constant dense<0.000000e+00> : vector<14x168xf32>
    %35 = tpu.matmul %34, %33, %cst_31 {dimension_numbers = #tpu.dot_dimension_numbers<[1], [0], [0], [1], [0, 0, 1, 1], [], []>} : vector<14x28xf32>, vector<28x168xf32>, vector<14x168xf32> -> vector<14x168xf32>
    %c0_32 = arith.constant 0 : index
    %c0_33 = arith.constant 0 : index
    %36 = vector.load %arg5[%c0_32, %c0_33] : memref<14x28xf32, #tpu.memory_space<vmem>>, vector<14x28xf32>
    %cst_34 = arith.constant dense<0.000000e+00> : vector<14x168xf32>
    %37 = tpu.matmul %36, %33, %cst_34 {dimension_numbers = #tpu.dot_dimension_numbers<[1], [0], [0], [1], [0, 0, 1, 1], [], []>} : vector<14x28xf32>, vector<28x168xf32>, vector<14x168xf32> -> vector<14x168xf32>
    %38 = arith.maximumf %35, %37 : vector<14x168xf32>
    %c0_35 = arith.constant 0 : index
    %c0_36 = arith.constant 0 : index
    %39 = vector.load %arg6[%c0_35, %c0_36] : memref<168x84xf32, #tpu.memory_space<vmem>>, vector<168x84xf32>
    %cst_37 = arith.constant dense<0.000000e+00> : vector<14x84xf32>
    %40 = tpu.matmul %38, %39, %cst_37 {dimension_numbers = #tpu.dot_dimension_numbers<[1], [0], [0], [1], [0, 0, 1, 1], [], []>} : vector<14x168xf32>, vector<168x84xf32>, vector<14x84xf32> -> vector<14x84xf32>
    %c0_38 = arith.constant 0 : index
    %c0_39 = arith.constant 0 : index
    %41 = vector.load %arg7[%c0_38, %c0_39] : memref<168x84xf32, #tpu.memory_space<vmem>>, vector<168x84xf32>
    %cst_40 = arith.constant dense<0.000000e+00> : vector<14x84xf32>
    %42 = tpu.matmul %38, %41, %cst_40 {dimension_numbers = #tpu.dot_dimension_numbers<[1], [0], [0], [1], [0, 0, 1, 1], [], []>} : vector<14x168xf32>, vector<168x84xf32>, vector<14x84xf32> -> vector<14x84xf32>
    %43 = arith.maximumf %40, %42 : vector<14x84xf32>
    %c0_41 = arith.constant 0 : index
    %c0_42 = arith.constant 0 : index
    %44 = vector.load %arg3[%c0_41, %c0_42] : memref<1x84xf32, #tpu.memory_space<vmem>>, vector<1x84xf32>
    %45 = vector.broadcast %44 : vector<1x84xf32> to vector<14x84xf32>
    %46 = arith.addf %43, %45 : vector<14x84xf32>
    %cst_43 = arith.constant 0.000000e+00 : f32
    %47 = vector.broadcast %cst_43 : f32 to vector<14x84xf32>
    %48 = arith.maximumf %46, %47 : vector<14x84xf32>
    %49 = vector.extract_strided_slice %48 {offsets = [0, 0], sizes = [10, 14], strides = [1, 1]} : vector<14x84xf32> to vector<10x14xf32>
    %50 = arith.truncf %49 : vector<10x14xf32> to vector<10x14xbf16>
    %c0_44 = arith.constant 0 : index
    %c0_45 = arith.constant 0 : index
    %c0_46 = arith.constant 0 : index
    %c0_47 = arith.constant 0 : index
    %51 = vector.load %arg8[%c0_44, %c0_45, %c0_46, %c0_47] : memref<6x5x14x160xbf16, #tpu.memory_space<vmem>>, vector<1x1x14x160xbf16>
    %52 = vector.shape_cast %51 : vector<1x1x14x160xbf16> to vector<14x160xbf16>
    %cst_48 = arith.constant dense<0.000000e+00> : vector<10x160xf32>
    %53 = tpu.matmul %50, %52, %cst_48 {dimension_numbers = #tpu.dot_dimension_numbers<[1], [0], [0], [1], [0, 0, 1, 1], [], []>} : vector<10x14xbf16>, vector<14x160xbf16>, vector<10x160xf32> -> vector<10x160xf32>
    %54 = vector.extract_strided_slice %48 {offsets = [1, 0], sizes = [10, 14], strides = [1, 1]} : vector<14x84xf32> to vector<10x14xf32>
    %55 = arith.truncf %54 : vector<10x14xf32> to vector<10x14xbf16>
    %c0_49 = arith.constant 0 : index
    %c1_50 = arith.constant 1 : index
    %c0_51 = arith.constant 0 : index
    %c0_52 = arith.constant 0 : index
    %56 = vector.load %arg8[%c0_49, %c1_50, %c0_51, %c0_52] : memref<6x5x14x160xbf16, #tpu.memory_space<vmem>>, vector<1x1x14x160xbf16>
    %57 = vector.shape_cast %56 : vector<1x1x14x160xbf16> to vector<14x160xbf16>
    %cst_53 = arith.constant dense<0.000000e+00> : vector<10x160xf32>
    %58 = tpu.matmul %55, %57, %cst_53 {dimension_numbers = #tpu.dot_dimension_numbers<[1], [0], [0], [1], [0, 0, 1, 1], [], []>} : vector<10x14xbf16>, vector<14x160xbf16>, vector<10x160xf32> -> vector<10x160xf32>
    %59 = arith.addf %53, %58 : vector<10x160xf32>
    %60 = vector.extract_strided_slice %48 {offsets = [2, 0], sizes = [10, 14], strides = [1, 1]} : vector<14x84xf32> to vector<10x14xf32>
    %61 = arith.truncf %60 : vector<10x14xf32> to vector<10x14xbf16>
    %c0_54 = arith.constant 0 : index
    %c2_55 = arith.constant 2 : index
    %c0_56 = arith.constant 0 : index
    %c0_57 = arith.constant 0 : index
    %62 = vector.load %arg8[%c0_54, %c2_55, %c0_56, %c0_57] : memref<6x5x14x160xbf16, #tpu.memory_space<vmem>>, vector<1x1x14x160xbf16>
    %63 = vector.shape_cast %62 : vector<1x1x14x160xbf16> to vector<14x160xbf16>
    %cst_58 = arith.constant dense<0.000000e+00> : vector<10x160xf32>
    %64 = tpu.matmul %61, %63, %cst_58 {dimension_numbers = #tpu.dot_dimension_numbers<[1], [0], [0], [1], [0, 0, 1, 1], [], []>} : vector<10x14xbf16>, vector<14x160xbf16>, vector<10x160xf32> -> vector<10x160xf32>
    %65 = arith.addf %59, %64 : vector<10x160xf32>
    %66 = vector.extract_strided_slice %48 {offsets = [3, 0], sizes = [10, 14], strides = [1, 1]} : vector<14x84xf32> to vector<10x14xf32>
    %67 = arith.truncf %66 : vector<10x14xf32> to vector<10x14xbf16>
    %c0_59 = arith.constant 0 : index
    %c3_60 = arith.constant 3 : index
    %c0_61 = arith.constant 0 : index
    %c0_62 = arith.constant 0 : index
    %68 = vector.load %arg8[%c0_59, %c3_60, %c0_61, %c0_62] : memref<6x5x14x160xbf16, #tpu.memory_space<vmem>>, vector<1x1x14x160xbf16>
    %69 = vector.shape_cast %68 : vector<1x1x14x160xbf16> to vector<14x160xbf16>
    %cst_63 = arith.constant dense<0.000000e+00> : vector<10x160xf32>
    %70 = tpu.matmul %67, %69, %cst_63 {dimension_numbers = #tpu.dot_dimension_numbers<[1], [0], [0], [1], [0, 0, 1, 1], [], []>} : vector<10x14xbf16>, vector<14x160xbf16>, vector<10x160xf32> -> vector<10x160xf32>
    %71 = arith.addf %65, %70 : vector<10x160xf32>
    %72 = vector.extract_strided_slice %48 {offsets = [4, 0], sizes = [10, 14], strides = [1, 1]} : vector<14x84xf32> to vector<10x14xf32>
    %73 = arith.truncf %72 : vector<10x14xf32> to vector<10x14xbf16>
    %c0_64 = arith.constant 0 : index
    %c4_65 = arith.constant 4 : index
    %c0_66 = arith.constant 0 : index
    %c0_67 = arith.constant 0 : index
    %74 = vector.load %arg8[%c0_64, %c4_65, %c0_66, %c0_67] : memref<6x5x14x160xbf16, #tpu.memory_space<vmem>>, vector<1x1x14x160xbf16>
    %75 = vector.shape_cast %74 : vector<1x1x14x160xbf16> to vector<14x160xbf16>
    %cst_68 = arith.constant dense<0.000000e+00> : vector<10x160xf32>
    %76 = tpu.matmul %73, %75, %cst_68 {dimension_numbers = #tpu.dot_dimension_numbers<[1], [0], [0], [1], [0, 0, 1, 1], [], []>} : vector<10x14xbf16>, vector<14x160xbf16>, vector<10x160xf32> -> vector<10x160xf32>
    %77 = arith.addf %71, %76 : vector<10x160xf32>
    %78 = vector.extract_strided_slice %48 {offsets = [0, 14], sizes = [10, 14], strides = [1, 1]} : vector<14x84xf32> to vector<10x14xf32>
    %79 = arith.truncf %78 : vector<10x14xf32> to vector<10x14xbf16>
    %c1_69 = arith.constant 1 : index
    %c0_70 = arith.constant 0 : index
    %c0_71 = arith.constant 0 : index
    %c0_72 = arith.constant 0 : index
    %80 = vector.load %arg8[%c1_69, %c0_70, %c0_71, %c0_72] : memref<6x5x14x160xbf16, #tpu.memory_space<vmem>>, vector<1x1x14x160xbf16>
    %81 = vector.shape_cast %80 : vector<1x1x14x160xbf16> to vector<14x160xbf16>
    %cst_73 = arith.constant dense<0.000000e+00> : vector<10x160xf32>
    %82 = tpu.matmul %79, %81, %cst_73 {dimension_numbers = #tpu.dot_dimension_numbers<[1], [0], [0], [1], [0, 0, 1, 1], [], []>} : vector<10x14xbf16>, vector<14x160xbf16>, vector<10x160xf32> -> vector<10x160xf32>
    %83 = arith.addf %77, %82 : vector<10x160xf32>
    %84 = vector.extract_strided_slice %48 {offsets = [1, 14], sizes = [10, 14], strides = [1, 1]} : vector<14x84xf32> to vector<10x14xf32>
    %85 = arith.truncf %84 : vector<10x14xf32> to vector<10x14xbf16>
    %c1_74 = arith.constant 1 : index
    %c1_75 = arith.constant 1 : index
    %c0_76 = arith.constant 0 : index
    %c0_77 = arith.constant 0 : index
    %86 = vector.load %arg8[%c1_74, %c1_75, %c0_76, %c0_77] : memref<6x5x14x160xbf16, #tpu.memory_space<vmem>>, vector<1x1x14x160xbf16>
    %87 = vector.shape_cast %86 : vector<1x1x14x160xbf16> to vector<14x160xbf16>
    %cst_78 = arith.constant dense<0.000000e+00> : vector<10x160xf32>
    %88 = tpu.matmul %85, %87, %cst_78 {dimension_numbers = #tpu.dot_dimension_numbers<[1], [0], [0], [1], [0, 0, 1, 1], [], []>} : vector<10x14xbf16>, vector<14x160xbf16>, vector<10x160xf32> -> vector<10x160xf32>
    %89 = arith.addf %83, %88 : vector<10x160xf32>
    %90 = vector.extract_strided_slice %48 {offsets = [2, 14], sizes = [10, 14], strides = [1, 1]} : vector<14x84xf32> to vector<10x14xf32>
    %91 = arith.truncf %90 : vector<10x14xf32> to vector<10x14xbf16>
    %c1_79 = arith.constant 1 : index
    %c2_80 = arith.constant 2 : index
    %c0_81 = arith.constant 0 : index
    %c0_82 = arith.constant 0 : index
    %92 = vector.load %arg8[%c1_79, %c2_80, %c0_81, %c0_82] : memref<6x5x14x160xbf16, #tpu.memory_space<vmem>>, vector<1x1x14x160xbf16>
    %93 = vector.shape_cast %92 : vector<1x1x14x160xbf16> to vector<14x160xbf16>
    %cst_83 = arith.constant dense<0.000000e+00> : vector<10x160xf32>
    %94 = tpu.matmul %91, %93, %cst_83 {dimension_numbers = #tpu.dot_dimension_numbers<[1], [0], [0], [1], [0, 0, 1, 1], [], []>} : vector<10x14xbf16>, vector<14x160xbf16>, vector<10x160xf32> -> vector<10x160xf32>
    %95 = arith.addf %89, %94 : vector<10x160xf32>
    %96 = vector.extract_strided_slice %48 {offsets = [3, 14], sizes = [10, 14], strides = [1, 1]} : vector<14x84xf32> to vector<10x14xf32>
    %97 = arith.truncf %96 : vector<10x14xf32> to vector<10x14xbf16>
    %c1_84 = arith.constant 1 : index
    %c3_85 = arith.constant 3 : index
    %c0_86 = arith.constant 0 : index
    %c0_87 = arith.constant 0 : index
    %98 = vector.load %arg8[%c1_84, %c3_85, %c0_86, %c0_87] : memref<6x5x14x160xbf16, #tpu.memory_space<vmem>>, vector<1x1x14x160xbf16>
    %99 = vector.shape_cast %98 : vector<1x1x14x160xbf16> to vector<14x160xbf16>
    %cst_88 = arith.constant dense<0.000000e+00> : vector<10x160xf32>
    %100 = tpu.matmul %97, %99, %cst_88 {dimension_numbers = #tpu.dot_dimension_numbers<[1], [0], [0], [1], [0, 0, 1, 1], [], []>} : vector<10x14xbf16>, vector<14x160xbf16>, vector<10x160xf32> -> vector<10x160xf32>
    %101 = arith.addf %95, %100 : vector<10x160xf32>
    %102 = vector.extract_strided_slice %48 {offsets = [4, 14], sizes = [10, 14], strides = [1, 1]} : vector<14x84xf32> to vector<10x14xf32>
    %103 = arith.truncf %102 : vector<10x14xf32> to vector<10x14xbf16>
    %c1_89 = arith.constant 1 : index
    %c4_90 = arith.constant 4 : index
    %c0_91 = arith.constant 0 : index
    %c0_92 = arith.constant 0 : index
    %104 = vector.load %arg8[%c1_89, %c4_90, %c0_91, %c0_92] : memref<6x5x14x160xbf16, #tpu.memory_space<vmem>>, vector<1x1x14x160xbf16>
    %105 = vector.shape_cast %104 : vector<1x1x14x160xbf16> to vector<14x160xbf16>
    %cst_93 = arith.constant dense<0.000000e+00> : vector<10x160xf32>
    %106 = tpu.matmul %103, %105, %cst_93 {dimension_numbers = #tpu.dot_dimension_numbers<[1], [0], [0], [1], [0, 0, 1, 1], [], []>} : vector<10x14xbf16>, vector<14x160xbf16>, vector<10x160xf32> -> vector<10x160xf32>
    %107 = arith.addf %101, %106 : vector<10x160xf32>
    %108 = vector.extract_strided_slice %48 {offsets = [0, 28], sizes = [10, 14], strides = [1, 1]} : vector<14x84xf32> to vector<10x14xf32>
    %109 = arith.truncf %108 : vector<10x14xf32> to vector<10x14xbf16>
    %c2_94 = arith.constant 2 : index
    %c0_95 = arith.constant 0 : index
    %c0_96 = arith.constant 0 : index
    %c0_97 = arith.constant 0 : index
    %110 = vector.load %arg8[%c2_94, %c0_95, %c0_96, %c0_97] : memref<6x5x14x160xbf16, #tpu.memory_space<vmem>>, vector<1x1x14x160xbf16>
    %111 = vector.shape_cast %110 : vector<1x1x14x160xbf16> to vector<14x160xbf16>
    %cst_98 = arith.constant dense<0.000000e+00> : vector<10x160xf32>
    %112 = tpu.matmul %109, %111, %cst_98 {dimension_numbers = #tpu.dot_dimension_numbers<[1], [0], [0], [1], [0, 0, 1, 1], [], []>} : vector<10x14xbf16>, vector<14x160xbf16>, vector<10x160xf32> -> vector<10x160xf32>
    %113 = arith.addf %107, %112 : vector<10x160xf32>
    %114 = vector.extract_strided_slice %48 {offsets = [1, 28], sizes = [10, 14], strides = [1, 1]} : vector<14x84xf32> to vector<10x14xf32>
    %115 = arith.truncf %114 : vector<10x14xf32> to vector<10x14xbf16>
    %c2_99 = arith.constant 2 : index
    %c1_100 = arith.constant 1 : index
    %c0_101 = arith.constant 0 : index
    %c0_102 = arith.constant 0 : index
    %116 = vector.load %arg8[%c2_99, %c1_100, %c0_101, %c0_102] : memref<6x5x14x160xbf16, #tpu.memory_space<vmem>>, vector<1x1x14x160xbf16>
    %117 = vector.shape_cast %116 : vector<1x1x14x160xbf16> to vector<14x160xbf16>
    %cst_103 = arith.constant dense<0.000000e+00> : vector<10x160xf32>
    %118 = tpu.matmul %115, %117, %cst_103 {dimension_numbers = #tpu.dot_dimension_numbers<[1], [0], [0], [1], [0, 0, 1, 1], [], []>} : vector<10x14xbf16>, vector<14x160xbf16>, vector<10x160xf32> -> vector<10x160xf32>
    %119 = arith.addf %113, %118 : vector<10x160xf32>
    %120 = vector.extract_strided_slice %48 {offsets = [2, 28], sizes = [10, 14], strides = [1, 1]} : vector<14x84xf32> to vector<10x14xf32>
    %121 = arith.truncf %120 : vector<10x14xf32> to vector<10x14xbf16>
    %c2_104 = arith.constant 2 : index
    %c2_105 = arith.constant 2 : index
    %c0_106 = arith.constant 0 : index
    %c0_107 = arith.constant 0 : index
    %122 = vector.load %arg8[%c2_104, %c2_105, %c0_106, %c0_107] : memref<6x5x14x160xbf16, #tpu.memory_space<vmem>>, vector<1x1x14x160xbf16>
    %123 = vector.shape_cast %122 : vector<1x1x14x160xbf16> to vector<14x160xbf16>
    %cst_108 = arith.constant dense<0.000000e+00> : vector<10x160xf32>
    %124 = tpu.matmul %121, %123, %cst_108 {dimension_numbers = #tpu.dot_dimension_numbers<[1], [0], [0], [1], [0, 0, 1, 1], [], []>} : vector<10x14xbf16>, vector<14x160xbf16>, vector<10x160xf32> -> vector<10x160xf32>
    %125 = arith.addf %119, %124 : vector<10x160xf32>
    %126 = vector.extract_strided_slice %48 {offsets = [3, 28], sizes = [10, 14], strides = [1, 1]} : vector<14x84xf32> to vector<10x14xf32>
    %127 = arith.truncf %126 : vector<10x14xf32> to vector<10x14xbf16>
    %c2_109 = arith.constant 2 : index
    %c3_110 = arith.constant 3 : index
    %c0_111 = arith.constant 0 : index
    %c0_112 = arith.constant 0 : index
    %128 = vector.load %arg8[%c2_109, %c3_110, %c0_111, %c0_112] : memref<6x5x14x160xbf16, #tpu.memory_space<vmem>>, vector<1x1x14x160xbf16>
    %129 = vector.shape_cast %128 : vector<1x1x14x160xbf16> to vector<14x160xbf16>
    %cst_113 = arith.constant dense<0.000000e+00> : vector<10x160xf32>
    %130 = tpu.matmul %127, %129, %cst_113 {dimension_numbers = #tpu.dot_dimension_numbers<[1], [0], [0], [1], [0, 0, 1, 1], [], []>} : vector<10x14xbf16>, vector<14x160xbf16>, vector<10x160xf32> -> vector<10x160xf32>
    %131 = arith.addf %125, %130 : vector<10x160xf32>
    %132 = vector.extract_strided_slice %48 {offsets = [4, 28], sizes = [10, 14], strides = [1, 1]} : vector<14x84xf32> to vector<10x14xf32>
    %133 = arith.truncf %132 : vector<10x14xf32> to vector<10x14xbf16>
    %c2_114 = arith.constant 2 : index
    %c4_115 = arith.constant 4 : index
    %c0_116 = arith.constant 0 : index
    %c0_117 = arith.constant 0 : index
    %134 = vector.load %arg8[%c2_114, %c4_115, %c0_116, %c0_117] : memref<6x5x14x160xbf16, #tpu.memory_space<vmem>>, vector<1x1x14x160xbf16>
    %135 = vector.shape_cast %134 : vector<1x1x14x160xbf16> to vector<14x160xbf16>
    %cst_118 = arith.constant dense<0.000000e+00> : vector<10x160xf32>
    %136 = tpu.matmul %133, %135, %cst_118 {dimension_numbers = #tpu.dot_dimension_numbers<[1], [0], [0], [1], [0, 0, 1, 1], [], []>} : vector<10x14xbf16>, vector<14x160xbf16>, vector<10x160xf32> -> vector<10x160xf32>
    %137 = arith.addf %131, %136 : vector<10x160xf32>
    %138 = vector.extract_strided_slice %48 {offsets = [0, 42], sizes = [10, 14], strides = [1, 1]} : vector<14x84xf32> to vector<10x14xf32>
    %139 = arith.truncf %138 : vector<10x14xf32> to vector<10x14xbf16>
    %c3_119 = arith.constant 3 : index
    %c0_120 = arith.constant 0 : index
    %c0_121 = arith.constant 0 : index
    %c0_122 = arith.constant 0 : index
    %140 = vector.load %arg8[%c3_119, %c0_120, %c0_121, %c0_122] : memref<6x5x14x160xbf16, #tpu.memory_space<vmem>>, vector<1x1x14x160xbf16>
    %141 = vector.shape_cast %140 : vector<1x1x14x160xbf16> to vector<14x160xbf16>
    %cst_123 = arith.constant dense<0.000000e+00> : vector<10x160xf32>
    %142 = tpu.matmul %139, %141, %cst_123 {dimension_numbers = #tpu.dot_dimension_numbers<[1], [0], [0], [1], [0, 0, 1, 1], [], []>} : vector<10x14xbf16>, vector<14x160xbf16>, vector<10x160xf32> -> vector<10x160xf32>
    %143 = arith.addf %137, %142 : vector<10x160xf32>
    %144 = vector.extract_strided_slice %48 {offsets = [1, 42], sizes = [10, 14], strides = [1, 1]} : vector<14x84xf32> to vector<10x14xf32>
    %145 = arith.truncf %144 : vector<10x14xf32> to vector<10x14xbf16>
    %c3_124 = arith.constant 3 : index
    %c1_125 = arith.constant 1 : index
    %c0_126 = arith.constant 0 : index
    %c0_127 = arith.constant 0 : index
    %146 = vector.load %arg8[%c3_124, %c1_125, %c0_126, %c0_127] : memref<6x5x14x160xbf16, #tpu.memory_space<vmem>>, vector<1x1x14x160xbf16>
    %147 = vector.shape_cast %146 : vector<1x1x14x160xbf16> to vector<14x160xbf16>
    %cst_128 = arith.constant dense<0.000000e+00> : vector<10x160xf32>
    %148 = tpu.matmul %145, %147, %cst_128 {dimension_numbers = #tpu.dot_dimension_numbers<[1], [0], [0], [1], [0, 0, 1, 1], [], []>} : vector<10x14xbf16>, vector<14x160xbf16>, vector<10x160xf32> -> vector<10x160xf32>
    %149 = arith.addf %143, %148 : vector<10x160xf32>
    %150 = vector.extract_strided_slice %48 {offsets = [2, 42], sizes = [10, 14], strides = [1, 1]} : vector<14x84xf32> to vector<10x14xf32>
    %151 = arith.truncf %150 : vector<10x14xf32> to vector<10x14xbf16>
    %c3_129 = arith.constant 3 : index
    %c2_130 = arith.constant 2 : index
    %c0_131 = arith.constant 0 : index
    %c0_132 = arith.constant 0 : index
    %152 = vector.load %arg8[%c3_129, %c2_130, %c0_131, %c0_132] : memref<6x5x14x160xbf16, #tpu.memory_space<vmem>>, vector<1x1x14x160xbf16>
    %153 = vector.shape_cast %152 : vector<1x1x14x160xbf16> to vector<14x160xbf16>
    %cst_133 = arith.constant dense<0.000000e+00> : vector<10x160xf32>
    %154 = tpu.matmul %151, %153, %cst_133 {dimension_numbers = #tpu.dot_dimension_numbers<[1], [0], [0], [1], [0, 0, 1, 1], [], []>} : vector<10x14xbf16>, vector<14x160xbf16>, vector<10x160xf32> -> vector<10x160xf32>
    %155 = arith.addf %149, %154 : vector<10x160xf32>
    %156 = vector.extract_strided_slice %48 {offsets = [3, 42], sizes = [10, 14], strides = [1, 1]} : vector<14x84xf32> to vector<10x14xf32>
    %157 = arith.truncf %156 : vector<10x14xf32> to vector<10x14xbf16>
    %c3_134 = arith.constant 3 : index
    %c3_135 = arith.constant 3 : index
    %c0_136 = arith.constant 0 : index
    %c0_137 = arith.constant 0 : index
    %158 = vector.load %arg8[%c3_134, %c3_135, %c0_136, %c0_137] : memref<6x5x14x160xbf16, #tpu.memory_space<vmem>>, vector<1x1x14x160xbf16>
    %159 = vector.shape_cast %158 : vector<1x1x14x160xbf16> to vector<14x160xbf16>
    %cst_138 = arith.constant dense<0.000000e+00> : vector<10x160xf32>
    %160 = tpu.matmul %157, %159, %cst_138 {dimension_numbers = #tpu.dot_dimension_numbers<[1], [0], [0], [1], [0, 0, 1, 1], [], []>} : vector<10x14xbf16>, vector<14x160xbf16>, vector<10x160xf32> -> vector<10x160xf32>
    %161 = arith.addf %155, %160 : vector<10x160xf32>
    %162 = vector.extract_strided_slice %48 {offsets = [4, 42], sizes = [10, 14], strides = [1, 1]} : vector<14x84xf32> to vector<10x14xf32>
    %163 = arith.truncf %162 : vector<10x14xf32> to vector<10x14xbf16>
    %c3_139 = arith.constant 3 : index
    %c4_140 = arith.constant 4 : index
    %c0_141 = arith.constant 0 : index
    %c0_142 = arith.constant 0 : index
    %164 = vector.load %arg8[%c3_139, %c4_140, %c0_141, %c0_142] : memref<6x5x14x160xbf16, #tpu.memory_space<vmem>>, vector<1x1x14x160xbf16>
    %165 = vector.shape_cast %164 : vector<1x1x14x160xbf16> to vector<14x160xbf16>
    %cst_143 = arith.constant dense<0.000000e+00> : vector<10x160xf32>
    %166 = tpu.matmul %163, %165, %cst_143 {dimension_numbers = #tpu.dot_dimension_numbers<[1], [0], [0], [1], [0, 0, 1, 1], [], []>} : vector<10x14xbf16>, vector<14x160xbf16>, vector<10x160xf32> -> vector<10x160xf32>
    %167 = arith.addf %161, %166 : vector<10x160xf32>
    %168 = vector.extract_strided_slice %48 {offsets = [0, 56], sizes = [10, 14], strides = [1, 1]} : vector<14x84xf32> to vector<10x14xf32>
    %169 = arith.truncf %168 : vector<10x14xf32> to vector<10x14xbf16>
    %c4_144 = arith.constant 4 : index
    %c0_145 = arith.constant 0 : index
    %c0_146 = arith.constant 0 : index
    %c0_147 = arith.constant 0 : index
    %170 = vector.load %arg8[%c4_144, %c0_145, %c0_146, %c0_147] : memref<6x5x14x160xbf16, #tpu.memory_space<vmem>>, vector<1x1x14x160xbf16>
    %171 = vector.shape_cast %170 : vector<1x1x14x160xbf16> to vector<14x160xbf16>
    %cst_148 = arith.constant dense<0.000000e+00> : vector<10x160xf32>
    %172 = tpu.matmul %169, %171, %cst_148 {dimension_numbers = #tpu.dot_dimension_numbers<[1], [0], [0], [1], [0, 0, 1, 1], [], []>} : vector<10x14xbf16>, vector<14x160xbf16>, vector<10x160xf32> -> vector<10x160xf32>
    %173 = arith.addf %167, %172 : vector<10x160xf32>
    %174 = vector.extract_strided_slice %48 {offsets = [1, 56], sizes = [10, 14], strides = [1, 1]} : vector<14x84xf32> to vector<10x14xf32>
    %175 = arith.truncf %174 : vector<10x14xf32> to vector<10x14xbf16>
    %c4_149 = arith.constant 4 : index
    %c1_150 = arith.constant 1 : index
    %c0_151 = arith.constant 0 : index
    %c0_152 = arith.constant 0 : index
    %176 = vector.load %arg8[%c4_149, %c1_150, %c0_151, %c0_152] : memref<6x5x14x160xbf16, #tpu.memory_space<vmem>>, vector<1x1x14x160xbf16>
    %177 = vector.shape_cast %176 : vector<1x1x14x160xbf16> to vector<14x160xbf16>
    %cst_153 = arith.constant dense<0.000000e+00> : vector<10x160xf32>
    %178 = tpu.matmul %175, %177, %cst_153 {dimension_numbers = #tpu.dot_dimension_numbers<[1], [0], [0], [1], [0, 0, 1, 1], [], []>} : vector<10x14xbf16>, vector<14x160xbf16>, vector<10x160xf32> -> vector<10x160xf32>
    %179 = arith.addf %173, %178 : vector<10x160xf32>
    %180 = vector.extract_strided_slice %48 {offsets = [2, 56], sizes = [10, 14], strides = [1, 1]} : vector<14x84xf32> to vector<10x14xf32>
    %181 = arith.truncf %180 : vector<10x14xf32> to vector<10x14xbf16>
    %c4_154 = arith.constant 4 : index
    %c2_155 = arith.constant 2 : index
    %c0_156 = arith.constant 0 : index
    %c0_157 = arith.constant 0 : index
    %182 = vector.load %arg8[%c4_154, %c2_155, %c0_156, %c0_157] : memref<6x5x14x160xbf16, #tpu.memory_space<vmem>>, vector<1x1x14x160xbf16>
    %183 = vector.shape_cast %182 : vector<1x1x14x160xbf16> to vector<14x160xbf16>
    %cst_158 = arith.constant dense<0.000000e+00> : vector<10x160xf32>
    %184 = tpu.matmul %181, %183, %cst_158 {dimension_numbers = #tpu.dot_dimension_numbers<[1], [0], [0], [1], [0, 0, 1, 1], [], []>} : vector<10x14xbf16>, vector<14x160xbf16>, vector<10x160xf32> -> vector<10x160xf32>
    %185 = arith.addf %179, %184 : vector<10x160xf32>
    %186 = vector.extract_strided_slice %48 {offsets = [3, 56], sizes = [10, 14], strides = [1, 1]} : vector<14x84xf32> to vector<10x14xf32>
    %187 = arith.truncf %186 : vector<10x14xf32> to vector<10x14xbf16>
    %c4_159 = arith.constant 4 : index
    %c3_160 = arith.constant 3 : index
    %c0_161 = arith.constant 0 : index
    %c0_162 = arith.constant 0 : index
    %188 = vector.load %arg8[%c4_159, %c3_160, %c0_161, %c0_162] : memref<6x5x14x160xbf16, #tpu.memory_space<vmem>>, vector<1x1x14x160xbf16>
    %189 = vector.shape_cast %188 : vector<1x1x14x160xbf16> to vector<14x160xbf16>
    %cst_163 = arith.constant dense<0.000000e+00> : vector<10x160xf32>
    %190 = tpu.matmul %187, %189, %cst_163 {dimension_numbers = #tpu.dot_dimension_numbers<[1], [0], [0], [1], [0, 0, 1, 1], [], []>} : vector<10x14xbf16>, vector<14x160xbf16>, vector<10x160xf32> -> vector<10x160xf32>
    %191 = arith.addf %185, %190 : vector<10x160xf32>
    %192 = vector.extract_strided_slice %48 {offsets = [4, 56], sizes = [10, 14], strides = [1, 1]} : vector<14x84xf32> to vector<10x14xf32>
    %193 = arith.truncf %192 : vector<10x14xf32> to vector<10x14xbf16>
    %c4_164 = arith.constant 4 : index
    %c4_165 = arith.constant 4 : index
    %c0_166 = arith.constant 0 : index
    %c0_167 = arith.constant 0 : index
    %194 = vector.load %arg8[%c4_164, %c4_165, %c0_166, %c0_167] : memref<6x5x14x160xbf16, #tpu.memory_space<vmem>>, vector<1x1x14x160xbf16>
    %195 = vector.shape_cast %194 : vector<1x1x14x160xbf16> to vector<14x160xbf16>
    %cst_168 = arith.constant dense<0.000000e+00> : vector<10x160xf32>
    %196 = tpu.matmul %193, %195, %cst_168 {dimension_numbers = #tpu.dot_dimension_numbers<[1], [0], [0], [1], [0, 0, 1, 1], [], []>} : vector<10x14xbf16>, vector<14x160xbf16>, vector<10x160xf32> -> vector<10x160xf32>
    %197 = arith.addf %191, %196 : vector<10x160xf32>
    %198 = vector.extract_strided_slice %48 {offsets = [0, 70], sizes = [10, 14], strides = [1, 1]} : vector<14x84xf32> to vector<10x14xf32>
    %199 = arith.truncf %198 : vector<10x14xf32> to vector<10x14xbf16>
    %c5 = arith.constant 5 : index
    %c0_169 = arith.constant 0 : index
    %c0_170 = arith.constant 0 : index
    %c0_171 = arith.constant 0 : index
    %200 = vector.load %arg8[%c5, %c0_169, %c0_170, %c0_171] : memref<6x5x14x160xbf16, #tpu.memory_space<vmem>>, vector<1x1x14x160xbf16>
    %201 = vector.shape_cast %200 : vector<1x1x14x160xbf16> to vector<14x160xbf16>
    %cst_172 = arith.constant dense<0.000000e+00> : vector<10x160xf32>
    %202 = tpu.matmul %199, %201, %cst_172 {dimension_numbers = #tpu.dot_dimension_numbers<[1], [0], [0], [1], [0, 0, 1, 1], [], []>} : vector<10x14xbf16>, vector<14x160xbf16>, vector<10x160xf32> -> vector<10x160xf32>
    %203 = arith.addf %197, %202 : vector<10x160xf32>
    %204 = vector.extract_strided_slice %48 {offsets = [1, 70], sizes = [10, 14], strides = [1, 1]} : vector<14x84xf32> to vector<10x14xf32>
    %205 = arith.truncf %204 : vector<10x14xf32> to vector<10x14xbf16>
    %c5_173 = arith.constant 5 : index
    %c1_174 = arith.constant 1 : index
    %c0_175 = arith.constant 0 : index
    %c0_176 = arith.constant 0 : index
    %206 = vector.load %arg8[%c5_173, %c1_174, %c0_175, %c0_176] : memref<6x5x14x160xbf16, #tpu.memory_space<vmem>>, vector<1x1x14x160xbf16>
    %207 = vector.shape_cast %206 : vector<1x1x14x160xbf16> to vector<14x160xbf16>
    %cst_177 = arith.constant dense<0.000000e+00> : vector<10x160xf32>
    %208 = tpu.matmul %205, %207, %cst_177 {dimension_numbers = #tpu.dot_dimension_numbers<[1], [0], [0], [1], [0, 0, 1, 1], [], []>} : vector<10x14xbf16>, vector<14x160xbf16>, vector<10x160xf32> -> vector<10x160xf32>
    %209 = arith.addf %203, %208 : vector<10x160xf32>
    %210 = vector.extract_strided_slice %48 {offsets = [2, 70], sizes = [10, 14], strides = [1, 1]} : vector<14x84xf32> to vector<10x14xf32>
    %211 = arith.truncf %210 : vector<10x14xf32> to vector<10x14xbf16>
    %c5_178 = arith.constant 5 : index
    %c2_179 = arith.constant 2 : index
    %c0_180 = arith.constant 0 : index
    %c0_181 = arith.constant 0 : index
    %212 = vector.load %arg8[%c5_178, %c2_179, %c0_180, %c0_181] : memref<6x5x14x160xbf16, #tpu.memory_space<vmem>>, vector<1x1x14x160xbf16>
    %213 = vector.shape_cast %212 : vector<1x1x14x160xbf16> to vector<14x160xbf16>
    %cst_182 = arith.constant dense<0.000000e+00> : vector<10x160xf32>
    %214 = tpu.matmul %211, %213, %cst_182 {dimension_numbers = #tpu.dot_dimension_numbers<[1], [0], [0], [1], [0, 0, 1, 1], [], []>} : vector<10x14xbf16>, vector<14x160xbf16>, vector<10x160xf32> -> vector<10x160xf32>
    %215 = arith.addf %209, %214 : vector<10x160xf32>
    %216 = vector.extract_strided_slice %48 {offsets = [3, 70], sizes = [10, 14], strides = [1, 1]} : vector<14x84xf32> to vector<10x14xf32>
    %217 = arith.truncf %216 : vector<10x14xf32> to vector<10x14xbf16>
    %c5_183 = arith.constant 5 : index
    %c3_184 = arith.constant 3 : index
    %c0_185 = arith.constant 0 : index
    %c0_186 = arith.constant 0 : index
    %218 = vector.load %arg8[%c5_183, %c3_184, %c0_185, %c0_186] : memref<6x5x14x160xbf16, #tpu.memory_space<vmem>>, vector<1x1x14x160xbf16>
    %219 = vector.shape_cast %218 : vector<1x1x14x160xbf16> to vector<14x160xbf16>
    %cst_187 = arith.constant dense<0.000000e+00> : vector<10x160xf32>
    %220 = tpu.matmul %217, %219, %cst_187 {dimension_numbers = #tpu.dot_dimension_numbers<[1], [0], [0], [1], [0, 0, 1, 1], [], []>} : vector<10x14xbf16>, vector<14x160xbf16>, vector<10x160xf32> -> vector<10x160xf32>
    %221 = arith.addf %215, %220 : vector<10x160xf32>
    %222 = vector.extract_strided_slice %48 {offsets = [4, 70], sizes = [10, 14], strides = [1, 1]} : vector<14x84xf32> to vector<10x14xf32>
    %223 = arith.truncf %222 : vector<10x14xf32> to vector<10x14xbf16>
    %c5_188 = arith.constant 5 : index
    %c4_189 = arith.constant 4 : index
    %c0_190 = arith.constant 0 : index
    %c0_191 = arith.constant 0 : index
    %224 = vector.load %arg8[%c5_188, %c4_189, %c0_190, %c0_191] : memref<6x5x14x160xbf16, #tpu.memory_space<vmem>>, vector<1x1x14x160xbf16>
    %225 = vector.shape_cast %224 : vector<1x1x14x160xbf16> to vector<14x160xbf16>
    %cst_192 = arith.constant dense<0.000000e+00> : vector<10x160xf32>
    %226 = tpu.matmul %223, %225, %cst_192 {dimension_numbers = #tpu.dot_dimension_numbers<[1], [0], [0], [1], [0, 0, 1, 1], [], []>} : vector<10x14xbf16>, vector<14x160xbf16>, vector<10x160xf32> -> vector<10x160xf32>
    %227 = arith.addf %221, %226 : vector<10x160xf32>
    %c0_193 = arith.constant 0 : index
    %c0_194 = arith.constant 0 : index
    %228 = vector.load %arg10[%c0_193, %c0_194] : memref<5x10xf32, #tpu.memory_space<vmem>>, vector<5x10xf32>
    %cst_195 = arith.constant dense<0.000000e+00> : vector<5x160xf32>
    %229 = tpu.matmul %228, %227, %cst_195 {dimension_numbers = #tpu.dot_dimension_numbers<[1], [0], [0], [1], [0, 0, 1, 1], [], []>} : vector<5x10xf32>, vector<10x160xf32>, vector<5x160xf32> -> vector<5x160xf32>
    %c0_196 = arith.constant 0 : index
    %c0_197 = arith.constant 0 : index
    %230 = vector.load %arg11[%c0_196, %c0_197] : memref<5x10xf32, #tpu.memory_space<vmem>>, vector<5x10xf32>
    %cst_198 = arith.constant dense<0.000000e+00> : vector<5x160xf32>
    %231 = tpu.matmul %230, %227, %cst_198 {dimension_numbers = #tpu.dot_dimension_numbers<[1], [0], [0], [1], [0, 0, 1, 1], [], []>} : vector<5x10xf32>, vector<10x160xf32>, vector<5x160xf32> -> vector<5x160xf32>
    %232 = arith.maximumf %229, %231 : vector<5x160xf32>
    %c0_199 = arith.constant 0 : index
    %c0_200 = arith.constant 0 : index
    %233 = vector.load %arg12[%c0_199, %c0_200] : memref<160x80xf32, #tpu.memory_space<vmem>>, vector<160x80xf32>
    %cst_201 = arith.constant dense<0.000000e+00> : vector<5x80xf32>
    %234 = tpu.matmul %232, %233, %cst_201 {dimension_numbers = #tpu.dot_dimension_numbers<[1], [0], [0], [1], [0, 0, 1, 1], [], []>} : vector<5x160xf32>, vector<160x80xf32>, vector<5x80xf32> -> vector<5x80xf32>
    %c0_202 = arith.constant 0 : index
    %c0_203 = arith.constant 0 : index
    %235 = vector.load %arg13[%c0_202, %c0_203] : memref<160x80xf32, #tpu.memory_space<vmem>>, vector<160x80xf32>
    %cst_204 = arith.constant dense<0.000000e+00> : vector<5x80xf32>
    %236 = tpu.matmul %232, %235, %cst_204 {dimension_numbers = #tpu.dot_dimension_numbers<[1], [0], [0], [1], [0, 0, 1, 1], [], []>} : vector<5x160xf32>, vector<160x80xf32>, vector<5x80xf32> -> vector<5x80xf32>
    %237 = arith.maximumf %234, %236 : vector<5x80xf32>
    %c0_205 = arith.constant 0 : index
    %c0_206 = arith.constant 0 : index
    %238 = vector.load %arg9[%c0_205, %c0_206] : memref<1x80xf32, #tpu.memory_space<vmem>>, vector<1x80xf32>
    %239 = vector.broadcast %238 : vector<1x80xf32> to vector<5x80xf32>
    %240 = arith.addf %237, %239 : vector<5x80xf32>
    %cst_207 = arith.constant 0.000000e+00 : f32
    %241 = vector.broadcast %cst_207 : f32 to vector<5x80xf32>
    %242 = arith.maximumf %240, %241 : vector<5x80xf32>
    %243 = vector.extract_strided_slice %242 {offsets = [0, 0], sizes = [1, 80], strides = [1, 1]} : vector<5x80xf32> to vector<1x80xf32>
    %244 = arith.truncf %243 : vector<1x80xf32> to vector<1x80xbf16>
    %c0_208 = arith.constant 0 : index
    %c0_209 = arith.constant 0 : index
    %c0_210 = arith.constant 0 : index
    %245 = vector.load %arg14[%c0_208, %c0_209, %c0_210] : memref<5x80x120xbf16, #tpu.memory_space<vmem>>, vector<1x80x120xbf16>
    %246 = vector.shape_cast %245 : vector<1x80x120xbf16> to vector<80x120xbf16>
    %cst_211 = arith.constant dense<0.000000e+00> : vector<1x120xf32>
    %247 = tpu.matmul %244, %246, %cst_211 {dimension_numbers = #tpu.dot_dimension_numbers<[1], [0], [0], [1], [0, 0, 1, 1], [], []>} : vector<1x80xbf16>, vector<80x120xbf16>, vector<1x120xf32> -> vector<1x120xf32>
    %248 = vector.extract_strided_slice %242 {offsets = [1, 0], sizes = [1, 80], strides = [1, 1]} : vector<5x80xf32> to vector<1x80xf32>
    %249 = arith.truncf %248 : vector<1x80xf32> to vector<1x80xbf16>
    %c1_212 = arith.constant 1 : index
    %c0_213 = arith.constant 0 : index
    %c0_214 = arith.constant 0 : index
    %250 = vector.load %arg14[%c1_212, %c0_213, %c0_214] : memref<5x80x120xbf16, #tpu.memory_space<vmem>>, vector<1x80x120xbf16>
    %251 = vector.shape_cast %250 : vector<1x80x120xbf16> to vector<80x120xbf16>
    %cst_215 = arith.constant dense<0.000000e+00> : vector<1x120xf32>
    %252 = tpu.matmul %249, %251, %cst_215 {dimension_numbers = #tpu.dot_dimension_numbers<[1], [0], [0], [1], [0, 0, 1, 1], [], []>} : vector<1x80xbf16>, vector<80x120xbf16>, vector<1x120xf32> -> vector<1x120xf32>
    %253 = arith.addf %247, %252 : vector<1x120xf32>
    %254 = vector.extract_strided_slice %242 {offsets = [2, 0], sizes = [1, 80], strides = [1, 1]} : vector<5x80xf32> to vector<1x80xf32>
    %255 = arith.truncf %254 : vector<1x80xf32> to vector<1x80xbf16>
    %c2_216 = arith.constant 2 : index
    %c0_217 = arith.constant 0 : index
    %c0_218 = arith.constant 0 : index
    %256 = vector.load %arg14[%c2_216, %c0_217, %c0_218] : memref<5x80x120xbf16, #tpu.memory_space<vmem>>, vector<1x80x120xbf16>
    %257 = vector.shape_cast %256 : vector<1x80x120xbf16> to vector<80x120xbf16>
    %cst_219 = arith.constant dense<0.000000e+00> : vector<1x120xf32>
    %258 = tpu.matmul %255, %257, %cst_219 {dimension_numbers = #tpu.dot_dimension_numbers<[1], [0], [0], [1], [0, 0, 1, 1], [], []>} : vector<1x80xbf16>, vector<80x120xbf16>, vector<1x120xf32> -> vector<1x120xf32>
    %259 = arith.addf %253, %258 : vector<1x120xf32>
    %260 = vector.extract_strided_slice %242 {offsets = [3, 0], sizes = [1, 80], strides = [1, 1]} : vector<5x80xf32> to vector<1x80xf32>
    %261 = arith.truncf %260 : vector<1x80xf32> to vector<1x80xbf16>
    %c3_220 = arith.constant 3 : index
    %c0_221 = arith.constant 0 : index
    %c0_222 = arith.constant 0 : index
    %262 = vector.load %arg14[%c3_220, %c0_221, %c0_222] : memref<5x80x120xbf16, #tpu.memory_space<vmem>>, vector<1x80x120xbf16>
    %263 = vector.shape_cast %262 : vector<1x80x120xbf16> to vector<80x120xbf16>
    %cst_223 = arith.constant dense<0.000000e+00> : vector<1x120xf32>
    %264 = tpu.matmul %261, %263, %cst_223 {dimension_numbers = #tpu.dot_dimension_numbers<[1], [0], [0], [1], [0, 0, 1, 1], [], []>} : vector<1x80xbf16>, vector<80x120xbf16>, vector<1x120xf32> -> vector<1x120xf32>
    %265 = arith.addf %259, %264 : vector<1x120xf32>
    %266 = vector.extract_strided_slice %242 {offsets = [4, 0], sizes = [1, 80], strides = [1, 1]} : vector<5x80xf32> to vector<1x80xf32>
    %267 = arith.truncf %266 : vector<1x80xf32> to vector<1x80xbf16>
    %c4_224 = arith.constant 4 : index
    %c0_225 = arith.constant 0 : index
    %c0_226 = arith.constant 0 : index
    %268 = vector.load %arg14[%c4_224, %c0_225, %c0_226] : memref<5x80x120xbf16, #tpu.memory_space<vmem>>, vector<1x80x120xbf16>
    %269 = vector.shape_cast %268 : vector<1x80x120xbf16> to vector<80x120xbf16>
    %cst_227 = arith.constant dense<0.000000e+00> : vector<1x120xf32>
    %270 = tpu.matmul %267, %269, %cst_227 {dimension_numbers = #tpu.dot_dimension_numbers<[1], [0], [0], [1], [0, 0, 1, 1], [], []>} : vector<1x80xbf16>, vector<80x120xbf16>, vector<1x120xf32> -> vector<1x120xf32>
    %271 = arith.addf %265, %270 : vector<1x120xf32>
    %c0_228 = arith.constant 0 : index
    %c0_229 = arith.constant 0 : index
    %272 = vector.load %arg15[%c0_228, %c0_229] : memref<1x120xf32, #tpu.memory_space<vmem>>, vector<1x120xf32>
    %273 = arith.addf %271, %272 : vector<1x120xf32>
    %cst_230 = arith.constant 0.000000e+00 : f32
    %274 = vector.broadcast %cst_230 : f32 to vector<1x120xf32>
    %275 = arith.maximumf %273, %274 : vector<1x120xf32>
    %276 = arith.truncf %275 : vector<1x120xf32> to vector<1x120xbf16>
    %c0_231 = arith.constant 0 : index
    %c0_232 = arith.constant 0 : index
    %277 = vector.load %arg16[%c0_231, %c0_232] : memref<120x84xbf16, #tpu.memory_space<vmem>>, vector<120x84xbf16>
    %cst_233 = arith.constant dense<0.000000e+00> : vector<1x84xf32>
    %278 = tpu.matmul %276, %277, %cst_233 {dimension_numbers = #tpu.dot_dimension_numbers<[1], [0], [0], [1], [0, 0, 1, 1], [], []>} : vector<1x120xbf16>, vector<120x84xbf16>, vector<1x84xf32> -> vector<1x84xf32>
    %c0_234 = arith.constant 0 : index
    %c0_235 = arith.constant 0 : index
    %279 = vector.load %arg17[%c0_234, %c0_235] : memref<1x84xf32, #tpu.memory_space<vmem>>, vector<1x84xf32>
    %280 = arith.addf %278, %279 : vector<1x84xf32>
    %cst_236 = arith.constant 0.000000e+00 : f32
    %281 = vector.broadcast %cst_236 : f32 to vector<1x84xf32>
    %282 = arith.maximumf %280, %281 : vector<1x84xf32>
    %283 = arith.truncf %282 : vector<1x84xf32> to vector<1x84xbf16>
    %c0_237 = arith.constant 0 : index
    %c0_238 = arith.constant 0 : index
    %284 = vector.load %arg18[%c0_237, %c0_238] : memref<84x10xbf16, #tpu.memory_space<vmem>>, vector<84x10xbf16>
    %cst_239 = arith.constant dense<0.000000e+00> : vector<1x10xf32>
    %285 = tpu.matmul %283, %284, %cst_239 {dimension_numbers = #tpu.dot_dimension_numbers<[1], [0], [0], [1], [0, 0, 1, 1], [], []>} : vector<1x84xbf16>, vector<84x10xbf16>, vector<1x10xf32> -> vector<1x10xf32>
    %c0_240 = arith.constant 0 : index
    %c0_241 = arith.constant 0 : index
    %286 = vector.load %arg19[%c0_240, %c0_241] : memref<1x10xf32, #tpu.memory_space<vmem>>, vector<1x10xf32>
    %287 = arith.addf %285, %286 : vector<1x10xf32>
    %c0_242 = arith.constant 0 : index
    %c0_243 = arith.constant 0 : index
    %c0_244 = arith.constant 0 : index
    %288 = vector.load %arg20[%c0_242, %c0_243, %c0_244] : memref<1x1x10xf32, #tpu.memory_space<vmem>>, vector<1x1x10xf32>
    %289 = vector.shape_cast %288 : vector<1x1x10xf32> to vector<1x10xf32>
    %290 = vector.shape_cast %287 : vector<1x10xf32> to vector<1x1x10xf32>
    tpu.vector_store %arg20[%c0_242, %c0_243, %c0_244], %290 {strides = array<i32>} : memref<1x1x10xf32, #tpu.memory_space<vmem>>, vector<1x1x10xf32>,
    return
  }
  func.func @transform_0(%arg0: i32) -> (i32, i32, i32) {
    %c0_i32 = arith.constant 0 : i32
    %c0_i32_0 = arith.constant 0 : i32
    %c0_i32_1 = arith.constant 0 : i32
    return %arg0, %c0_i32, %c0_i32_0 : i32, i32, i32
  }
  func.func @transform_1(%arg0: i32) -> (i32, i32, i32) {
    %c0_i32 = arith.constant 0 : i32
    %c0_i32_0 = arith.constant 0 : i32
    %c0_i32_1 = arith.constant 0 : i32
    %c0_i32_2 = arith.constant 0 : i32
    return %c0_i32, %c0_i32_0, %c0_i32_1 : i32, i32, i32
  }
  func.func @transform_2(%arg0: i32) -> (i32, i32) {
    %c0_i32 = arith.constant 0 : i32
    %c0_i32_0 = arith.constant 0 : i32
    %c0_i32_1 = arith.constant 0 : i32
    return %c0_i32, %c0_i32_0 : i32, i32
  }
  func.func @transform_3(%arg0: i32) -> (i32, i32) {
    %c0_i32 = arith.constant 0 : i32
    %c0_i32_0 = arith.constant 0 : i32
    %c0_i32_1 = arith.constant 0 : i32
    return %c0_i32, %c0_i32_0 : i32, i32
  }
  func.func @transform_4(%arg0: i32) -> (i32, i32) {
    %c0_i32 = arith.constant 0 : i32
    %c0_i32_0 = arith.constant 0 : i32
    %c0_i32_1 = arith.constant 0 : i32
    return %c0_i32, %c0_i32_0 : i32, i32
  }
  func.func @transform_5(%arg0: i32) -> (i32, i32) {
    %c0_i32 = arith.constant 0 : i32
    %c0_i32_0 = arith.constant 0 : i32
    %c0_i32_1 = arith.constant 0 : i32
    return %c0_i32, %c0_i32_0 : i32, i32
  }
  func.func @transform_6(%arg0: i32) -> (i32, i32) {
    %c0_i32 = arith.constant 0 : i32
    %c0_i32_0 = arith.constant 0 : i32
    %c0_i32_1 = arith.constant 0 : i32
    return %c0_i32, %c0_i32_0 : i32, i32
  }
  func.func @transform_7(%arg0: i32) -> (i32, i32, i32, i32) {
    %c0_i32 = arith.constant 0 : i32
    %c0_i32_0 = arith.constant 0 : i32
    %c0_i32_1 = arith.constant 0 : i32
    %c0_i32_2 = arith.constant 0 : i32
    %c0_i32_3 = arith.constant 0 : i32
    return %c0_i32, %c0_i32_0, %c0_i32_1, %c0_i32_2 : i32, i32, i32, i32
  }
  func.func @transform_8(%arg0: i32) -> (i32, i32) {
    %c0_i32 = arith.constant 0 : i32
    %c0_i32_0 = arith.constant 0 : i32
    %c0_i32_1 = arith.constant 0 : i32
    return %c0_i32, %c0_i32_0 : i32, i32
  }
  func.func @transform_9(%arg0: i32) -> (i32, i32) {
    %c0_i32 = arith.constant 0 : i32
    %c0_i32_0 = arith.constant 0 : i32
    %c0_i32_1 = arith.constant 0 : i32
    return %c0_i32, %c0_i32_0 : i32, i32
  }
  func.func @transform_10(%arg0: i32) -> (i32, i32) {
    %c0_i32 = arith.constant 0 : i32
    %c0_i32_0 = arith.constant 0 : i32
    %c0_i32_1 = arith.constant 0 : i32
    return %c0_i32, %c0_i32_0 : i32, i32
  }
  func.func @transform_11(%arg0: i32) -> (i32, i32) {
    %c0_i32 = arith.constant 0 : i32
    %c0_i32_0 = arith.constant 0 : i32
    %c0_i32_1 = arith.constant 0 : i32
    return %c0_i32, %c0_i32_0 : i32, i32
  }
  func.func @transform_12(%arg0: i32) -> (i32, i32) {
    %c0_i32 = arith.constant 0 : i32
    %c0_i32_0 = arith.constant 0 : i32
    %c0_i32_1 = arith.constant 0 : i32
    return %c0_i32, %c0_i32_0 : i32, i32
  }
  func.func @transform_13(%arg0: i32) -> (i32, i32, i32) {
    %c0_i32 = arith.constant 0 : i32
    %c0_i32_0 = arith.constant 0 : i32
    %c0_i32_1 = arith.constant 0 : i32
    %c0_i32_2 = arith.constant 0 : i32
    return %c0_i32, %c0_i32_0, %c0_i32_1 : i32, i32, i32
  }
  func.func @transform_14(%arg0: i32) -> (i32, i32) {
    %c0_i32 = arith.constant 0 : i32
    %c0_i32_0 = arith.constant 0 : i32
    %c0_i32_1 = arith.constant 0 : i32
    return %c0_i32, %c0_i32_0 : i32, i32
  }
  func.func @transform_15(%arg0: i32) -> (i32, i32) {
    %c0_i32 = arith.constant 0 : i32
    %c0_i32_0 = arith.constant 0 : i32
    %c0_i32_1 = arith.constant 0 : i32
    return %c0_i32, %c0_i32_0 : i32, i32
  }
  func.func @transform_16(%arg0: i32) -> (i32, i32) {
    %c0_i32 = arith.constant 0 : i32
    %c0_i32_0 = arith.constant 0 : i32
    %c0_i32_1 = arith.constant 0 : i32
    return %c0_i32, %c0_i32_0 : i32, i32
  }
  func.func @transform_17(%arg0: i32) -> (i32, i32) {
    %c0_i32 = arith.constant 0 : i32
    %c0_i32_0 = arith.constant 0 : i32
    %c0_i32_1 = arith.constant 0 : i32
    return %c0_i32, %c0_i32_0 : i32, i32
  }
  func.func @transform_18(%arg0: i32) -> (i32, i32) {
    %c0_i32 = arith.constant 0 : i32
    %c0_i32_0 = arith.constant 0 : i32
    %c0_i32_1 = arith.constant 0 : i32
    return %c0_i32, %c0_i32_0 : i32, i32
  }
  func.func @transform_19(%arg0: i32) -> (i32, i32, i32) {
    %c0_i32 = arith.constant 0 : i32
    %c0_i32_0 = arith.constant 0 : i32
    %c0_i32_1 = arith.constant 0 : i32
    return %arg0, %c0_i32, %c0_i32_0 : i32, i32, i32
  }
}

</mosaic_0001>

<llo_original>
// kernel: lenet_forward.1
$region0: #{lenet_forward.1}
  #allocation0 [shape = 'u32[]', space=smem, size = 0x4, offset = 0x4, fixed_abs, tag = 'smem constant byte address 0x4 - core index']
  #allocation1 [shape = 'u32[144,128]{1,0:T(1,128)}', space=vmem, size = 0x12000, scoped, tag = 'internal scratch']
  %s0 = inlined_call_operand.vmem [shape: f32[2,32,32], index: 0, kind: input, shape index: {}]
  %s1 = inlined_call_operand.hbm [shape: bf16[5,32,168], index: 1, kind: input, shape index: {}]
  %s2 = inlined_call_operand.vmem [shape: f32[1,84], index: 2, kind: input, shape index: {}]
  %s3 = inlined_call_operand.hbm [shape: f32[14,28], index: 3, kind: input, shape index: {}]
  %s4 = inlined_call_operand.hbm [shape: f32[14,28], index: 4, kind: input, shape index: {}]
  %s5 = inlined_call_operand.hbm [shape: f32[168,84], index: 5, kind: input, shape index: {}]
  %s6 = inlined_call_operand.hbm [shape: f32[168,84], index: 6, kind: input, shape index: {}]
  %s7 = inlined_call_operand.vmem [shape: bf16[6,5,14,160], index: 7, kind: input, shape index: {}]
  %s8 = inlined_call_operand.vmem [shape: f32[1,80], index: 8, kind: input, shape index: {}]
  %s9 = inlined_call_operand.hbm [shape: f32[5,10], index: 9, kind: input, shape index: {}]
  %s10 = inlined_call_operand.hbm [shape: f32[5,10], index: 10, kind: input, shape index: {}]
  %s11 = inlined_call_operand.hbm [shape: f32[160,80], index: 11, kind: input, shape index: {}]
  %s12 = inlined_call_operand.hbm [shape: f32[160,80], index: 12, kind: input, shape index: {}]
  %s13 = inlined_call_operand.hbm [shape: bf16[5,80,120], index: 13, kind: input, shape index: {}]
  %s14 = inlined_call_operand.vmem [shape: f32[1,120], index: 14, kind: input, shape index: {}]
  %s15 = inlined_call_operand.vmem [shape: bf16[120,84], index: 15, kind: input, shape index: {}]
  %s16 = inlined_call_operand.vmem [shape: f32[1,84], index: 16, kind: input, shape index: {}]
  %s17 = inlined_call_operand.vmem [shape: bf16[84,10], index: 17, kind: input, shape index: {}]
  %s18 = inlined_call_operand.vmem [shape: f32[1,10], index: 18, kind: input, shape index: {}]
  %s19 = inlined_call_operand.hbm [shape: f32[2,1,10], index: 19, kind: output, shape index: {}]
  %s20 = sld [smem:[#allocation0]]
  $region149: #{lenet_forward.1} parent=0
    _
  %s22 = ssub.s32 1, %s20
  %s23 = scalar_select 0, %s22, %s20
  $region1: #{lenet_forward.1} parent=0
    #allocation2 [shape = 'u8[81920]{0}', space=vmem, size = 0x14000, scoped, tag = 'input window, operand 1, single buffered']
    #allocation3 [shape = 's32[2]{0}', space=sflag, size = 0x8, scoped, tag = 'scoped memory for lenet_forward.1']
    #allocation4 [shape = 's32[2]{0}', space=sflag, size = 0x8, scoped, tag = 'scoped memory for lenet_forward.1']
    #allocation5 [shape = 'u8[8192]{0}', space=vmem, size = 0x2000, scoped, tag = 'input window, operand 3, single buffered']
    #allocation6 [shape = 's32[1]{0}', space=sflag, size = 0x4, scoped, tag = 'scoped memory for lenet_forward.1']
    #allocation7 [shape = 'u8[8192]{0}', space=vmem, size = 0x2000, scoped, tag = 'input window, operand 4, single buffered']
    #allocation8 [shape = 'u8[86016]{0}', space=vmem, size = 0x15000, scoped, tag = 'input window, operand 5, single buffered']
    #allocation9 [shape = 's32[1]{0}', space=sflag, size = 0x4, scoped, tag = 'scoped memory for lenet_forward.1']
    #allocation10 [shape = 'u8[86016]{0}', space=vmem, size = 0x15000, scoped, tag = 'input window, operand 6, single buffered']
    #allocation11 [shape = 'u8[4096]{0}', space=vmem, size = 0x1000, scoped, tag = 'input window, operand 9, single buffered']
    #allocation12 [shape = 's32[1]{0}', space=sflag, size = 0x4, scoped, tag = 'scoped memory for lenet_forward.1']
    #allocation13 [shape = 'u8[4096]{0}', space=vmem, size = 0x1000, scoped, tag = 'input window, operand 10, single buffered']
    #allocation14 [shape = 'u8[81920]{0}', space=vmem, size = 0x14000, scoped, tag = 'input window, operand 11, single buffered']
    #allocation15 [shape = 's32[1]{0}', space=sflag, size = 0x4, scoped, tag = 'scoped memory for lenet_forward.1']
    #allocation16 [shape = 'u8[81920]{0}', space=vmem, size = 0x14000, scoped, tag = 'input window, operand 12, single buffered']
    #allocation17 [shape = 'u8[102400]{0}', space=vmem, size = 0x19000, scoped, tag = 'input window, operand 13, single buffered']
    #allocation18 [shape = 's32[1]{0}', space=sflag, size = 0x4, scoped, tag = 'scoped memory for lenet_forward.1']
    #allocation19 [shape = 'u8[1024]{0}', space=vmem, size = 0x400, scoped, tag = 'output window, operand 0']
    %24 = vsyncpa [#allocation3], 0
    %25 = vsyncpa [#allocation6], 0
    %26 = vsyncpa [#allocation9], 0
    %27 = vsyncpa [#allocation12], 0
    %28 = vsyncpa [#allocation15], 0
    %29 = vsyncpa [#allocation18], 0
    %30 = vsyncpa [#allocation4], 0
    %s31 = scalar_lea.sflag [#allocation4], 1
    %32 = vsyncpa %s31, 0
    loop: start=0, step=1, limit=4
    $region2: #{lenet_forward.1} parent=1 // loop_pre_header
      _
    $region3: #{lenet_forward.1} parent=1 // loop_header
      %s34 = sphi 0, %s38
      %p35 = scmp.ge.s32.totalorder %s34, 4
      %s44 = sphi 0, %s46
      %s47 = sphi 0, %s44
      %s48 = sphi 0, %s47
      %s64 = sphi 0, %s48
      %s68 = sphi 0, %s68
      %s70 = sphi 0, %s68
      %s71 = sphi 0, %s70
      %s85 = sphi 0, %s71
      %s89 = sphi 0, %s89
      %s91 = sphi 0, %s89
      %s92 = sphi 0, %s91
      %s106 = sphi 0, %s92
      %s110 = sphi 0, %s110
      %s112 = sphi 0, %s110
      %s113 = sphi 0, %s112
      %s127 = sphi 0, %s113
      %s131 = sphi 0, %s131
      %s133 = sphi 0, %s131
      %s134 = sphi 0, %s133
      %s148 = sphi 0, %s134
      %s152 = sphi 0, %s152
      %s154 = sphi 0, %s152
      %s155 = sphi 0, %s154
      %s169 = sphi 0, %s155
      %s173 = sphi 0, %s173
      %s175 = sphi 0, %s173
      %s176 = sphi 0, %s175
      %s190 = sphi 0, %s176
      %s194 = sphi 0, %s194
      %s196 = sphi 0, %s194
      %s197 = sphi 0, %s196
      %s211 = sphi 0, %s197
      %s215 = sphi 0, %s215
      %s217 = sphi 0, %s215
      %s218 = sphi 0, %s217
      %s232 = sphi 0, %s218
      %s236 = sphi 0, %s236
      %s238 = sphi 0, %s236
      %s239 = sphi 0, %s238
      %s253 = sphi 0, %s239
      %s257 = sphi 0, %s257
      %s259 = sphi 0, %s257
      %s260 = sphi 0, %s259
      %s274 = sphi 0, %s260
      %s278 = sphi 0, %s278
      %s280 = sphi 0, %s278
      %s281 = sphi 0, %s280
      %s295 = sphi 0, %s281
      %s299 = sphi 0, %s299
      %s301 = sphi 0, %s299
      %s302 = sphi 0, %s301
      %s316 = sphi 0, %s302
      %s320 = sphi 0, %s320
      %s322 = sphi 0, %s320
      %s323 = sphi 0, %s322
      %s337 = sphi 0, %s323
      %s341 = sphi 0, %s341
      %s343 = sphi 0, %s341
      %s344 = sphi 0, %s343
      %s358 = sphi 0, %s344
      %s362 = sphi 0, %s362
      %s364 = sphi 0, %s362
      %s365 = sphi 0, %s364
      %s379 = sphi 0, %s365
      %s383 = sphi 0, %s383
      %s385 = sphi 0, %s383
      %s386 = sphi 0, %s385
      %s400 = sphi 0, %s386
      %s404 = sphi 0, %s404
      %s406 = sphi 0, %s404
      %s407 = sphi 0, %s406
      %s421 = sphi 0, %s407
      %s425 = sphi 0, %s425
      %s427 = sphi 0, %s425
      %s428 = sphi 0, %s427
      %s442 = sphi 0, %s428
      %s448 = sphi 0, %s450
      %s451 = sphi 0, %s448
      %s452 = sphi 0, %s451
      %s468 = sphi 0, %s452
    $region4: #{lenet_forward.1} parent=1 // loop_header_branch
      %37 = sbr.rel (%p35) target = $region8
    $region5: #{lenet_forward.1} parent=1 // loop_body
      %s39 = ssub.s32 %s34, 1
      %s40 = ssub.s32 %s34, 2
      %s41 = sadd.s32 %s34, 1
      %s42 = ssub.s32 %s34, %s41
      %p43 = scmp.eq.s32.totalorder %s42, 0
      %s45 = sadd.s32 %s44, 1
      %s46 = scalar_select %p43, %s44, %s45
      %p49 = pneg %p43
      %p50 = scmp.eq.s32.totalorder %s34, 1
      %p51 = por %p49, %p50
      %p52 = scmp.ne.s32.totalorder %s44, %s47
      %p53 = scmp.eq.s32.totalorder %s34, 0
      %p54 = por %p52, %p53
      %p55 = scmp.ne.s32.totalorder %s44, %s47
      %p56 = scmp.eq.s32.totalorder %s39, 1
      %p57 = por %p55, %p56
      %p58 = scmp.ne.s32.totalorder %s47, %s48
      %p59 = scmp.eq.s32.totalorder %s39, 0
      %p60 = por %p58, %p59
      %p61 = scmp.ne.s32.totalorder %s47, %s48
      %p62 = scmp.eq.s32.totalorder %s40, 1
      %p63 = por %p61, %p62
      %p65 = scmp.ne.s32.totalorder %s48, %s64
      %p66 = scmp.eq.s32.totalorder %s40, 0
      %p67 = por %p65, %p66
      %s69 = sadd.s32 %s68, 1
      %p72 = scmp.eq.s32.totalorder %s34, 1
      %p73 = scmp.ne.s32.totalorder %s68, %s70
      %p74 = scmp.eq.s32.totalorder %s34, 0
      %p75 = por %p73, %p74
      %p76 = scmp.ne.s32.totalorder %s68, %s70
      %p77 = scmp.eq.s32.totalorder %s39, 1
      %p78 = por %p76, %p77
      %p79 = scmp.ne.s32.totalorder %s70, %s71
      %p80 = scmp.eq.s32.totalorder %s39, 0
      %p81 = por %p79, %p80
      %p82 = scmp.ne.s32.totalorder %s70, %s71
      %p83 = scmp.eq.s32.totalorder %s40, 1
      %p84 = por %p82, %p83
      %p86 = scmp.ne.s32.totalorder %s71, %s85
      %p87 = scmp.eq.s32.totalorder %s40, 0
      %p88 = por %p86, %p87
      %s90 = sadd.s32 %s89, 1
      %p93 = scmp.eq.s32.totalorder %s34, 1
      %p94 = scmp.ne.s32.totalorder %s89, %s91
      %p95 = scmp.eq.s32.totalorder %s34, 0
      %p96 = por %p94, %p95
      %p97 = scmp.ne.s32.totalorder %s89, %s91
      %p98 = scmp.eq.s32.totalorder %s39, 1
      %p99 = por %p97, %p98
      %p100 = scmp.ne.s32.totalorder %s91, %s92
      %p101 = scmp.eq.s32.totalorder %s39, 0
      %p102 = por %p100, %p101
      %p103 = scmp.ne.s32.totalorder %s91, %s92
      %p104 = scmp.eq.s32.totalorder %s40, 1
      %p105 = por %p103, %p104
      %p107 = scmp.ne.s32.totalorder %s92, %s106
      %p108 = scmp.eq.s32.totalorder %s40, 0
      %p109 = por %p107, %p108
      %s111 = sadd.s32 %s110, 1
      %p114 = scmp.eq.s32.totalorder %s34, 1
      %p115 = scmp.ne.s32.totalorder %s110, %s112
      %p116 = scmp.eq.s32.totalorder %s34, 0
      %p117 = por %p115, %p116
      %p118 = scmp.ne.s32.totalorder %s110, %s112
      %p119 = scmp.eq.s32.totalorder %s39, 1
      %p120 = por %p118, %p119
      %p121 = scmp.ne.s32.totalorder %s112, %s113
      %p122 = scmp.eq.s32.totalorder %s39, 0
      %p123 = por %p121, %p122
      %p124 = scmp.ne.s32.totalorder %s112, %s113
      %p125 = scmp.eq.s32.totalorder %s40, 1
      %p126 = por %p124, %p125
      %p128 = scmp.ne.s32.totalorder %s113, %s127
      %p129 = scmp.eq.s32.totalorder %s40, 0
      %p130 = por %p128, %p129
      %s132 = sadd.s32 %s131, 1
      %p135 = scmp.eq.s32.totalorder %s34, 1
      %p136 = scmp.ne.s32.totalorder %s131, %s133
      %p137 = scmp.eq.s32.totalorder %s34, 0
      %p138 = por %p136, %p137
      %p139 = scmp.ne.s32.totalorder %s131, %s133
      %p140 = scmp.eq.s32.totalorder %s39, 1
      %p141 = por %p139, %p140
      %p142 = scmp.ne.s32.totalorder %s133, %s134
      %p143 = scmp.eq.s32.totalorder %s39, 0
      %p144 = por %p142, %p143
      %p145 = scmp.ne.s32.totalorder %s133, %s134
      %p146 = scmp.eq.s32.totalorder %s40, 1
      %p147 = por %p145, %p146
      %p149 = scmp.ne.s32.totalorder %s134, %s148
      %p150 = scmp.eq.s32.totalorder %s40, 0
      %p151 = por %p149, %p150
      %s153 = sadd.s32 %s152, 1
      %p156 = scmp.eq.s32.totalorder %s34, 1
      %p157 = scmp.ne.s32.totalorder %s152, %s154
      %p158 = scmp.eq.s32.totalorder %s34, 0
      %p159 = por %p157, %p158
      %p160 = scmp.ne.s32.totalorder %s152, %s154
      %p161 = scmp.eq.s32.totalorder %s39, 1
      %p162 = por %p160, %p161
      %p163 = scmp.ne.s32.totalorder %s154, %s155
      %p164 = scmp.eq.s32.totalorder %s39, 0
      %p165 = por %p163, %p164
      %p166 = scmp.ne.s32.totalorder %s154, %s155
      %p167 = scmp.eq.s32.totalorder %s40, 1
      %p168 = por %p166, %p167
      %p170 = scmp.ne.s32.totalorder %s155, %s169
      %p171 = scmp.eq.s32.totalorder %s40, 0
      %p172 = por %p170, %p171
      %s174 = sadd.s32 %s173, 1
      %p177 = scmp.eq.s32.totalorder %s34, 1
      %p178 = scmp.ne.s32.totalorder %s173, %s175
      %p179 = scmp.eq.s32.totalorder %s34, 0
      %p180 = por %p178, %p179
      %p181 = scmp.ne.s32.totalorder %s173, %s175
      %p182 = scmp.eq.s32.totalorder %s39, 1
      %p183 = por %p181, %p182
      %p184 = scmp.ne.s32.totalorder %s175, %s176
      %p185 = scmp.eq.s32.totalorder %s39, 0
      %p186 = por %p184, %p185
      %p187 = scmp.ne.s32.totalorder %s175, %s176
      %p188 = scmp.eq.s32.totalorder %s40, 1
      %p189 = por %p187, %p188
      %p191 = scmp.ne.s32.totalorder %s176, %s190
      %p192 = scmp.eq.s32.totalorder %s40, 0
      %p193 = por %p191, %p192
      %s195 = sadd.s32 %s194, 1
      %p198 = scmp.eq.s32.totalorder %s34, 1
      %p199 = scmp.ne.s32.totalorder %s194, %s196
      %p200 = scmp.eq.s32.totalorder %s34, 0
      %p201 = por %p199, %p200
      %p202 = scmp.ne.s32.totalorder %s194, %s196
      %p203 = scmp.eq.s32.totalorder %s39, 1
      %p204 = por %p202, %p203
      %p205 = scmp.ne.s32.totalorder %s196, %s197
      %p206 = scmp.eq.s32.totalorder %s39, 0
      %p207 = por %p205, %p206
      %p208 = scmp.ne.s32.totalorder %s196, %s197
      %p209 = scmp.eq.s32.totalorder %s40, 1
      %p210 = por %p208, %p209
      %p212 = scmp.ne.s32.totalorder %s197, %s211
      %p213 = scmp.eq.s32.totalorder %s40, 0
      %p214 = por %p212, %p213
      %s216 = sadd.s32 %s215, 1
      %p219 = scmp.eq.s32.totalorder %s34, 1
      %p220 = scmp.ne.s32.totalorder %s215, %s217
      %p221 = scmp.eq.s32.totalorder %s34, 0
      %p222 = por %p220, %p221
      %p223 = scmp.ne.s32.totalorder %s215, %s217
      %p224 = scmp.eq.s32.totalorder %s39, 1
      %p225 = por %p223, %p224
      %p226 = scmp.ne.s32.totalorder %s217, %s218
      %p227 = scmp.eq.s32.totalorder %s39, 0
      %p228 = por %p226, %p227
      %p229 = scmp.ne.s32.totalorder %s217, %s218
      %p230 = scmp.eq.s32.totalorder %s40, 1
      %p231 = por %p229, %p230
      %p233 = scmp.ne.s32.totalorder %s218, %s232
      %p234 = scmp.eq.s32.totalorder %s40, 0
      %p235 = por %p233, %p234
      %s237 = sadd.s32 %s236, 1
      %p240 = scmp.eq.s32.totalorder %s34, 1
      %p241 = scmp.ne.s32.totalorder %s236, %s238
      %p242 = scmp.eq.s32.totalorder %s34, 0
      %p243 = por %p241, %p242
      %p244 = scmp.ne.s32.totalorder %s236, %s238
      %p245 = scmp.eq.s32.totalorder %s39, 1
      %p246 = por %p244, %p245
      %p247 = scmp.ne.s32.totalorder %s238, %s239
      %p248 = scmp.eq.s32.totalorder %s39, 0
      %p249 = por %p247, %p248
      %p250 = scmp.ne.s32.totalorder %s238, %s239
      %p251 = scmp.eq.s32.totalorder %s40, 1
      %p252 = por %p250, %p251
      %p254 = scmp.ne.s32.totalorder %s239, %s253
      %p255 = scmp.eq.s32.totalorder %s40, 0
      %p256 = por %p254, %p255
      %s258 = sadd.s32 %s257, 1
      %p261 = scmp.eq.s32.totalorder %s34, 1
      %p262 = scmp.ne.s32.totalorder %s257, %s259
      %p263 = scmp.eq.s32.totalorder %s34, 0
      %p264 = por %p262, %p263
      %p265 = scmp.ne.s32.totalorder %s257, %s259
      %p266 = scmp.eq.s32.totalorder %s39, 1
      %p267 = por %p265, %p266
      %p268 = scmp.ne.s32.totalorder %s259, %s260
      %p269 = scmp.eq.s32.totalorder %s39, 0
      %p270 = por %p268, %p269
      %p271 = scmp.ne.s32.totalorder %s259, %s260
      %p272 = scmp.eq.s32.totalorder %s40, 1
      %p273 = por %p271, %p272
      %p275 = scmp.ne.s32.totalorder %s260, %s274
      %p276 = scmp.eq.s32.totalorder %s40, 0
      %p277 = por %p275, %p276
      %s279 = sadd.s32 %s278, 1
      %p282 = scmp.eq.s32.totalorder %s34, 1
      %p283 = scmp.ne.s32.totalorder %s278, %s280
      %p284 = scmp.eq.s32.totalorder %s34, 0
      %p285 = por %p283, %p284
      %p286 = scmp.ne.s32.totalorder %s278, %s280
      %p287 = scmp.eq.s32.totalorder %s39, 1
      %p288 = por %p286, %p287
      %p289 = scmp.ne.s32.totalorder %s280, %s281
      %p290 = scmp.eq.s32.totalorder %s39, 0
      %p291 = por %p289, %p290
      %p292 = scmp.ne.s32.totalorder %s280, %s281
      %p293 = scmp.eq.s32.totalorder %s40, 1
      %p294 = por %p292, %p293
      %p296 = scmp.ne.s32.totalorder %s281, %s295
      %p297 = scmp.eq.s32.totalorder %s40, 0
      %p298 = por %p296, %p297
      %s300 = sadd.s32 %s299, 1
      %p303 = scmp.eq.s32.totalorder %s34, 1
      %p304 = scmp.ne.s32.totalorder %s299, %s301
      %p305 = scmp.eq.s32.totalorder %s34, 0
      %p306 = por %p304, %p305
      %p307 = scmp.ne.s32.totalorder %s299, %s301
      %p308 = scmp.eq.s32.totalorder %s39, 1
      %p309 = por %p307, %p308
      %p310 = scmp.ne.s32.totalorder %s301, %s302
      %p311 = scmp.eq.s32.totalorder %s39, 0
      %p312 = por %p310, %p311
      %p313 = scmp.ne.s32.totalorder %s301, %s302
      %p314 = scmp.eq.s32.totalorder %s40, 1
      %p315 = por %p313, %p314
      %p317 = scmp.ne.s32.totalorder %s302, %s316
      %p318 = scmp.eq.s32.totalorder %s40, 0
      %p319 = por %p317, %p318
      %s321 = sadd.s32 %s320, 1
      %p324 = scmp.eq.s32.totalorder %s34, 1
      %p325 = scmp.ne.s32.totalorder %s320, %s322
      %p326 = scmp.eq.s32.totalorder %s34, 0
      %p327 = por %p325, %p326
      %p328 = scmp.ne.s32.totalorder %s320, %s322
      %p329 = scmp.eq.s32.totalorder %s39, 1
      %p330 = por %p328, %p329
      %p331 = scmp.ne.s32.totalorder %s322, %s323
      %p332 = scmp.eq.s32.totalorder %s39, 0
      %p333 = por %p331, %p332
      %p334 = scmp.ne.s32.totalorder %s322, %s323
      %p335 = scmp.eq.s32.totalorder %s40, 1
      %p336 = por %p334, %p335
      %p338 = scmp.ne.s32.totalorder %s323, %s337
      %p339 = scmp.eq.s32.totalorder %s40, 0
      %p340 = por %p338, %p339
      %s342 = sadd.s32 %s341, 1
      %p345 = scmp.eq.s32.totalorder %s34, 1
      %p346 = scmp.ne.s32.totalorder %s341, %s343
      %p347 = scmp.eq.s32.totalorder %s34, 0
      %p348 = por %p346, %p347
      %p349 = scmp.ne.s32.totalorder %s341, %s343
      %p350 = scmp.eq.s32.totalorder %s39, 1
      %p351 = por %p349, %p350
      %p352 = scmp.ne.s32.totalorder %s343, %s344
      %p353 = scmp.eq.s32.totalorder %s39, 0
      %p354 = por %p352, %p353
      %p355 = scmp.ne.s32.totalorder %s343, %s344
      %p356 = scmp.eq.s32.totalorder %s40, 1
      %p357 = por %p355, %p356
      %p359 = scmp.ne.s32.totalorder %s344, %s358
      %p360 = scmp.eq.s32.totalorder %s40, 0
      %p361 = por %p359, %p360
      %s363 = sadd.s32 %s362, 1
      %p366 = scmp.eq.s32.totalorder %s34, 1
      %p367 = scmp.ne.s32.totalorder %s362, %s364
      %p368 = scmp.eq.s32.totalorder %s34, 0
      %p369 = por %p367, %p368
      %p370 = scmp.ne.s32.totalorder %s362, %s364
      %p371 = scmp.eq.s32.totalorder %s39, 1
      %p372 = por %p370, %p371
      %p373 = scmp.ne.s32.totalorder %s364, %s365
      %p374 = scmp.eq.s32.totalorder %s39, 0
      %p375 = por %p373, %p374
      %p376 = scmp.ne.s32.totalorder %s364, %s365
      %p377 = scmp.eq.s32.totalorder %s40, 1
      %p378 = por %p376, %p377
      %p380 = scmp.ne.s32.totalorder %s365, %s379
      %p381 = scmp.eq.s32.totalorder %s40, 0
      %p382 = por %p380, %p381
      %s384 = sadd.s32 %s383, 1
      %p387 = scmp.eq.s32.totalorder %s34, 1
      %p388 = scmp.ne.s32.totalorder %s383, %s385
      %p389 = scmp.eq.s32.totalorder %s34, 0
      %p390 = por %p388, %p389
      %p391 = scmp.ne.s32.totalorder %s383, %s385
      %p392 = scmp.eq.s32.totalorder %s39, 1
      %p393 = por %p391, %p392
      %p394 = scmp.ne.s32.totalorder %s385, %s386
      %p395 = scmp.eq.s32.totalorder %s39, 0
      %p396 = por %p394, %p395
      %p397 = scmp.ne.s32.totalorder %s385, %s386
      %p398 = scmp.eq.s32.totalorder %s40, 1
      %p399 = por %p397, %p398
      %p401 = scmp.ne.s32.totalorder %s386, %s400
      %p402 = scmp.eq.s32.totalorder %s40, 0
      %p403 = por %p401, %p402
      %s405 = sadd.s32 %s404, 1
      %p408 = scmp.eq.s32.totalorder %s34, 1
      %p409 = scmp.ne.s32.totalorder %s404, %s406
      %p410 = scmp.eq.s32.totalorder %s34, 0
      %p411 = por %p409, %p410
      %p412 = scmp.ne.s32.totalorder %s404, %s406
      %p413 = scmp.eq.s32.totalorder %s39, 1
      %p414 = por %p412, %p413
      %p415 = scmp.ne.s32.totalorder %s406, %s407
      %p416 = scmp.eq.s32.totalorder %s39, 0
      %p417 = por %p415, %p416
      %p418 = scmp.ne.s32.totalorder %s406, %s407
      %p419 = scmp.eq.s32.totalorder %s40, 1
      %p420 = por %p418, %p419
      %p422 = scmp.ne.s32.totalorder %s407, %s421
      %p423 = scmp.eq.s32.totalorder %s40, 0
      %p424 = por %p422, %p423
      %s426 = sadd.s32 %s425, 1
      %p429 = scmp.eq.s32.totalorder %s34, 1
      %p430 = scmp.ne.s32.totalorder %s425, %s427
      %p431 = scmp.eq.s32.totalorder %s34, 0
      %p432 = por %p430, %p431
      %p433 = scmp.ne.s32.totalorder %s425, %s427
      %p434 = scmp.eq.s32.totalorder %s39, 1
      %p435 = por %p433, %p434
      %p436 = scmp.ne.s32.totalorder %s427, %s428
      %p437 = scmp.eq.s32.totalorder %s39, 0
      %p438 = por %p436, %p437
      %p439 = scmp.ne.s32.totalorder %s427, %s428
      %p440 = scmp.eq.s32.totalorder %s40, 1
      %p441 = por %p439, %p440
      %p443 = scmp.ne.s32.totalorder %s428, %s442
      %p444 = scmp.eq.s32.totalorder %s40, 0
      %p445 = por %p443, %p444
      %s446 = ssub.s32 %s34, %s41
      %p447 = scmp.eq.s32.totalorder %s446, 0
      %s449 = sadd.s32 %s448, 1
      %s450 = scalar_select %p447, %s448, %s449
      %p453 = pneg %p447
      %p454 = scmp.eq.s32.totalorder %s34, 1
      %p455 = por %p453, %p454
      %p456 = scmp.ne.s32.totalorder %s448, %s451
      %p457 = scmp.eq.s32.totalorder %s34, 0
      %p458 = por %p456, %p457
      %p459 = scmp.ne.s32.totalorder %s448, %s451
      %p460 = scmp.eq.s32.totalorder %s39, 1
      %p461 = por %p459, %p460
      %p462 = scmp.ne.s32.totalorder %s451, %s452
      %p463 = scmp.eq.s32.totalorder %s39, 0
      %p464 = por %p462, %p463
      %p465 = scmp.ne.s32.totalorder %s451, %s452
      %p466 = scmp.eq.s32.totalorder %s40, 1
      %p467 = por %p465, %p466
      %p469 = scmp.ne.s32.totalorder %s452, %s468
      %p470 = scmp.eq.s32.totalorder %s40, 0
      %p471 = por %p469, %p470
      %p472 = scmp.le.s32.totalorder 1, %s34
      %p473 = scmp.lt.s32.totalorder %s34, 3
      %p474 = pnand %p472, %p473
      %p475 = pneg %p474
      // Predicated region
      $region9: #{lenet_forward.1} parent=5 // pred_check
        _
      $region10: #{lenet_forward.1} parent=5 // pred_check_branch
        %477 = sbr.rel (%p474) target = $region12
      $region11: #{lenet_forward.1} parent=5 // pred_region
        %s478 = ssub.s32 %s34, 1
        // Predicated region
        $region13: #{lenet_forward.1} parent=11 // pred_check
          %p479 = pneg %p81
        $region14: #{lenet_forward.1} parent=11 // pred_check_branch
          %481 = sbr.rel (%p479) target = $region16
        $region15: #{lenet_forward.1} parent=11 // pred_region
          %s483 = ssub.s32 2560, 2560
          %484 = vsyncadd [#allocation3], %s483
          %s485 = sshll.u32 [#allocation2], 4
          %s486 = int_to_ptr.vmem [resolvable:$true] %s485
          %491 = dma.hbm_to_vmem [thread:$0]  %s1, 2560, %s486, [#allocation3], 128, 128, 8
        $region16: #{lenet_forward.1} parent=11 // pred_fallthru
          _
        // Predicated region
        $region17: #{lenet_forward.1} parent=11 // pred_check
          %p492 = pneg %p102
        $region18: #{lenet_forward.1} parent=11 // pred_check_branch
          %494 = sbr.rel (%p492) target = $region20
        $region19: #{lenet_forward.1} parent=11 // pred_region
          _
        $region20: #{lenet_forward.1} parent=11 // pred_fallthru
          _
        // Predicated region
        $region21: #{lenet_forward.1} parent=11 // pred_check
          %p495 = pneg %p123
        $region22: #{lenet_forward.1} parent=11 // pred_check_branch
          %497 = sbr.rel (%p495) target = $region24
        $region23: #{lenet_forward.1} parent=11 // pred_region
          %s499 = ssub.s32 256, 256
          %500 = vsyncadd [#allocation6], %s499
          %s501 = sshll.u32 [#allocation5], 4
          %s502 = int_to_ptr.vmem [resolvable:$true] %s501
          %507 = dma.hbm_to_vmem [thread:$0]  %s3, 256, %s502, [#allocation6], 128, 128, 8
        $region24: #{lenet_forward.1} parent=11 // pred_fallthru
          _
        // Predicated region
        $region25: #{lenet_forward.1} parent=11 // pred_check
          %p508 = pneg %p144
        $region26: #{lenet_forward.1} parent=11 // pred_check_branch
          %510 = sbr.rel (%p508) target = $region28
        $region27: #{lenet_forward.1} parent=11 // pred_region
          %s512 = ssub.s32 256, 256
          %513 = vsyncadd [#allocation6], %s512
          %s514 = sshll.u32 [#allocation7], 4
          %s515 = int_to_ptr.vmem [resolvable:$true] %s514
          %520 = dma.hbm_to_vmem [thread:$0]  %s4, 256, %s515, [#allocation6], 128, 128, 8
        $region28: #{lenet_forward.1} parent=11 // pred_fallthru
          _
        // Predicated region
        $region29: #{lenet_forward.1} parent=11 // pred_check
          %p521 = pneg %p165
        $region30: #{lenet_forward.1} parent=11 // pred_check_branch
          %523 = sbr.rel (%p521) target = $region32
        $region31: #{lenet_forward.1} parent=11 // pred_region
          %s525 = ssub.s32 2688, 2688
          %526 = vsyncadd [#allocation9], %s525
          %s527 = sshll.u32 [#allocation8], 4
          %s528 = int_to_ptr.vmem [resolvable:$true] %s527
          %533 = dma.hbm_to_vmem [thread:$0]  %s5, 2688, %s528, [#allocation9], 128, 128, 8
        $region32: #{lenet_forward.1} parent=11 // pred_fallthru
          _
        // Predicated region
        $region33: #{lenet_forward.1} parent=11 // pred_check
          %p534 = pneg %p186
        $region34: #{lenet_forward.1} parent=11 // pred_check_branch
          %536 = sbr.rel (%p534) target = $region36
        $region35: #{lenet_forward.1} parent=11 // pred_region
          %s538 = ssub.s32 2688, 2688
          %539 = vsyncadd [#allocation9], %s538
          %s540 = sshll.u32 [#allocation10], 4
          %s541 = int_to_ptr.vmem [resolvable:$true] %s540
          %546 = dma.hbm_to_vmem [thread:$0]  %s6, 2688, %s541, [#allocation9], 128, 128, 8
        $region36: #{lenet_forward.1} parent=11 // pred_fallthru
          _
        // Predicated region
        $region37: #{lenet_forward.1} parent=11 // pred_check
          %p547 = pneg %p207
        $region38: #{lenet_forward.1} parent=11 // pred_check_branch
          %549 = sbr.rel (%p547) target = $region40
        $region39: #{lenet_forward.1} parent=11 // pred_region
          _
        $region40: #{lenet_forward.1} parent=11 // pred_fallthru
          _
        // Predicated region
        $region41: #{lenet_forward.1} parent=11 // pred_check
          %p550 = pneg %p228
        $region42: #{lenet_forward.1} parent=11 // pred_check_branch
          %552 = sbr.rel (%p550) target = $region44
        $region43: #{lenet_forward.1} parent=11 // pred_region
          _
        $region44: #{lenet_forward.1} parent=11 // pred_fallthru
          _
        // Predicated region
        $region45: #{lenet_forward.1} parent=11 // pred_check
          %p553 = pneg %p249
        $region46: #{lenet_forward.1} parent=11 // pred_check_branch
          %555 = sbr.rel (%p553) target = $region48
        $region47: #{lenet_forward.1} parent=11 // pred_region
          %s557 = ssub.s32 128, 128
          %558 = vsyncadd [#allocation12], %s557
          %s560 = sshll.u32 [#allocation11], 4
          %s561 = int_to_ptr.vmem [resolvable:$true] %s560
          %563 = dma.hbm_to_vmem [thread:$0]  %s9, 128, %s561, [#allocation12]
        $region48: #{lenet_forward.1} parent=11 // pred_fallthru
          _
        // Predicated region
        $region49: #{lenet_forward.1} parent=11 // pred_check
          %p564 = pneg %p270
        $region50: #{lenet_forward.1} parent=11 // pred_check_branch
          %566 = sbr.rel (%p564) target = $region52
        $region51: #{lenet_forward.1} parent=11 // pred_region
          %s568 = ssub.s32 128, 128
          %569 = vsyncadd [#allocation12], %s568
          %s571 = sshll.u32 [#allocation13], 4
          %s572 = int_to_ptr.vmem [resolvable:$true] %s571
          %574 = dma.hbm_to_vmem [thread:$0]  %s10, 128, %s572, [#allocation12]
        $region52: #{lenet_forward.1} parent=11 // pred_fallthru
          _
        // Predicated region
        $region53: #{lenet_forward.1} parent=11 // pred_check
          %p575 = pneg %p291
        $region54: #{lenet_forward.1} parent=11 // pred_check_branch
          %577 = sbr.rel (%p575) target = $region56
        $region55: #{lenet_forward.1} parent=11 // pred_region
          %s579 = ssub.s32 2560, 2560
          %580 = vsyncadd [#allocation15], %s579
          %s581 = sshll.u32 [#allocation14], 4
          %s582 = int_to_ptr.vmem [resolvable:$true] %s581
          %587 = dma.hbm_to_vmem [thread:$0]  %s11, 2560, %s582, [#allocation15], 128, 128, 8
        $region56: #{lenet_forward.1} parent=11 // pred_fallthru
          _
        // Predicated region
        $region57: #{lenet_forward.1} parent=11 // pred_check
          %p588 = pneg %p312
        $region58: #{lenet_forward.1} parent=11 // pred_check_branch
          %590 = sbr.rel (%p588) target = $region60
        $region59: #{lenet_forward.1} parent=11 // pred_region
          %s592 = ssub.s32 2560, 2560
          %593 = vsyncadd [#allocation15], %s592
          %s594 = sshll.u32 [#allocation16], 4
          %s595 = int_to_ptr.vmem [resolvable:$true] %s594
          %600 = dma.hbm_to_vmem [thread:$0]  %s12, 2560, %s595, [#allocation15], 128, 128, 8
        $region60: #{lenet_forward.1} parent=11 // pred_fallthru
          _
        // Predicated region
        $region61: #{lenet_forward.1} parent=11 // pred_check
          %p601 = pneg %p333
        $region62: #{lenet_forward.1} parent=11 // pred_check_branch
          %603 = sbr.rel (%p601) target = $region64
        $region63: #{lenet_forward.1} parent=11 // pred_region
          %s605 = ssub.s32 3200, 3200
          %606 = vsyncadd [#allocation18], %s605
          %s607 = sshll.u32 [#allocation17], 4
          %s608 = int_to_ptr.vmem [resolvable:$true] %s607
          %613 = dma.hbm_to_vmem [thread:$0]  %s13, 3200, %s608, [#allocation18], 64, 64, 4
        $region64: #{lenet_forward.1} parent=11 // pred_fallthru
          _
        // Predicated region
        $region65: #{lenet_forward.1} parent=11 // pred_check
          %p614 = pneg %p354
        $region66: #{lenet_forward.1} parent=11 // pred_check_branch
          %616 = sbr.rel (%p614) target = $region68
        $region67: #{lenet_forward.1} parent=11 // pred_region
          _
        $region68: #{lenet_forward.1} parent=11 // pred_fallthru
          _
        // Predicated region
        $region69: #{lenet_forward.1} parent=11 // pred_check
          %p617 = pneg %p375
        $region70: #{lenet_forward.1} parent=11 // pred_check_branch
          %619 = sbr.rel (%p617) target = $region72
        $region71: #{lenet_forward.1} parent=11 // pred_region
          _
        $region72: #{lenet_forward.1} parent=11 // pred_fallthru
          _
        // Predicated region
        $region73: #{lenet_forward.1} parent=11 // pred_check
          %p620 = pneg %p396
        $region74: #{lenet_forward.1} parent=11 // pred_check_branch
          %622 = sbr.rel (%p620) target = $region76
        $region75: #{lenet_forward.1} parent=11 // pred_region
          _
        $region76: #{lenet_forward.1} parent=11 // pred_fallthru
          _
        // Predicated region
        $region77: #{lenet_forward.1} parent=11 // pred_check
          %p623 = pneg %p417
        $region78: #{lenet_forward.1} parent=11 // pred_check_branch
          %625 = sbr.rel (%p623) target = $region80
        $region79: #{lenet_forward.1} parent=11 // pred_region
          _
        $region80: #{lenet_forward.1} parent=11 // pred_fallthru
          _
        // Predicated region
        $region81: #{lenet_forward.1} parent=11 // pred_check
          %p626 = pneg %p438
        $region82: #{lenet_forward.1} parent=11 // pred_check_branch
          %628 = sbr.rel (%p626) target = $region84
        $region83: #{lenet_forward.1} parent=11 // pred_region
          _
        $region84: #{lenet_forward.1} parent=11 // pred_fallthru
          _
      $region12: #{lenet_forward.1} parent=5 // pred_fallthru
        _
      %p629 = scmp.lt.s32.totalorder %s34, 2
      // Predicated region
      $region85: #{lenet_forward.1} parent=5 // pred_check
        %p630 = pneg %p629
      $region86: #{lenet_forward.1} parent=5 // pred_check_branch
        %632 = sbr.rel (%p630) target = $region88
      $region87: #{lenet_forward.1} parent=5 // pred_region
        // Predicated region
        $region89: #{lenet_forward.1} parent=87 // pred_check
          %p633 = pneg %p54
        $region90: #{lenet_forward.1} parent=87 // pred_check_branch
          %635 = sbr.rel (%p633) target = $region92
        $region91: #{lenet_forward.1} parent=87 // pred_region
          %p636 = scmp.lt.s32.totalorder %s34, 1
          %s637 = scalar_select %p636, %s34, 1
          %s638 = smul.addr %s637, 4
          %s639 = smul.addr %s638, 8
          %s640 = scalar_lea.vmem %s0, %s639
        $region92: #{lenet_forward.1} parent=87 // pred_fallthru
          _
      $region88: #{lenet_forward.1} parent=5 // pred_fallthru
        _
      %p641 = scmp.le.s32.totalorder 1, %s34
      %p642 = scmp.lt.s32.totalorder %s34, 3
      %p643 = pnand %p641, %p642
      %p644 = pneg %p643
      // Predicated region
      $region93: #{lenet_forward.1} parent=5 // pred_check
        _
      $region94: #{lenet_forward.1} parent=5 // pred_check_branch
        %646 = sbr.rel (%p643) target = $region96
      $region95: #{lenet_forward.1} parent=5 // pred_region
        %s647 = ssub.s32 %s34, 1
        // Predicated region
        $region97: #{lenet_forward.1} parent=95 // pred_check
          %p648 = pneg %p81
        $region98: #{lenet_forward.1} parent=95 // pred_check_branch
          %650 = sbr.rel (%p648) target = $region100
        $region99: #{lenet_forward.1} parent=95 // pred_region
          %651 = dma.done [#allocation3], 2560
        $region100: #{lenet_forward.1} parent=95 // pred_fallthru
          _
        // Predicated region
        $region101: #{lenet_forward.1} parent=95 // pred_check
          %p652 = pneg %p123
        $region102: #{lenet_forward.1} parent=95 // pred_check_branch
          %654 = sbr.rel (%p652) target = $region104
        $region103: #{lenet_forward.1} parent=95 // pred_region
          %655 = dma.done [#allocation6], 256
        $region104: #{lenet_forward.1} parent=95 // pred_fallthru
          _
        // Predicated region
        $region105: #{lenet_forward.1} parent=95 // pred_check
          %p656 = pneg %p144
        $region106: #{lenet_forward.1} parent=95 // pred_check_branch
          %658 = sbr.rel (%p656) target = $region108
        $region107: #{lenet_forward.1} parent=95 // pred_region
          %659 = dma.done [#allocation6], 256
        $region108: #{lenet_forward.1} parent=95 // pred_fallthru
          _
        // Predicated region
        $region109: #{lenet_forward.1} parent=95 // pred_check
          %p660 = pneg %p165
        $region110: #{lenet_forward.1} parent=95 // pred_check_branch
          %662 = sbr.rel (%p660) target = $region112
        $region111: #{lenet_forward.1} parent=95 // pred_region
          %663 = dma.done [#allocation9], 2688
        $region112: #{lenet_forward.1} parent=95 // pred_fallthru
          _
        // Predicated region
        $region113: #{lenet_forward.1} parent=95 // pred_check
          %p664 = pneg %p186
        $region114: #{lenet_forward.1} parent=95 // pred_check_branch
          %666 = sbr.rel (%p664) target = $region116
        $region115: #{lenet_forward.1} parent=95 // pred_region
          %667 = dma.done [#allocation9], 2688
        $region116: #{lenet_forward.1} parent=95 // pred_fallthru
          _
        // Predicated region
        $region117: #{lenet_forward.1} parent=95 // pred_check
          %p668 = pneg %p249
        $region118: #{lenet_forward.1} parent=95 // pred_check_branch
          %670 = sbr.rel (%p668) target = $region120
        $region119: #{lenet_forward.1} parent=95 // pred_region
          %671 = dma.done [#allocation12], 128
        $region120: #{lenet_forward.1} parent=95 // pred_fallthru
          _
        // Predicated region
        $region121: #{lenet_forward.1} parent=95 // pred_check
          %p672 = pneg %p270
        $region122: #{lenet_forward.1} parent=95 // pred_check_branch
          %674 = sbr.rel (%p672) target = $region124
        $region123: #{lenet_forward.1} parent=95 // pred_region
          %675 = dma.done [#allocation12], 128
        $region124: #{lenet_forward.1} parent=95 // pred_fallthru
          _
        // Predicated region
        $region125: #{lenet_forward.1} parent=95 // pred_check
          %p676 = pneg %p291
        $region126: #{lenet_forward.1} parent=95 // pred_check_branch
          %678 = sbr.rel (%p676) target = $region128
        $region127: #{lenet_forward.1} parent=95 // pred_region
          %679 = dma.done [#allocation15], 2560
        $region128: #{lenet_forward.1} parent=95 // pred_fallthru
          _
        // Predicated region
        $region129: #{lenet_forward.1} parent=95 // pred_check
          %p680 = pneg %p312
        $region130: #{lenet_forward.1} parent=95 // pred_check_branch
          %682 = sbr.rel (%p680) target = $region132
        $region131: #{lenet_forward.1} parent=95 // pred_region
          %683 = dma.done [#allocation15], 2560
        $region132: #{lenet_forward.1} parent=95 // pred_fallthru
          _
        // Predicated region
        $region133: #{lenet_forward.1} parent=95 // pred_check
          %p684 = pneg %p333
        $region134: #{lenet_forward.1} parent=95 // pred_check_branch
          %686 = sbr.rel (%p684) target = $region136
        $region135: #{lenet_forward.1} parent=95 // pred_region
          %687 = dma.done [#allocation18], 3200
        $region136: #{lenet_forward.1} parent=95 // pred_fallthru
          _
        %p688 = scmp.lt.s32.totalorder %s39, 1
        %s689 = scalar_select %p688, %s39, 1
        %s690 = smul.addr %s689, 4
        %s691 = smul.addr %s690, 8
        %s692 = scalar_lea.vmem %s0, %s691
        %p693 = pneg %p60
        %p694 = pneg %p57
        %p695 = pneg %p81
        %p696 = pneg %p78
        %p697 = pneg %p102
        %p698 = pneg %p99
        %p699 = pneg %p123
        %p700 = pneg %p120
        %p701 = pneg %p144
        %p702 = pneg %p141
        %p703 = pneg %p165
        %p704 = pneg %p162
        %p705 = pneg %p186
        %p706 = pneg %p183
        %p707 = pneg %p207
        %p708 = pneg %p204
        %p709 = pneg %p228
        %p710 = pneg %p225
        %p711 = pneg %p249
        %p712 = pneg %p246
        %p713 = pneg %p270
        %p714 = pneg %p267
        %p715 = pneg %p291
        %p716 = pneg %p288
        %p717 = pneg %p312
        %p718 = pneg %p309
        %p719 = pneg %p333
        %p720 = pneg %p330
        %p721 = pneg %p354
        %p722 = pneg %p351
        %p723 = pneg %p375
        %p724 = pneg %p372
        %p725 = pneg %p396
        %p726 = pneg %p393
        %p727 = pneg %p417
        %p728 = pneg %p414
        %p729 = pneg %p438
        %p730 = pneg %p435
        %p731 = pneg %p464
        %p732 = pneg %p461
        %s733 = sand.u32 %s451, 1
        %s734 = scalar_lea.sflag [#allocation4], %s733
        %s735 = sand.u32 %s451, 1
        %s736 = scalar_lea.vmem [#allocation19], %s735
        %p737 = scmp.lt.s32.totalorder %s39, 1
        %s738 = scalar_select %p737, %s39, 1
        %s739 = smul.addr %s738, 4
        %s740 = smul.addr %s739, 8
        %s741 = scalar_lea.vmem %s0, %s740
        %v743 = vld [vmem:[%s741] sm:$0xff]
        %v744 = vld [vmem:[%s741 + $0x8] sm:$0xff]
        %v745 = vld [vmem:[%s741 + $0x10] sm:$0xff]
        %v746 = vld [vmem:[%s741 + $0x18] sm:$0xf]
        %v747 = vpack.c.bf16 %v744, %v743
        %v748 = vpack.c.bf16 %v746, %v745
        %v749 = vld [vmem:[#allocation2] sm:$0xff]
        %v750 = vld [vmem:[#allocation2 + $0x8] sm:$0xff]
        %v751 = vld [vmem:[#allocation2 + $0x10] sm:$0xff]
        %v752 = vld [vmem:[#allocation2 + $0x18] sm:$0xff]
        %v753 = vld [vmem:[%s741 + $0x1] sm:$0xff]
        %v754 = vld [vmem:[%s741 + $0x9] sm:$0xff]
        %v755 = vld [vmem:[%s741 + $0x11] sm:$0xff]
        %v756 = vld [vmem:[%s741 + $0x19] sm:$0xf]
        %v757 = vpack.c.bf16 %v754, %v753
        %v758 = vpack.c.bf16 %v756, %v755
        %s759 = scalar_lea.vmem [#allocation2], 32
        %v760 = vld [vmem:[%s759] sm:$0xff]
        %v761 = vld [vmem:[%s759 + $0x8] sm:$0xff]
        %v762 = vld [vmem:[%s759 + $0x10] sm:$0xff]
        %v763 = vld [vmem:[%s759 + $0x18] sm:$0xff]
        %v768 = vunpack.c.l.b16 %v760
        %v769 = vunpack.c.h.b16 %v760
        %v770 = vunpack.c.l.b16 %v761
        %v771 = vunpack.c.h.b16 %v761
        %v772 = vunpack.c.l.b16 %v762
        %v773 = vunpack.c.h.b16 %v762
        %v774 = vunpack.c.l.b16 %v763
        %v775 = vunpack.c.h.b16 %v763
        %v776 = vpack.c.b16 %v770, %v768
        %v777 = vpack.c.b16 %v771, %v769
        %v778 = vpack.c.b16 %v774, %v772
        %v779 = vpack.c.b16 %v775, %v773
        %vm784 = vcmask 261120
        %v786 = vsel %vm784, %v757, 0
        %v789 = vsel %vm784, %v758, 0
        %791 = vmatprep.subr.bf16.mxu0 %v777
        %792 = vmatpush1.bf16.msra.mxu0 %v776
        %793 = vmatprep.subr.bf16.mxu0 %v779
        %794 = vmatpush1.bf16.msra.mxu0 %v778
        %795 = vmatprep.subr.bf16.mxu0 0
        %796 = vmatpush1.bf16.msra.mxu0 0
        %797 = vmatprep.subr.bf16.mxu0 0
        %798 = vmatpush1.bf16.msra.mxu0 0
        %799 = vmatprep.subr.bf16.mxu0 0
        %800 = vmatpush1.bf16.msra.mxu0 0
        %801 = vmatprep.subr.bf16.mxu0 0
        %802 = vmatpush1.bf16.msra.mxu0 0
        %803 = vmatprep.subr.bf16.mxu0 0
        %804 = vmatpush1.bf16.msra.mxu0 0
        %805 = vmatprep.subr.bf16.mxu0 0
        %806 = vmatpush1.bf16.msra.mxu0 0
        %807 = vmatprep.subr.bf16.mxu0 0
        %808 = vmatpush1.bf16.msra.mxu0 0
        %809 = vmatprep.subr.bf16.mxu0 0
        %810 = vmatpush1.bf16.msra.mxu0 0
        %811 = vmatprep.subr.bf16.mxu0 0
        %812 = vmatpush1.bf16.msra.mxu0 0
        %813 = vmatprep.subr.bf16.mxu0 0
        %814 = vmatpush1.bf16.msra.mxu0 0
        %815 = vmatprep.subr.bf16.mxu0 0
        %816 = vmatpush1.bf16.msra.mxu0 0
        %817 = vmatprep.subr.bf16.mxu0 0
        %818 = vmatpush1.bf16.msra.mxu0 0
        %819 = vmatprep.subr.bf16.mxu0 0
        %820 = vmatpush1.bf16.msra.mxu0 0
        %821 = vmatprep.subr.bf16.mxu0 0
        %822 = vmatpush1.bf16.msra.mxu0 0
        %823 = vmatprep.mubr.bf16.mxu0 0
        %824 = vmatmul.mubr.bf16.gmra.mrb[0].mxu0 %v786
        %v825 = vpop.f32.mrb[0].mxu0
        %v826 = vadd.f32 0.0, %v825
        %v827 = vpop.f32.mrb[0].mxu0
        %v828 = vadd.f32 0.0, %v827
        %v829 = vpop.f32.mrb[0].mxu0
        %v830 = vadd.f32 0.0, %v829
        %v831 = vpop.f32.mrb[0].mxu0
        %v832 = vadd.f32 0.0, %v831
        %833 = vmatprep.mubr.bf16.mxu0 0
        %834 = vmatmul.mubr.bf16.gmra.mrb[0].mxu0 %v789
        %v835 = vpop.f32.mrb[0].mxu0
        %v836 = vadd.f32 0.0, %v835
        %v837 = vpop.f32.mrb[0].mxu0
        %v838 = vadd.f32 0.0, %v837
        %v839 = vpop.f32.mrb[0].mxu0
        %v840 = vadd.f32 0.0, %v839
        %v841 = vpop.f32.mrb[0].mxu0
        %v842 = vadd.f32 0.0, %v841
        %843 = vdwg.mxu0
        %v848 = vunpack.c.l.b16 %v749
        %v849 = vunpack.c.h.b16 %v749
        %v850 = vunpack.c.l.b16 %v750
        %v851 = vunpack.c.h.b16 %v750
        %v852 = vunpack.c.l.b16 %v751
        %v853 = vunpack.c.h.b16 %v751
        %v854 = vunpack.c.l.b16 %v752
        %v855 = vunpack.c.h.b16 %v752
        %v856 = vpack.c.b16 %v850, %v848
        %v857 = vpack.c.b16 %v851, %v849
        %v858 = vpack.c.b16 %v854, %v852
        %v859 = vpack.c.b16 %v855, %v853
        %v865 = vsel %vm784, %v747, 0
        %v868 = vsel %vm784, %v748, 0
        %870 = vmatprep.subr.bf16.mxu0 %v857
        %871 = vmatpush1.bf16.msra.mxu0 %v856
        %872 = vmatprep.subr.bf16.mxu0 %v859
        %873 = vmatpush1.bf16.msra.mxu0 %v858
        %874 = vmatprep.subr.bf16.mxu0 0
        %875 = vmatpush1.bf16.msra.mxu0 0
        %876 = vmatprep.subr.bf16.mxu0 0
        %877 = vmatpush1.bf16.msra.mxu0 0
        %878 = vmatprep.subr.bf16.mxu0 0
        %879 = vmatpush1.bf16.msra.mxu0 0
        %880 = vmatprep.subr.bf16.mxu0 0
        %881 = vmatpush1.bf16.msra.mxu0 0
        %882 = vmatprep.subr.bf16.mxu0 0
        %883 = vmatpush1.bf16.msra.mxu0 0
        %884 = vmatprep.subr.bf16.mxu0 0
        %885 = vmatpush1.bf16.msra.mxu0 0
        %886 = vmatprep.subr.bf16.mxu0 0
        %887 = vmatpush1.bf16.msra.mxu0 0
        %888 = vmatprep.subr.bf16.mxu0 0
        %889 = vmatpush1.bf16.msra.mxu0 0
        %890 = vmatprep.subr.bf16.mxu0 0
        %891 = vmatpush1.bf16.msra.mxu0 0
        %892 = vmatprep.subr.bf16.mxu0 0
        %893 = vmatpush1.bf16.msra.mxu0 0
        %894 = vmatprep.subr.bf16.mxu0 0
        %895 = vmatpush1.bf16.msra.mxu0 0
        %896 = vmatprep.subr.bf16.mxu0 0
        %897 = vmatpush1.bf16.msra.mxu0 0
        %898 = vmatprep.subr.bf16.mxu0 0
        %899 = vmatpush1.bf16.msra.mxu0 0
        %900 = vmatprep.subr.bf16.mxu0 0
        %901 = vmatpush1.bf16.msra.mxu0 0
        %902 = vmatprep.mubr.bf16.mxu0 0
        %903 = vmatmul.mubr.bf16.gmra.mrb[0].mxu0 %v865
        %v904 = vpop.f32.mrb[0].mxu0
        %v905 = vadd.f32 %v826, %v904
        %v906 = vpop.f32.mrb[0].mxu0
        %v907 = vadd.f32 %v828, %v906
        %v908 = vpop.f32.mrb[0].mxu0
        %v909 = vadd.f32 %v830, %v908
        %v910 = vpop.f32.mrb[0].mxu0
        %v911 = vadd.f32 %v832, %v910
        %912 = vmatprep.mubr.bf16.mxu0 0
        %913 = vmatmul.mubr.bf16.gmra.mrb[0].mxu0 %v868
        %v914 = vpop.f32.mrb[0].mxu0
        %v915 = vadd.f32 %v836, %v914
        %v916 = vpop.f32.mrb[0].mxu0
        %v917 = vadd.f32 %v838, %v916
        %v918 = vpop.f32.mrb[0].mxu0
        %v919 = vadd.f32 %v840, %v918
        %v920 = vpop.f32.mrb[0].mxu0
        %v921 = vadd.f32 %v842, %v920
        %922 = vdwg.mxu0
        %v923 = vld [vmem:[%s741 + $0x2] sm:$0xff]
        %v924 = vld [vmem:[%s741 + $0xa] sm:$0xff]
        %v925 = vld [vmem:[%s741 + $0x12] sm:$0xff]
        %v926 = vld [vmem:[%s741 + $0x1a] sm:$0xf]
        %v927 = vpack.c.bf16 %v924, %v923
        %v928 = vpack.c.bf16 %v926, %v925
        %s929 = scalar_lea.vmem [#allocation2], 64
        %v930 = vld [vmem:[%s929] sm:$0xff]
        %v931 = vld [vmem:[%s929 + $0x8] sm:$0xff]
        %v932 = vld [vmem:[%s929 + $0x10] sm:$0xff]
        %v933 = vld [vmem:[%s929 + $0x18] sm:$0xff]
        %v938 = vunpack.c.l.b16 %v930
        %v939 = vunpack.c.h.b16 %v930
        %v940 = vunpack.c.l.b16 %v931
        %v941 = vunpack.c.h.b16 %v931
        %v942 = vunpack.c.l.b16 %v932
        %v943 = vunpack.c.h.b16 %v932
        %v944 = vunpack.c.l.b16 %v933
        %v945 = vunpack.c.h.b16 %v933
        %v946 = vpack.c.b16 %v940, %v938
        %v947 = vpack.c.b16 %v941, %v939
        %v948 = vpack.c.b16 %v944, %v942
        %v949 = vpack.c.b16 %v945, %v943
        %v955 = vsel %vm784, %v927, 0
        %v958 = vsel %vm784, %v928, 0
        %960 = vmatprep.subr.bf16.mxu0 %v947
        %961 = vmatpush1.bf16.msra.mxu0 %v946
        %962 = vmatprep.subr.bf16.mxu0 %v949
        %963 = vmatpush1.bf16.msra.mxu0 %v948
        %964 = vmatprep.subr.bf16.mxu0 0
        %965 = vmatpush1.bf16.msra.mxu0 0
        %966 = vmatprep.subr.bf16.mxu0 0
        %967 = vmatpush1.bf16.msra.mxu0 0
        %968 = vmatprep.subr.bf16.mxu0 0
        %969 = vmatpush1.bf16.msra.mxu0 0
        %970 = vmatprep.subr.bf16.mxu0 0
        %971 = vmatpush1.bf16.msra.mxu0 0
        %972 = vmatprep.subr.bf16.mxu0 0
        %973 = vmatpush1.bf16.msra.mxu0 0
        %974 = vmatprep.subr.bf16.mxu0 0
        %975 = vmatpush1.bf16.msra.mxu0 0
        %976 = vmatprep.subr.bf16.mxu0 0
        %977 = vmatpush1.bf16.msra.mxu0 0
        %978 = vmatprep.subr.bf16.mxu0 0
        %979 = vmatpush1.bf16.msra.mxu0 0
        %980 = vmatprep.subr.bf16.mxu0 0
        %981 = vmatpush1.bf16.msra.mxu0 0
        %982 = vmatprep.subr.bf16.mxu0 0
        %983 = vmatpush1.bf16.msra.mxu0 0
        %984 = vmatprep.subr.bf16.mxu0 0
        %985 = vmatpush1.bf16.msra.mxu0 0
        %986 = vmatprep.subr.bf16.mxu0 0
        %987 = vmatpush1.bf16.msra.mxu0 0
        %988 = vmatprep.subr.bf16.mxu0 0
        %989 = vmatpush1.bf16.msra.mxu0 0
        %990 = vmatprep.subr.bf16.mxu0 0
        %991 = vmatpush1.bf16.msra.mxu0 0
        %992 = vmatprep.mubr.bf16.mxu0 0
        %993 = vmatmul.mubr.bf16.gmra.mrb[0].mxu0 %v955
        %v994 = vpop.f32.mrb[0].mxu0
        %v995 = vadd.f32 0.0, %v994
        %v996 = vpop.f32.mrb[0].mxu0
        %v997 = vadd.f32 0.0, %v996
        %v998 = vpop.f32.mrb[0].mxu0
        %v999 = vadd.f32 0.0, %v998
        %v1000 = vpop.f32.mrb[0].mxu0
        %v1001 = vadd.f32 0.0, %v1000
        %1002 = vmatprep.mubr.bf16.mxu0 0
        %1003 = vmatmul.mubr.bf16.gmra.mrb[0].mxu0 %v958
        %v1004 = vpop.f32.mrb[0].mxu0
        %v1005 = vadd.f32 0.0, %v1004
        %v1006 = vpop.f32.mrb[0].mxu0
        %v1007 = vadd.f32 0.0, %v1006
        %v1008 = vpop.f32.mrb[0].mxu0
        %v1009 = vadd.f32 0.0, %v1008
        %v1010 = vpop.f32.mrb[0].mxu0
        %v1011 = vadd.f32 0.0, %v1010
        %1012 = vdwg.mxu0
        %v1013 = vadd.f32 %v905, %v995
        %v1014 = vadd.f32 %v907, %v997
        %v1015 = vadd.f32 %v909, %v999
        %v1016 = vadd.f32 %v911, %v1001
        %v1017 = vadd.f32 %v915, %v1005
        %v1018 = vadd.f32 %v917, %v1007
        %v1019 = vadd.f32 %v919, %v1009
        %v1020 = vadd.f32 %v921, %v1011
        %v1021 = vld [vmem:[%s741 + $0x3] sm:$0xff]
        %v1022 = vld [vmem:[%s741 + $0xb] sm:$0xff]
        %v1023 = vld [vmem:[%s741 + $0x13] sm:$0xff]
        %v1024 = vld [vmem:[%s741 + $0x1b] sm:$0xf]
        %v1025 = vpack.c.bf16 %v1022, %v1021
        %v1026 = vpack.c.bf16 %v1024, %v1023
        %s1027 = scalar_lea.vmem [#allocation2], 96
        %v1028 = vld [vmem:[%s1027] sm:$0xff]
        %v1029 = vld [vmem:[%s1027 + $0x8] sm:$0xff]
        %v1030 = vld [vmem:[%s1027 + $0x10] sm:$0xff]
        %v1031 = vld [vmem:[%s1027 + $0x18] sm:$0xff]
        %v1036 = vunpack.c.l.b16 %v1028
        %v1037 = vunpack.c.h.b16 %v1028
        %v1038 = vunpack.c.l.b16 %v1029
        %v1039 = vunpack.c.h.b16 %v1029
        %v1040 = vunpack.c.l.b16 %v1030
        %v1041 = vunpack.c.h.b16 %v1030
        %v1042 = vunpack.c.l.b16 %v1031
        %v1043 = vunpack.c.h.b16 %v1031
        %v1044 = vpack.c.b16 %v1038, %v1036
        %v1045 = vpack.c.b16 %v1039, %v1037
        %v1046 = vpack.c.b16 %v1042, %v1040
        %v1047 = vpack.c.b16 %v1043, %v1041
        %v1053 = vsel %vm784, %v1025, 0
        %v1056 = vsel %vm784, %v1026, 0
        %1058 = vmatprep.subr.bf16.mxu0 %v1045
        %1059 = vmatpush1.bf16.msra.mxu0 %v1044
        %1060 = vmatprep.subr.bf16.mxu0 %v1047
        %1061 = vmatpush1.bf16.msra.mxu0 %v1046
        %1062 = vmatprep.subr.bf16.mxu0 0
        %1063 = vmatpush1.bf16.msra.mxu0 0
        %1064 = vmatprep.subr.bf16.mxu0 0
        %1065 = vmatpush1.bf16.msra.mxu0 0
        %1066 = vmatprep.subr.bf16.mxu0 0
        %1067 = vmatpush1.bf16.msra.mxu0 0
        %1068 = vmatprep.subr.bf16.mxu0 0
        %1069 = vmatpush1.bf16.msra.mxu0 0
        %1070 = vmatprep.subr.bf16.mxu0 0
        %1071 = vmatpush1.bf16.msra.mxu0 0
        %1072 = vmatprep.subr.bf16.mxu0 0
        %1073 = vmatpush1.bf16.msra.mxu0 0
        %1074 = vmatprep.subr.bf16.mxu0 0
        %1075 = vmatpush1.bf16.msra.mxu0 0
        %1076 = vmatprep.subr.bf16.mxu0 0
        %1077 = vmatpush1.bf16.msra.mxu0 0
        %1078 = vmatprep.subr.bf16.mxu0 0
        %1079 = vmatpush1.bf16.msra.mxu0 0
        %1080 = vmatprep.subr.bf16.mxu0 0
        %1081 = vmatpush1.bf16.msra.mxu0 0
        %1082 = vmatprep.subr.bf16.mxu0 0
        %1083 = vmatpush1.bf16.msra.mxu0 0
        %1084 = vmatprep.subr.bf16.mxu0 0
        %1085 = vmatpush1.bf16.msra.mxu0 0
        %1086 = vmatprep.subr.bf16.mxu0 0
        %1087 = vmatpush1.bf16.msra.mxu0 0
        %1088 = vmatprep.subr.bf16.mxu0 0
        %1089 = vmatpush1.bf16.msra.mxu0 0
        %1090 = vmatprep.mubr.bf16.mxu0 0
        %1091 = vmatmul.mubr.bf16.gmra.mrb[0].mxu0 %v1053
        %v1092 = vpop.f32.mrb[0].mxu0
        %v1093 = vadd.f32 0.0, %v1092
        %v1094 = vpop.f32.mrb[0].mxu0
        %v1095 = vadd.f32 0.0, %v1094
        %v1096 = vpop.f32.mrb[0].mxu0
        %v1097 = vadd.f32 0.0, %v1096
        %v1098 = vpop.f32.mrb[0].mxu0
        %v1099 = vadd.f32 0.0, %v1098
        %1100 = vmatprep.mubr.bf16.mxu0 0
        %1101 = vmatmul.mubr.bf16.gmra.mrb[0].mxu0 %v1056
        %v1102 = vpop.f32.mrb[0].mxu0
        %v1103 = vadd.f32 0.0, %v1102
        %v1104 = vpop.f32.mrb[0].mxu0
        %v1105 = vadd.f32 0.0, %v1104
        %v1106 = vpop.f32.mrb[0].mxu0
        %v1107 = vadd.f32 0.0, %v1106
        %v1108 = vpop.f32.mrb[0].mxu0
        %v1109 = vadd.f32 0.0, %v1108
        %1110 = vdwg.mxu0
        %v1111 = vadd.f32 %v1013, %v1093
        %v1112 = vadd.f32 %v1014, %v1095
        %v1113 = vadd.f32 %v1015, %v1097
        %v1114 = vadd.f32 %v1016, %v1099
        %v1115 = vadd.f32 %v1017, %v1103
        %v1116 = vadd.f32 %v1018, %v1105
        %v1117 = vadd.f32 %v1019, %v1107
        %v1118 = vadd.f32 %v1020, %v1109
        %v1119 = vld [vmem:[%s741 + $0x4] sm:$0xff]
        %v1120 = vld [vmem:[%s741 + $0xc] sm:$0xff]
        %v1121 = vld [vmem:[%s741 + $0x14] sm:$0xff]
        %v1122 = vld [vmem:[%s741 + $0x1c] sm:$0xf]
        %v1123 = vpack.c.bf16 %v1120, %v1119
        %v1124 = vpack.c.bf16 %v1122, %v1121
        %s1125 = scalar_lea.vmem [#allocation2], 128
        %v1126 = vld [vmem:[%s1125] sm:$0xff]
        %v1127 = vld [vmem:[%s1125 + $0x8] sm:$0xff]
        %v1128 = vld [vmem:[%s1125 + $0x10] sm:$0xff]
        %v1129 = vld [vmem:[%s1125 + $0x18] sm:$0xff]
        %v1134 = vunpack.c.l.b16 %v1126
        %v1135 = vunpack.c.h.b16 %v1126
        %v1136 = vunpack.c.l.b16 %v1127
        %v1137 = vunpack.c.h.b16 %v1127
        %v1138 = vunpack.c.l.b16 %v1128
        %v1139 = vunpack.c.h.b16 %v1128
        %v1140 = vunpack.c.l.b16 %v1129
        %v1141 = vunpack.c.h.b16 %v1129
        %v1142 = vpack.c.b16 %v1136, %v1134
        %v1143 = vpack.c.b16 %v1137, %v1135
        %v1144 = vpack.c.b16 %v1140, %v1138
        %v1145 = vpack.c.b16 %v1141, %v1139
        %v1151 = vsel %vm784, %v1123, 0
        %v1154 = vsel %vm784, %v1124, 0
        %1156 = vmatprep.subr.bf16.mxu0 %v1143
        %1157 = vmatpush1.bf16.msra.mxu0 %v1142
        %1158 = vmatprep.subr.bf16.mxu0 %v1145
        %1159 = vmatpush1.bf16.msra.mxu0 %v1144
        %1160 = vmatprep.subr.bf16.mxu0 0
        %1161 = vmatpush1.bf16.msra.mxu0 0
        %1162 = vmatprep.subr.bf16.mxu0 0
        %1163 = vmatpush1.bf16.msra.mxu0 0
        %1164 = vmatprep.subr.bf16.mxu0 0
        %1165 = vmatpush1.bf16.msra.mxu0 0
        %1166 = vmatprep.subr.bf16.mxu0 0
        %1167 = vmatpush1.bf16.msra.mxu0 0
        %1168 = vmatprep.subr.bf16.mxu0 0
        %1169 = vmatpush1.bf16.msra.mxu0 0
        %1170 = vmatprep.subr.bf16.mxu0 0
        %1171 = vmatpush1.bf16.msra.mxu0 0
        %1172 = vmatprep.subr.bf16.mxu0 0
        %1173 = vmatpush1.bf16.msra.mxu0 0
        %1174 = vmatprep.subr.bf16.mxu0 0
        %1175 = vmatpush1.bf16.msra.mxu0 0
        %1176 = vmatprep.subr.bf16.mxu0 0
        %1177 = vmatpush1.bf16.msra.mxu0 0
        %1178 = vmatprep.subr.bf16.mxu0 0
        %1179 = vmatpush1.bf16.msra.mxu0 0
        %1180 = vmatprep.subr.bf16.mxu0 0
        %1181 = vmatpush1.bf16.msra.mxu0 0
        %1182 = vmatprep.subr.bf16.mxu0 0
        %1183 = vmatpush1.bf16.msra.mxu0 0
        %1184 = vmatprep.subr.bf16.mxu0 0
        %1185 = vmatpush1.bf16.msra.mxu0 0
        %1186 = vmatprep.subr.bf16.mxu0 0
        %1187 = vmatpush1.bf16.msra.mxu0 0
        %1188 = vmatprep.mubr.bf16.mxu0 0
        %1189 = vmatmul.mubr.bf16.gmra.mrb[0].mxu0 %v1151
        %v1190 = vpop.f32.mrb[0].mxu0
        %v1191 = vadd.f32 0.0, %v1190
        %v1192 = vpop.f32.mrb[0].mxu0
        %v1193 = vadd.f32 0.0, %v1192
        %v1194 = vpop.f32.mrb[0].mxu0
        %v1195 = vadd.f32 0.0, %v1194
        %v1196 = vpop.f32.mrb[0].mxu0
        %v1197 = vadd.f32 0.0, %v1196
        %1198 = vmatprep.mubr.bf16.mxu0 0
        %1199 = vmatmul.mubr.bf16.gmra.mrb[0].mxu0 %v1154
        %v1200 = vpop.f32.mrb[0].mxu0
        %v1201 = vadd.f32 0.0, %v1200
        %v1202 = vpop.f32.mrb[0].mxu0
        %v1203 = vadd.f32 0.0, %v1202
        %v1204 = vpop.f32.mrb[0].mxu0
        %v1205 = vadd.f32 0.0, %v1204
        %v1206 = vpop.f32.mrb[0].mxu0
        %v1207 = vadd.f32 0.0, %v1206
        %1208 = vdwg.mxu0
        %v1209 = vadd.f32 %v1111, %v1191
        %v1210 = vadd.f32 %v1112, %v1193
        %v1211 = vadd.f32 %v1113, %v1195
        %v1212 = vadd.f32 %v1114, %v1197
        %v1213 = vadd.f32 %v1115, %v1201
        %v1214 = vadd.f32 %v1116, %v1203
        %v1215 = vadd.f32 %v1117, %v1205
        %v1216 = vadd.f32 %v1118, %v1207
        %v1217 = vld [vmem:[#allocation5] sm:$0xff]
        %v1218 = vld [vmem:[#allocation5 + $0x8] sm:$0x3f]
        %vm1219 = vcmask 228352
        %v1221 = vsel %vm1219, %v1217, 0
        %v1224 = vsel %vm1219, %v1218, 0
        %vm1226 = vcmask 1043456
        %v1228 = vsel %vm1226, %v1215, 0
        %v1231 = vsel %vm1226, %v1216, 0
        %1233 = vmatprep.subr.mxu0 %v1210
        %1234 = vmatpush1.msra.mxu0 %v1209
        %1235 = vmatprep.subr.mxu0 %v1212
        %1236 = vmatpush1.msra.mxu0 %v1211
        %1237 = vmatprep.subr.mxu0 %v1214
        %1238 = vmatpush1.msra.mxu0 %v1213
        %1239 = vmatprep.subr.mxu0 %v1231
        %1240 = vmatpush1.msra.mxu0 %v1228
        %1241 = vmatprep.subr.mxu0 0.0
        %1242 = vmatpush1.msra.mxu0 0.0
        %1243 = vmatprep.subr.mxu0 0.0
        %1244 = vmatpush1.msra.mxu0 0.0
        %1245 = vmatprep.subr.mxu0 0.0
        %1246 = vmatpush1.msra.mxu0 0.0
        %1247 = vmatprep.subr.mxu0 0.0
        %1248 = vmatpush1.msra.mxu0 0.0
        %1249 = vmatprep.subr.mxu0 0.0
        %1250 = vmatpush1.msra.mxu0 0.0
        %1251 = vmatprep.subr.mxu0 0.0
        %1252 = vmatpush1.msra.mxu0 0.0
        %1253 = vmatprep.subr.mxu0 0.0
        %1254 = vmatpush1.msra.mxu0 0.0
        %1255 = vmatprep.subr.mxu0 0.0
        %1256 = vmatpush1.msra.mxu0 0.0
        %1257 = vmatprep.subr.mxu0 0.0
        %1258 = vmatpush1.msra.mxu0 0.0
        %1259 = vmatprep.subr.mxu0 0.0
        %1260 = vmatpush1.msra.mxu0 0.0
        %1261 = vmatprep.subr.mxu0 0.0
        %1262 = vmatpush1.msra.mxu0 0.0
        %1263 = vmatprep.subr.mxu0 0.0
        %1264 = vmatpush1.msra.mxu0 0.0
        %1265 = vmatprep.subr.mxu0 0.0
        %1266 = vmatpush1.msra.mxu0 0.0
        %1267 = vmatprep.subr.mxu0 0.0
        %1268 = vmatpush1.msra.mxu0 0.0
        %1269 = vmatprep.subr.mxu0 0.0
        %1270 = vmatpush1.msra.mxu0 0.0
        %1271 = vmatprep.subr.mxu0 0.0
        %1272 = vmatpush1.msra.mxu0 0.0
        %1273 = vmatprep.subr.mxu0 0.0
        %1274 = vmatpush1.msra.mxu0 0.0
        %1275 = vmatprep.subr.mxu0 0.0
        %1276 = vmatpush1.msra.mxu0 0.0
        %1277 = vmatprep.subr.mxu0 0.0
        %1278 = vmatpush1.msra.mxu0 0.0
        %1279 = vmatprep.subr.mxu0 0.0
        %1280 = vmatpush1.msra.mxu0 0.0
        %1281 = vmatprep.subr.mxu0 0.0
        %1282 = vmatpush1.msra.mxu0 0.0
        %1283 = vmatprep.subr.mxu0 0.0
        %1284 = vmatpush1.msra.mxu0 0.0
        %1285 = vmatprep.subr.mxu0 0.0
        %1286 = vmatpush1.msra.mxu0 0.0
        %1287 = vmatprep.subr.mxu0 0.0
        %1288 = vmatpush1.msra.mxu0 0.0
        %1289 = vmatprep.subr.mxu0 0.0
        %1290 = vmatpush1.msra.mxu0 0.0
        %1291 = vmatprep.subr.mxu0 0.0
        %1292 = vmatpush1.msra.mxu0 0.0
        %1293 = vmatprep.subr.mxu0 0.0
        %1294 = vmatpush1.msra.mxu0 0.0
        %1295 = vmatprep.subr.mxu0 0.0
        %1296 = vmatpush1.msra.mxu0 0.0
        %1297 = vmatprep.mubr.f32.mxu0 0.0
        %1298 = vmatmul.mubr.f32.gmra.mrb[0].mxu0 %v1221
        %v1299 = vpop.f32.mrb[0].mxu0
        %v1300 = vadd.f32 0.0, %v1299
        %v1301 = vpop.f32.mrb[0].mxu0
        %v1302 = vadd.f32 0.0, %v1301
        %1303 = vmatprep.mubr.f32.mxu0 0.0
        %1304 = vmatmul.mubr.f32.gmra.mrb[0].mxu0 %v1224
        %v1305 = vpop.f32.mrb[0].mxu0
        %v1306 = vadd.f32 0.0, %v1305
        %v1307 = vpop.f32.mrb[0].mxu0
        %v1308 = vadd.f32 0.0, %v1307
        %1309 = vdwg.mxu0
        %v1310 = vld [vmem:[#allocation7] sm:$0xff]
        %v1311 = vld [vmem:[#allocation7 + $0x8] sm:$0x3f]
        %v1313 = vsel %vm1219, %v1310, 0
        %v1316 = vsel %vm1219, %v1311, 0
        %1318 = vmatprep.subr.mxu0 %v1210
        %1319 = vmatpush1.msra.mxu0 %v1209
        %1320 = vmatprep.subr.mxu0 %v1212
        %1321 = vmatpush1.msra.mxu0 %v1211
        %1322 = vmatprep.subr.mxu0 %v1214
        %1323 = vmatpush1.msra.mxu0 %v1213
        %1324 = vmatprep.subr.mxu0 %v1231
        %1325 = vmatpush1.msra.mxu0 %v1228
        %1326 = vmatprep.subr.mxu0 0.0
        %1327 = vmatpush1.msra.mxu0 0.0
        %1328 = vmatprep.subr.mxu0 0.0
        %1329 = vmatpush1.msra.mxu0 0.0
        %1330 = vmatprep.subr.mxu0 0.0
        %1331 = vmatpush1.msra.mxu0 0.0
        %1332 = vmatprep.subr.mxu0 0.0
        %1333 = vmatpush1.msra.mxu0 0.0
        %1334 = vmatprep.subr.mxu0 0.0
        %1335 = vmatpush1.msra.mxu0 0.0
        %1336 = vmatprep.subr.mxu0 0.0
        %1337 = vmatpush1.msra.mxu0 0.0
        %1338 = vmatprep.subr.mxu0 0.0
        %1339 = vmatpush1.msra.mxu0 0.0
        %1340 = vmatprep.subr.mxu0 0.0
        %1341 = vmatpush1.msra.mxu0 0.0
        %1342 = vmatprep.subr.mxu0 0.0
        %1343 = vmatpush1.msra.mxu0 0.0
        %1344 = vmatprep.subr.mxu0 0.0
        %1345 = vmatpush1.msra.mxu0 0.0
        %1346 = vmatprep.subr.mxu0 0.0
        %1347 = vmatpush1.msra.mxu0 0.0
        %1348 = vmatprep.subr.mxu0 0.0
        %1349 = vmatpush1.msra.mxu0 0.0
        %1350 = vmatprep.subr.mxu0 0.0
        %1351 = vmatpush1.msra.mxu0 0.0
        %1352 = vmatprep.subr.mxu0 0.0
        %1353 = vmatpush1.msra.mxu0 0.0
        %1354 = vmatprep.subr.mxu0 0.0
        %1355 = vmatpush1.msra.mxu0 0.0
        %1356 = vmatprep.subr.mxu0 0.0
        %1357 = vmatpush1.msra.mxu0 0.0
        %1358 = vmatprep.subr.mxu0 0.0
        %1359 = vmatpush1.msra.mxu0 0.0
        %1360 = vmatprep.subr.mxu0 0.0
        %1361 = vmatpush1.msra.mxu0 0.0
        %1362 = vmatprep.subr.mxu0 0.0
        %1363 = vmatpush1.msra.mxu0 0.0
        %1364 = vmatprep.subr.mxu0 0.0
        %1365 = vmatpush1.msra.mxu0 0.0
        %1366 = vmatprep.subr.mxu0 0.0
        %1367 = vmatpush1.msra.mxu0 0.0
        %1368 = vmatprep.subr.mxu0 0.0
        %1369 = vmatpush1.msra.mxu0 0.0
        %1370 = vmatprep.subr.mxu0 0.0
        %1371 = vmatpush1.msra.mxu0 0.0
        %1372 = vmatprep.subr.mxu0 0.0
        %1373 = vmatpush1.msra.mxu0 0.0
        %1374 = vmatprep.subr.mxu0 0.0
        %1375 = vmatpush1.msra.mxu0 0.0
        %1376 = vmatprep.subr.mxu0 0.0
        %1377 = vmatpush1.msra.mxu0 0.0
        %1378 = vmatprep.subr.mxu0 0.0
        %1379 = vmatpush1.msra.mxu0 0.0
        %1380 = vmatprep.subr.mxu0 0.0
        %1381 = vmatpush1.msra.mxu0 0.0
        %1382 = vmatprep.mubr.f32.mxu0 0.0
        %1383 = vmatmul.mubr.f32.gmra.mrb[0].mxu0 %v1313
        %v1384 = vpop.f32.mrb[0].mxu0
        %v1385 = vadd.f32 0.0, %v1384
        %v1386 = vpop.f32.mrb[0].mxu0
        %v1387 = vadd.f32 0.0, %v1386
        %1388 = vmatprep.mubr.f32.mxu0 0.0
        %1389 = vmatmul.mubr.f32.gmra.mrb[0].mxu0 %v1316
        %v1390 = vpop.f32.mrb[0].mxu0
        %v1391 = vadd.f32 0.0, %v1390
        %v1392 = vpop.f32.mrb[0].mxu0
        %v1393 = vadd.f32 0.0, %v1392
        %1394 = vdwg.mxu0
        %v1395 = vmax.f32 %v1300, %v1385
        %v1396 = vmax.f32 %v1302, %v1387
        %v1397 = vmax.f32 %v1306, %v1391
        %v1398 = vmax.f32 %v1308, %v1393
        %v1399 = vld [vmem:[#allocation8] sm:$0xff]
        %v1400 = vld [vmem:[#allocation8 + $0x8] sm:$0xff]
        %v1401 = vld [vmem:[#allocation8 + $0x10] sm:$0xff]
        %v1402 = vld [vmem:[#allocation8 + $0x18] sm:$0xff]
        %v1403 = vld [vmem:[#allocation8 + $0x20] sm:$0xff]
        %v1404 = vld [vmem:[#allocation8 + $0x28] sm:$0xff]
        %v1405 = vld [vmem:[#allocation8 + $0x30] sm:$0xff]
        %v1406 = vld [vmem:[#allocation8 + $0x38] sm:$0xff]
        %v1407 = vld [vmem:[#allocation8 + $0x40] sm:$0xff]
        %v1408 = vld [vmem:[#allocation8 + $0x48] sm:$0xff]
        %v1409 = vld [vmem:[#allocation8 + $0x50] sm:$0xff]
        %v1410 = vld [vmem:[#allocation8 + $0x58] sm:$0xff]
        %v1411 = vld [vmem:[#allocation8 + $0x60] sm:$0xff]
        %v1412 = vld [vmem:[#allocation8 + $0x68] sm:$0xff]
        %v1413 = vld [vmem:[#allocation8 + $0x70] sm:$0xff]
        %v1414 = vld [vmem:[#allocation8 + $0x78] sm:$0xff]
        %v1415 = vld [vmem:[#allocation8 + $0x80] sm:$0xff]
        %v1416 = vld [vmem:[#allocation8 + $0x88] sm:$0xff]
        %v1417 = vld [vmem:[#allocation8 + $0x90] sm:$0xff]
        %v1418 = vld [vmem:[#allocation8 + $0x98] sm:$0xff]
        %v1419 = vld [vmem:[#allocation8 + $0xa0] sm:$0xff]
        %vm1420 = vcmask 326656
        %v1422 = vsel %vm1420, %v1396, 0
        %v1425 = vsel %vm1420, %v1398, 0
        %1427 = vmatprep.subr.mxu0 0.0
        %1428 = vmatpush1.msra.mxu0 %v1399
        %1429 = vmatprep.subr.mxu0 0.0
        %1430 = vmatpush1.msra.mxu0 %v1400
        %1431 = vmatprep.subr.mxu0 0.0
        %1432 = vmatpush1.msra.mxu0 %v1401
        %1433 = vmatprep.subr.mxu0 0.0
        %1434 = vmatpush1.msra.mxu0 %v1402
        %1435 = vmatprep.subr.mxu0 0.0
        %1436 = vmatpush1.msra.mxu0 %v1403
        %1437 = vmatprep.subr.mxu0 0.0
        %1438 = vmatpush1.msra.mxu0 %v1404
        %1439 = vmatprep.subr.mxu0 0.0
        %1440 = vmatpush1.msra.mxu0 %v1405
        %1441 = vmatprep.subr.mxu0 0.0
        %1442 = vmatpush1.msra.mxu0 %v1406
        %1443 = vmatprep.subr.mxu0 0.0
        %1444 = vmatpush1.msra.mxu0 %v1407
        %1445 = vmatprep.subr.mxu0 0.0
        %1446 = vmatpush1.msra.mxu0 %v1408
        %1447 = vmatprep.subr.mxu0 0.0
        %1448 = vmatpush1.msra.mxu0 %v1409
        %1449 = vmatprep.subr.mxu0 0.0
        %1450 = vmatpush1.msra.mxu0 %v1410
        %1451 = vmatprep.subr.mxu0 0.0
        %1452 = vmatpush1.msra.mxu0 %v1411
        %1453 = vmatprep.subr.mxu0 0.0
        %1454 = vmatpush1.msra.mxu0 %v1412
        %1455 = vmatprep.subr.mxu0 0.0
        %1456 = vmatpush1.msra.mxu0 %v1413
        %1457 = vmatprep.subr.mxu0 0.0
        %1458 = vmatpush1.msra.mxu0 %v1414
        %1459 = vmatprep.subr.mxu0 0.0
        %1460 = vmatpush1.msra.mxu0 %v1415
        %1461 = vmatprep.subr.mxu0 0.0
        %1462 = vmatpush1.msra.mxu0 %v1416
        %1463 = vmatprep.subr.mxu0 0.0
        %1464 = vmatpush1.msra.mxu0 %v1417
        %1465 = vmatprep.subr.mxu0 0.0
        %1466 = vmatpush1.msra.mxu0 %v1418
        %1467 = vmatprep.subr.mxu0 0.0
        %1468 = vmatpush1.msra.mxu0 %v1419
        %1469 = vmatprep.subr.mxu0 0.0
        %1470 = vmatpush1.msra.mxu0 0.0
        %1471 = vmatprep.subr.mxu0 0.0
        %1472 = vmatpush1.msra.mxu0 0.0
        %1473 = vmatprep.subr.mxu0 0.0
        %1474 = vmatpush1.msra.mxu0 0.0
        %1475 = vmatprep.subr.mxu0 0.0
        %1476 = vmatpush1.msra.mxu0 0.0
        %1477 = vmatprep.subr.mxu0 0.0
        %1478 = vmatpush1.msra.mxu0 0.0
        %1479 = vmatprep.subr.mxu0 0.0
        %1480 = vmatpush1.msra.mxu0 0.0
        %1481 = vmatprep.subr.mxu0 0.0
        %1482 = vmatpush1.msra.mxu0 0.0
        %1483 = vmatprep.subr.mxu0 0.0
        %1484 = vmatpush1.msra.mxu0 0.0
        %1485 = vmatprep.subr.mxu0 0.0
        %1486 = vmatpush1.msra.mxu0 0.0
        %1487 = vmatprep.subr.mxu0 0.0
        %1488 = vmatpush1.msra.mxu0 0.0
        %1489 = vmatprep.subr.mxu0 0.0
        %1490 = vmatpush1.msra.mxu0 0.0
        %1491 = vmatprep.mubr.f32.mxu0 %v1422
        %1492 = vmatmul.mubr.f32.gmra.mrb[0].mxu0 %v1395
        %v1493 = vpop.f32.mrb[0].mxu0
        %v1494 = vadd.f32 0.0, %v1493
        %v1495 = vpop.f32.mrb[0].mxu0
        %1496 = vmatprep.mubr.f32.mxu0 %v1425
        %1497 = vmatmul.mubr.f32.gmra.mrb[0].mxu0 %v1397
        %v1498 = vpop.f32.mrb[0].mxu0
        %v1499 = vadd.f32 0.0, %v1498
        %v1500 = vpop.f32.mrb[0].mxu0
        %1501 = vdwg.mxu0
        %v1502 = vld [vmem:[#allocation10] sm:$0xff]
        %v1503 = vld [vmem:[#allocation10 + $0x8] sm:$0xff]
        %v1504 = vld [vmem:[#allocation10 + $0x10] sm:$0xff]
        %v1505 = vld [vmem:[#allocation10 + $0x18] sm:$0xff]
        %v1506 = vld [vmem:[#allocation10 + $0x20] sm:$0xff]
        %v1507 = vld [vmem:[#allocation10 + $0x28] sm:$0xff]
        %v1508 = vld [vmem:[#allocation10 + $0x30] sm:$0xff]
        %v1509 = vld [vmem:[#allocation10 + $0x38] sm:$0xff]
        %v1510 = vld [vmem:[#allocation10 + $0x40] sm:$0xff]
        %v1511 = vld [vmem:[#allocation10 + $0x48] sm:$0xff]
        %v1512 = vld [vmem:[#allocation10 + $0x50] sm:$0xff]
        %v1513 = vld [vmem:[#allocation10 + $0x58] sm:$0xff]
        %v1514 = vld [vmem:[#allocation10 + $0x60] sm:$0xff]
        %v1515 = vld [vmem:[#allocation10 + $0x68] sm:$0xff]
        %v1516 = vld [vmem:[#allocation10 + $0x70] sm:$0xff]
        %v1517 = vld [vmem:[#allocation10 + $0x78] sm:$0xff]
        %v1518 = vld [vmem:[#allocation10 + $0x80] sm:$0xff]
        %v1519 = vld [vmem:[#allocation10 + $0x88] sm:$0xff]
        %v1520 = vld [vmem:[#allocation10 + $0x90] sm:$0xff]
        %v1521 = vld [vmem:[#allocation10 + $0x98] sm:$0xff]
        %v1522 = vld [vmem:[#allocation10 + $0xa0] sm:$0xff]
        %1523 = vmatprep.subr.mxu0 0.0
        %1524 = vmatpush1.msra.mxu0 %v1502
        %1525 = vmatprep.subr.mxu0 0.0
        %1526 = vmatpush1.msra.mxu0 %v1503
        %1527 = vmatprep.subr.mxu0 0.0
        %1528 = vmatpush1.msra.mxu0 %v1504
        %1529 = vmatprep.subr.mxu0 0.0
        %1530 = vmatpush1.msra.mxu0 %v1505
        %1531 = vmatprep.subr.mxu0 0.0
        %1532 = vmatpush1.msra.mxu0 %v1506
        %1533 = vmatprep.subr.mxu0 0.0
        %1534 = vmatpush1.msra.mxu0 %v1507
        %1535 = vmatprep.subr.mxu0 0.0
        %1536 = vmatpush1.msra.mxu0 %v1508
        %1537 = vmatprep.subr.mxu0 0.0
        %1538 = vmatpush1.msra.mxu0 %v1509
        %1539 = vmatprep.subr.mxu0 0.0
        %1540 = vmatpush1.msra.mxu0 %v1510
        %1541 = vmatprep.subr.mxu0 0.0
        %1542 = vmatpush1.msra.mxu0 %v1511
        %1543 = vmatprep.subr.mxu0 0.0
        %1544 = vmatpush1.msra.mxu0 %v1512
        %1545 = vmatprep.subr.mxu0 0.0
        %1546 = vmatpush1.msra.mxu0 %v1513
        %1547 = vmatprep.subr.mxu0 0.0
        %1548 = vmatpush1.msra.mxu0 %v1514
        %1549 = vmatprep.subr.mxu0 0.0
        %1550 = vmatpush1.msra.mxu0 %v1515
        %1551 = vmatprep.subr.mxu0 0.0
        %1552 = vmatpush1.msra.mxu0 %v1516
        %1553 = vmatprep.subr.mxu0 0.0
        %1554 = vmatpush1.msra.mxu0 %v1517
        %1555 = vmatprep.subr.mxu0 0.0
        %1556 = vmatpush1.msra.mxu0 %v1518
        %1557 = vmatprep.subr.mxu0 0.0
        %1558 = vmatpush1.msra.mxu0 %v1519
        %1559 = vmatprep.subr.mxu0 0.0
        %1560 = vmatpush1.msra.mxu0 %v1520
        %1561 = vmatprep.subr.mxu0 0.0
        %1562 = vmatpush1.msra.mxu0 %v1521
        %1563 = vmatprep.subr.mxu0 0.0
        %1564 = vmatpush1.msra.mxu0 %v1522
        %1565 = vmatprep.subr.mxu0 0.0
        %1566 = vmatpush1.msra.mxu0 0.0
        %1567 = vmatprep.subr.mxu0 0.0
        %1568 = vmatpush1.msra.mxu0 0.0
        %1569 = vmatprep.subr.mxu0 0.0
        %1570 = vmatpush1.msra.mxu0 0.0
        %1571 = vmatprep.subr.mxu0 0.0
        %1572 = vmatpush1.msra.mxu0 0.0
        %1573 = vmatprep.subr.mxu0 0.0
        %1574 = vmatpush1.msra.mxu0 0.0
        %1575 = vmatprep.subr.mxu0 0.0
        %1576 = vmatpush1.msra.mxu0 0.0
        %1577 = vmatprep.subr.mxu0 0.0
        %1578 = vmatpush1.msra.mxu0 0.0
        %1579 = vmatprep.subr.mxu0 0.0
        %1580 = vmatpush1.msra.mxu0 0.0
        %1581 = vmatprep.subr.mxu0 0.0
        %1582 = vmatpush1.msra.mxu0 0.0
        %1583 = vmatprep.subr.mxu0 0.0
        %1584 = vmatpush1.msra.mxu0 0.0
        %1585 = vmatprep.subr.mxu0 0.0
        %1586 = vmatpush1.msra.mxu0 0.0
        %1587 = vmatprep.mubr.f32.mxu0 %v1422
        %1588 = vmatmul.mubr.f32.gmra.mrb[0].mxu0 %v1395
        %v1589 = vpop.f32.mrb[0].mxu0
        %v1590 = vadd.f32 0.0, %v1589
        %v1591 = vpop.f32.mrb[0].mxu0
        %1592 = vmatprep.mubr.f32.mxu0 %v1425
        %1593 = vmatmul.mubr.f32.gmra.mrb[0].mxu0 %v1397
        %v1594 = vpop.f32.mrb[0].mxu0
        %v1595 = vadd.f32 0.0, %v1594
        %v1596 = vpop.f32.mrb[0].mxu0
        %1597 = vdwg.mxu0
        %v1598 = vmax.f32 %v1494, %v1590
        %v1599 = vmax.f32 %v1499, %v1595
        %v1600 = vld [vmem:[%s2] sm:$0x1]
        %v1602 = vlaneseq
        %v1603 = vshrl.u32 %v1602, 7
        %v1604 = vsub.s32 0, %v1603
        %v1605 = vrot.slane %v1600, %v1604
        %v1607 = vadd.f32 %v1598, %v1605
        %v1608 = vadd.f32 %v1599, %v1605
        %v1609 = vmax.f32 %v1607, 0.0
        %v1610 = vmax.f32 %v1608, 0.0
        %v1611 = vpack.c.bf16 %v1610, %v1609
        %v1612 = vld [vmem:[%s7] sm:$0xff]
        %v1613 = vld [vmem:[%s7 + $0x8] sm:$0x77]
        %s1614 = scalar_lea.vmem %s7, 16
        %v1615 = vld [vmem:[%s1614] sm:$0xff]
        %v1616 = vld [vmem:[%s1614 + $0x8] sm:$0x77]
        %v1618 = vshrl.u32 %v1611, 16
        %v1620 = vshll.u32 %v1611, 16
        %v1622 = vrot.slane %v1620, 1
        %v1623 = vor.u32 %v1618, %v1622
        %v1626 = vunpack.c.l.b16 %v1615
        %v1627 = vunpack.c.h.b16 %v1615
        %v1628 = vunpack.c.l.b16 %v1616
        %v1629 = vunpack.c.h.b16 %v1616
        %v1630 = vpack.c.b16 %v1628, %v1626
        %v1631 = vpack.c.b16 %v1629, %v1627
        %vm1632 = vcmask 113664
        %v1634 = vsel %vm1632, %v1623, 0
        %vm1636 = vcmask 1046528
        %v1638 = vsel %vm1636, %v1630, 0
        %v1641 = vsel %vm1636, %v1631, 0
        %1643 = vmatprep.subr.bf16.mxu0 %v1641
        %1644 = vmatpush1.bf16.msra.mxu0 %v1638
        %1645 = vmatprep.subr.bf16.mxu0 0
        %1646 = vmatpush1.bf16.msra.mxu0 0
        %1647 = vmatprep.subr.bf16.mxu0 0
        %1648 = vmatpush1.bf16.msra.mxu0 0
        %1649 = vmatprep.subr.bf16.mxu0 0
        %1650 = vmatpush1.bf16.msra.mxu0 0
        %1651 = vmatprep.subr.bf16.mxu0 0
        %1652 = vmatpush1.bf16.msra.mxu0 0
        %1653 = vmatprep.subr.bf16.mxu0 0
        %1654 = vmatpush1.bf16.msra.mxu0 0
        %1655 = vmatprep.subr.bf16.mxu0 0
        %1656 = vmatpush1.bf16.msra.mxu0 0
        %1657 = vmatprep.subr.bf16.mxu0 0
        %1658 = vmatpush1.bf16.msra.mxu0 0
        %1659 = vmatprep.subr.bf16.mxu0 0
        %1660 = vmatpush1.bf16.msra.mxu0 0
        %1661 = vmatprep.subr.bf16.mxu0 0
        %1662 = vmatpush1.bf16.msra.mxu0 0
        %1663 = vmatprep.subr.bf16.mxu0 0
        %1664 = vmatpush1.bf16.msra.mxu0 0
        %1665 = vmatprep.subr.bf16.mxu0 0
        %1666 = vmatpush1.bf16.msra.mxu0 0
        %1667 = vmatprep.subr.bf16.mxu0 0
        %1668 = vmatpush1.bf16.msra.mxu0 0
        %1669 = vmatprep.subr.bf16.mxu0 0
        %1670 = vmatpush1.bf16.msra.mxu0 0
        %1671 = vmatprep.subr.bf16.mxu0 0
        %1672 = vmatpush1.bf16.msra.mxu0 0
        %1673 = vmatprep.subr.bf16.mxu0 0
        %1674 = vmatpush1.bf16.msra.mxu0 0
        %1675 = vmatprep.mubr.bf16.mxu0 0
        %1676 = vmatmul.mubr.bf16.gmra.mrb[0].mxu0 %v1634
        %v1677 = vpop.f32.mrb[0].mxu0
        %v1678 = vadd.f32 0.0, %v1677
        %v1679 = vpop.f32.mrb[0].mxu0
        %v1680 = vadd.f32 0.0, %v1679
        %v1681 = vpop.f32.mrb[0].mxu0
        %v1682 = vadd.f32 0.0, %v1681
        %v1683 = vpop.f32.mrb[0].mxu0
        %v1684 = vadd.f32 0.0, %v1683
        %1685 = vdwg.mxu0
        %v1688 = vunpack.c.l.b16 %v1612
        %v1689 = vunpack.c.h.b16 %v1612
        %v1690 = vunpack.c.l.b16 %v1613
        %v1691 = vunpack.c.h.b16 %v1613
        %v1692 = vpack.c.b16 %v1690, %v1688
        %v1693 = vpack.c.b16 %v1691, %v1689
        %v1694 = vsel %vm1632, %v1611, 0
        %v1697 = vsel %vm1636, %v1692, 0
        %v1700 = vsel %vm1636, %v1693, 0
        %1702 = vmatprep.subr.bf16.mxu0 %v1700
        %1703 = vmatpush1.bf16.msra.mxu0 %v1697
        %1704 = vmatprep.subr.bf16.mxu0 0
        %1705 = vmatpush1.bf16.msra.mxu0 0
        %1706 = vmatprep.subr.bf16.mxu0 0
        %1707 = vmatpush1.bf16.msra.mxu0 0
        %1708 = vmatprep.subr.bf16.mxu0 0
        %1709 = vmatpush1.bf16.msra.mxu0 0
        %1710 = vmatprep.subr.bf16.mxu0 0
        %1711 = vmatpush1.bf16.msra.mxu0 0
        %1712 = vmatprep.subr.bf16.mxu0 0
        %1713 = vmatpush1.bf16.msra.mxu0 0
        %1714 = vmatprep.subr.bf16.mxu0 0
        %1715 = vmatpush1.bf16.msra.mxu0 0
        %1716 = vmatprep.subr.bf16.mxu0 0
        %1717 = vmatpush1.bf16.msra.mxu0 0
        %1718 = vmatprep.subr.bf16.mxu0 0
        %1719 = vmatpush1.bf16.msra.mxu0 0
        %1720 = vmatprep.subr.bf16.mxu0 0
        %1721 = vmatpush1.bf16.msra.mxu0 0
        %1722 = vmatprep.subr.bf16.mxu0 0
        %1723 = vmatpush1.bf16.msra.mxu0 0
        %1724 = vmatprep.subr.bf16.mxu0 0
        %1725 = vmatpush1.bf16.msra.mxu0 0
        %1726 = vmatprep.subr.bf16.mxu0 0
        %1727 = vmatpush1.bf16.msra.mxu0 0
        %1728 = vmatprep.subr.bf16.mxu0 0
        %1729 = vmatpush1.bf16.msra.mxu0 0
        %1730 = vmatprep.subr.bf16.mxu0 0
        %1731 = vmatpush1.bf16.msra.mxu0 0
        %1732 = vmatprep.subr.bf16.mxu0 0
        %1733 = vmatpush1.bf16.msra.mxu0 0
        %1734 = vmatprep.mubr.bf16.mxu0 0
        %1735 = vmatmul.mubr.bf16.gmra.mrb[0].mxu0 %v1694
        %v1736 = vpop.f32.mrb[0].mxu0
        %v1737 = vadd.f32 %v1678, %v1736
        %v1738 = vpop.f32.mrb[0].mxu0
        %v1739 = vadd.f32 %v1680, %v1738
        %v1740 = vpop.f32.mrb[0].mxu0
        %v1741 = vadd.f32 %v1682, %v1740
        %v1742 = vpop.f32.mrb[0].mxu0
        %v1743 = vadd.f32 %v1684, %v1742
        %1744 = vdwg.mxu0
        %s1745 = scalar_lea.vmem %s7, 32
        %v1746 = vld [vmem:[%s1745] sm:$0xff]
        %v1747 = vld [vmem:[%s1745 + $0x8] sm:$0x77]
        %v1749 = vrot.slane %v1611, 1
        %v1752 = vunpack.c.l.b16 %v1746
        %v1753 = vunpack.c.h.b16 %v1746
        %v1754 = vunpack.c.l.b16 %v1747
        %v1755 = vunpack.c.h.b16 %v1747
        %v1756 = vpack.c.b16 %v1754, %v1752
        %v1757 = vpack.c.b16 %v1755, %v1753
        %v1759 = vsel %vm1632, %v1749, 0
        %v1762 = vsel %vm1636, %v1756, 0
        %v1765 = vsel %vm1636, %v1757, 0
        %1767 = vmatprep.subr.bf16.mxu0 %v1765
        %1768 = vmatpush1.bf16.msra.mxu0 %v1762
        %1769 = vmatprep.subr.bf16.mxu0 0
        %1770 = vmatpush1.bf16.msra.mxu0 0
        %1771 = vmatprep.subr.bf16.mxu0 0
        %1772 = vmatpush1.bf16.msra.mxu0 0
        %1773 = vmatprep.subr.bf16.mxu0 0
        %1774 = vmatpush1.bf16.msra.mxu0 0
        %1775 = vmatprep.subr.bf16.mxu0 0
        %1776 = vmatpush1.bf16.msra.mxu0 0
        %1777 = vmatprep.subr.bf16.mxu0 0
        %1778 = vmatpush1.bf16.msra.mxu0 0
        %1779 = vmatprep.subr.bf16.mxu0 0
        %1780 = vmatpush1.bf16.msra.mxu0 0
        %1781 = vmatprep.subr.bf16.mxu0 0
        %1782 = vmatpush1.bf16.msra.mxu0 0
        %1783 = vmatprep.subr.bf16.mxu0 0
        %1784 = vmatpush1.bf16.msra.mxu0 0
        %1785 = vmatprep.subr.bf16.mxu0 0
        %1786 = vmatpush1.bf16.msra.mxu0 0
        %1787 = vmatprep.subr.bf16.mxu0 0
        %1788 = vmatpush1.bf16.msra.mxu0 0
        %1789 = vmatprep.subr.bf16.mxu0 0
        %1790 = vmatpush1.bf16.msra.mxu0 0
        %1791 = vmatprep.subr.bf16.mxu0 0
        %1792 = vmatpush1.bf16.msra.mxu0 0
        %1793 = vmatprep.subr.bf16.mxu0 0
        %1794 = vmatpush1.bf16.msra.mxu0 0
        %1795 = vmatprep.subr.bf16.mxu0 0
        %1796 = vmatpush1.bf16.msra.mxu0 0
        %1797 = vmatprep.subr.bf16.mxu0 0
        %1798 = vmatpush1.bf16.msra.mxu0 0
        %1799 = vmatprep.mubr.bf16.mxu0 0
        %1800 = vmatmul.mubr.bf16.gmra.mrb[0].mxu0 %v1759
        %v1801 = vpop.f32.mrb[0].mxu0
        %v1802 = vadd.f32 0.0, %v1801
        %v1803 = vpop.f32.mrb[0].mxu0
        %v1804 = vadd.f32 0.0, %v1803
        %v1805 = vpop.f32.mrb[0].mxu0
        %v1806 = vadd.f32 0.0, %v1805
        %v1807 = vpop.f32.mrb[0].mxu0
        %v1808 = vadd.f32 0.0, %v1807
        %1809 = vdwg.mxu0
        %v1810 = vadd.f32 %v1737, %v1802
        %v1811 = vadd.f32 %v1739, %v1804
        %v1812 = vadd.f32 %v1741, %v1806
        %v1813 = vadd.f32 %v1743, %v1808
        %s1814 = scalar_lea.vmem %s7, 48
        %v1815 = vld [vmem:[%s1814] sm:$0xff]
        %v1816 = vld [vmem:[%s1814 + $0x8] sm:$0x77]
        %v1817 = vrot.slane %v1618, 1
        %v1818 = vrot.slane %v1620, 2
        %v1819 = vor.u32 %v1817, %v1818
        %v1822 = vunpack.c.l.b16 %v1815
        %v1823 = vunpack.c.h.b16 %v1815
        %v1824 = vunpack.c.l.b16 %v1816
        %v1825 = vunpack.c.h.b16 %v1816
        %v1826 = vpack.c.b16 %v1824, %v1822
        %v1827 = vpack.c.b16 %v1825, %v1823
        %v1829 = vsel %vm1632, %v1819, 0
        %v1832 = vsel %vm1636, %v1826, 0
        %v1835 = vsel %vm1636, %v1827, 0
        %1837 = vmatprep.subr.bf16.mxu0 %v1835
        %1838 = vmatpush1.bf16.msra.mxu0 %v1832
        %1839 = vmatprep.subr.bf16.mxu0 0
        %1840 = vmatpush1.bf16.msra.mxu0 0
        %1841 = vmatprep.subr.bf16.mxu0 0
        %1842 = vmatpush1.bf16.msra.mxu0 0
        %1843 = vmatprep.subr.bf16.mxu0 0
        %1844 = vmatpush1.bf16.msra.mxu0 0
        %1845 = vmatprep.subr.bf16.mxu0 0
        %1846 = vmatpush1.bf16.msra.mxu0 0
        %1847 = vmatprep.subr.bf16.mxu0 0
        %1848 = vmatpush1.bf16.msra.mxu0 0
        %1849 = vmatprep.subr.bf16.mxu0 0
        %1850 = vmatpush1.bf16.msra.mxu0 0
        %1851 = vmatprep.subr.bf16.mxu0 0
        %1852 = vmatpush1.bf16.msra.mxu0 0
        %1853 = vmatprep.subr.bf16.mxu0 0
        %1854 = vmatpush1.bf16.msra.mxu0 0
        %1855 = vmatprep.subr.bf16.mxu0 0
        %1856 = vmatpush1.bf16.msra.mxu0 0
        %1857 = vmatprep.subr.bf16.mxu0 0
        %1858 = vmatpush1.bf16.msra.mxu0 0
        %1859 = vmatprep.subr.bf16.mxu0 0
        %1860 = vmatpush1.bf16.msra.mxu0 0
        %1861 = vmatprep.subr.bf16.mxu0 0
        %1862 = vmatpush1.bf16.msra.mxu0 0
        %1863 = vmatprep.subr.bf16.mxu0 0
        %1864 = vmatpush1.bf16.msra.mxu0 0
        %1865 = vmatprep.subr.bf16.mxu0 0
        %1866 = vmatpush1.bf16.msra.mxu0 0
        %1867 = vmatprep.subr.bf16.mxu0 0
        %1868 = vmatpush1.bf16.msra.mxu0 0
        %1869 = vmatprep.mubr.bf16.mxu0 0
        %1870 = vmatmul.mubr.bf16.gmra.mrb[0].mxu0 %v1829
        %v1871 = vpop.f32.mrb[0].mxu0
        %v1872 = vadd.f32 0.0, %v1871
        %v1873 = vpop.f32.mrb[0].mxu0
        %v1874 = vadd.f32 0.0, %v1873
        %v1875 = vpop.f32.mrb[0].mxu0
        %v1876 = vadd.f32 0.0, %v1875
        %v1877 = vpop.f32.mrb[0].mxu0
        %v1878 = vadd.f32 0.0, %v1877
        %1879 = vdwg.mxu0
        %v1880 = vadd.f32 %v1810, %v1872
        %v1881 = vadd.f32 %v1811, %v1874
        %v1882 = vadd.f32 %v1812, %v1876
        %v1883 = vadd.f32 %v1813, %v1878
        %s1884 = scalar_lea.vmem %s7, 64
        %v1885 = vld [vmem:[%s1884] sm:$0xff]
        %v1886 = vld [vmem:[%s1884 + $0x8] sm:$0x77]
        %v1887 = vrot.slane %v1611, 2
        %v1890 = vunpack.c.l.b16 %v1885
        %v1891 = vunpack.c.h.b16 %v1885
        %v1892 = vunpack.c.l.b16 %v1886
        %v1893 = vunpack.c.h.b16 %v1886
        %v1894 = vpack.c.b16 %v1892, %v1890
        %v1895 = vpack.c.b16 %v1893, %v1891
        %v1897 = vsel %vm1632, %v1887, 0
        %v1900 = vsel %vm1636, %v1894, 0
        %v1903 = vsel %vm1636, %v1895, 0
        %1905 = vmatprep.subr.bf16.mxu0 %v1903
        %1906 = vmatpush1.bf16.msra.mxu0 %v1900
        %1907 = vmatprep.subr.bf16.mxu0 0
        %1908 = vmatpush1.bf16.msra.mxu0 0
        %1909 = vmatprep.subr.bf16.mxu0 0
        %1910 = vmatpush1.bf16.msra.mxu0 0
        %1911 = vmatprep.subr.bf16.mxu0 0
        %1912 = vmatpush1.bf16.msra.mxu0 0
        %1913 = vmatprep.subr.bf16.mxu0 0
        %1914 = vmatpush1.bf16.msra.mxu0 0
        %1915 = vmatprep.subr.bf16.mxu0 0
        %1916 = vmatpush1.bf16.msra.mxu0 0
        %1917 = vmatprep.subr.bf16.mxu0 0
        %1918 = vmatpush1.bf16.msra.mxu0 0
        %1919 = vmatprep.subr.bf16.mxu0 0
        %1920 = vmatpush1.bf16.msra.mxu0 0
        %1921 = vmatprep.subr.bf16.mxu0 0
        %1922 = vmatpush1.bf16.msra.mxu0 0
        %1923 = vmatprep.subr.bf16.mxu0 0
        %1924 = vmatpush1.bf16.msra.mxu0 0
        %1925 = vmatprep.subr.bf16.mxu0 0
        %1926 = vmatpush1.bf16.msra.mxu0 0
        %1927 = vmatprep.subr.bf16.mxu0 0
        %1928 = vmatpush1.bf16.msra.mxu0 0
        %1929 = vmatprep.subr.bf16.mxu0 0
        %1930 = vmatpush1.bf16.msra.mxu0 0
        %1931 = vmatprep.subr.bf16.mxu0 0
        %1932 = vmatpush1.bf16.msra.mxu0 0
        %1933 = vmatprep.subr.bf16.mxu0 0
        %1934 = vmatpush1.bf16.msra.mxu0 0
        %1935 = vmatprep.subr.bf16.mxu0 0
        %1936 = vmatpush1.bf16.msra.mxu0 0
        %1937 = vmatprep.mubr.bf16.mxu0 0
        %1938 = vmatmul.mubr.bf16.gmra.mrb[0].mxu0 %v1897
        %v1939 = vpop.f32.mrb[0].mxu0
        %v1940 = vadd.f32 0.0, %v1939
        %v1941 = vpop.f32.mrb[0].mxu0
        %v1942 = vadd.f32 0.0, %v1941
        %v1943 = vpop.f32.mrb[0].mxu0
        %v1944 = vadd.f32 0.0, %v1943
        %v1945 = vpop.f32.mrb[0].mxu0
        %v1946 = vadd.f32 0.0, %v1945
        %1947 = vdwg.mxu0
        %v1948 = vadd.f32 %v1880, %v1940
        %v1949 = vadd.f32 %v1881, %v1942
        %v1950 = vadd.f32 %v1882, %v1944
        %v1951 = vadd.f32 %v1883, %v1946
        %s1952 = scalar_lea.vmem %s7, 80
        %v1953 = vld [vmem:[%s1952] sm:$0xff]
        %v1954 = vld [vmem:[%s1952 + $0x8] sm:$0x77]
        %1955 = vrot.lane.b32.xlu0 %v1611, 114
        %v1956 = vpop.permute.xlu0 %1955
        %v1959 = vunpack.c.l.b16 %v1953
        %v1960 = vunpack.c.h.b16 %v1953
        %v1961 = vunpack.c.l.b16 %v1954
        %v1962 = vunpack.c.h.b16 %v1954
        %v1963 = vpack.c.b16 %v1961, %v1959
        %v1964 = vpack.c.b16 %v1962, %v1960
        %v1966 = vsel %vm1632, %v1956, 0
        %v1969 = vsel %vm1636, %v1963, 0
        %v1972 = vsel %vm1636, %v1964, 0
        %1974 = vmatprep.subr.bf16.mxu0 %v1972
        %1975 = vmatpush1.bf16.msra.mxu0 %v1969
        %1976 = vmatprep.subr.bf16.mxu0 0
        %1977 = vmatpush1.bf16.msra.mxu0 0
        %1978 = vmatprep.subr.bf16.mxu0 0
        %1979 = vmatpush1.bf16.msra.mxu0 0
        %1980 = vmatprep.subr.bf16.mxu0 0
        %1981 = vmatpush1.bf16.msra.mxu0 0
        %1982 = vmatprep.subr.bf16.mxu0 0
        %1983 = vmatpush1.bf16.msra.mxu0 0
        %1984 = vmatprep.subr.bf16.mxu0 0
        %1985 = vmatpush1.bf16.msra.mxu0 0
        %1986 = vmatprep.subr.bf16.mxu0 0
        %1987 = vmatpush1.bf16.msra.mxu0 0
        %1988 = vmatprep.subr.bf16.mxu0 0
        %1989 = vmatpush1.bf16.msra.mxu0 0
        %1990 = vmatprep.subr.bf16.mxu0 0
        %1991 = vmatpush1.bf16.msra.mxu0 0
        %1992 = vmatprep.subr.bf16.mxu0 0
        %1993 = vmatpush1.bf16.msra.mxu0 0
        %1994 = vmatprep.subr.bf16.mxu0 0
        %1995 = vmatpush1.bf16.msra.mxu0 0
        %1996 = vmatprep.subr.bf16.mxu0 0
        %1997 = vmatpush1.bf16.msra.mxu0 0
        %1998 = vmatprep.subr.bf16.mxu0 0
        %1999 = vmatpush1.bf16.msra.mxu0 0
        %2000 = vmatprep.subr.bf16.mxu0 0
        %2001 = vmatpush1.bf16.msra.mxu0 0
        %2002 = vmatprep.subr.bf16.mxu0 0
        %2003 = vmatpush1.bf16.msra.mxu0 0
        %2004 = vmatprep.subr.bf16.mxu0 0
        %2005 = vmatpush1.bf16.msra.mxu0 0
        %2006 = vmatprep.mubr.bf16.mxu0 0
        %2007 = vmatmul.mubr.bf16.gmra.mrb[0].mxu0 %v1966
        %v2008 = vpop.f32.mrb[0].mxu0
        %v2009 = vadd.f32 0.0, %v2008
        %v2010 = vpop.f32.mrb[0].mxu0
        %v2011 = vadd.f32 0.0, %v2010
        %v2012 = vpop.f32.mrb[0].mxu0
        %v2013 = vadd.f32 0.0, %v2012
        %v2014 = vpop.f32.mrb[0].mxu0
        %v2015 = vadd.f32 0.0, %v2014
        %2016 = vdwg.mxu0
        %v2017 = vadd.f32 %v1948, %v2009
        %v2018 = vadd.f32 %v1949, %v2011
        %v2019 = vadd.f32 %v1950, %v2013
        %v2020 = vadd.f32 %v1951, %v2015
        %s2021 = scalar_lea.vmem %s7, 96
        %v2022 = vld [vmem:[%s2021] sm:$0xff]
        %v2023 = vld [vmem:[%s2021 + $0x8] sm:$0x77]
        %2024 = vrot.lane.b32.xlu0 %v1623, 114
        %v2025 = vpop.permute.xlu0 %2024
        %v2028 = vunpack.c.l.b16 %v2022
        %v2029 = vunpack.c.h.b16 %v2022
        %v2030 = vunpack.c.l.b16 %v2023
        %v2031 = vunpack.c.h.b16 %v2023
        %v2032 = vpack.c.b16 %v2030, %v2028
        %v2033 = vpack.c.b16 %v2031, %v2029
        %v2035 = vsel %vm1632, %v2025, 0
        %v2038 = vsel %vm1636, %v2032, 0
        %v2041 = vsel %vm1636, %v2033, 0
        %2043 = vmatprep.subr.bf16.mxu0 %v2041
        %2044 = vmatpush1.bf16.msra.mxu0 %v2038
        %2045 = vmatprep.subr.bf16.mxu0 0
        %2046 = vmatpush1.bf16.msra.mxu0 0
        %2047 = vmatprep.subr.bf16.mxu0 0
        %2048 = vmatpush1.bf16.msra.mxu0 0
        %2049 = vmatprep.subr.bf16.mxu0 0
        %2050 = vmatpush1.bf16.msra.mxu0 0
        %2051 = vmatprep.subr.bf16.mxu0 0
        %2052 = vmatpush1.bf16.msra.mxu0 0
        %2053 = vmatprep.subr.bf16.mxu0 0
        %2054 = vmatpush1.bf16.msra.mxu0 0
        %2055 = vmatprep.subr.bf16.mxu0 0
        %2056 = vmatpush1.bf16.msra.mxu0 0
        %2057 = vmatprep.subr.bf16.mxu0 0
        %2058 = vmatpush1.bf16.msra.mxu0 0
        %2059 = vmatprep.subr.bf16.mxu0 0
        %2060 = vmatpush1.bf16.msra.mxu0 0
        %2061 = vmatprep.subr.bf16.mxu0 0
        %2062 = vmatpush1.bf16.msra.mxu0 0
        %2063 = vmatprep.subr.bf16.mxu0 0
        %2064 = vmatpush1.bf16.msra.mxu0 0
        %2065 = vmatprep.subr.bf16.mxu0 0
        %2066 = vmatpush1.bf16.msra.mxu0 0
        %2067 = vmatprep.subr.bf16.mxu0 0
        %2068 = vmatpush1.bf16.msra.mxu0 0
        %2069 = vmatprep.subr.bf16.mxu0 0
        %2070 = vmatpush1.bf16.msra.mxu0 0
        %2071 = vmatprep.subr.bf16.mxu0 0
        %2072 = vmatpush1.bf16.msra.mxu0 0
        %2073 = vmatprep.subr.bf16.mxu0 0
        %2074 = vmatpush1.bf16.msra.mxu0 0
        %2075 = vmatprep.mubr.bf16.mxu0 0
        %2076 = vmatmul.mubr.bf16.gmra.mrb[0].mxu0 %v2035
        %v2077 = vpop.f32.mrb[0].mxu0
        %v2078 = vadd.f32 0.0, %v2077
        %v2079 = vpop.f32.mrb[0].mxu0
        %v2080 = vadd.f32 0.0, %v2079
        %v2081 = vpop.f32.mrb[0].mxu0
        %v2082 = vadd.f32 0.0, %v2081
        %v2083 = vpop.f32.mrb[0].mxu0
        %v2084 = vadd.f32 0.0, %v2083
        %2085 = vdwg.mxu0
        %v2086 = vadd.f32 %v2017, %v2078
        %v2087 = vadd.f32 %v2018, %v2080
        %v2088 = vadd.f32 %v2019, %v2082
        %v2089 = vadd.f32 %v2020, %v2084
        %s2090 = scalar_lea.vmem %s7, 112
        %v2091 = vld [vmem:[%s2090] sm:$0xff]
        %v2092 = vld [vmem:[%s2090 + $0x8] sm:$0x77]
        %2093 = vrot.lane.b32.xlu0 %v1749, 114
        %v2094 = vpop.permute.xlu0 %2093
        %v2097 = vunpack.c.l.b16 %v2091
        %v2098 = vunpack.c.h.b16 %v2091
        %v2099 = vunpack.c.l.b16 %v2092
        %v2100 = vunpack.c.h.b16 %v2092
        %v2101 = vpack.c.b16 %v2099, %v2097
        %v2102 = vpack.c.b16 %v2100, %v2098
        %v2104 = vsel %vm1632, %v2094, 0
        %v2107 = vsel %vm1636, %v2101, 0
        %v2110 = vsel %vm1636, %v2102, 0
        %2112 = vmatprep.subr.bf16.mxu0 %v2110
        %2113 = vmatpush1.bf16.msra.mxu0 %v2107
        %2114 = vmatprep.subr.bf16.mxu0 0
        %2115 = vmatpush1.bf16.msra.mxu0 0
        %2116 = vmatprep.subr.bf16.mxu0 0
        %2117 = vmatpush1.bf16.msra.mxu0 0
        %2118 = vmatprep.subr.bf16.mxu0 0
        %2119 = vmatpush1.bf16.msra.mxu0 0
        %2120 = vmatprep.subr.bf16.mxu0 0
        %2121 = vmatpush1.bf16.msra.mxu0 0
        %2122 = vmatprep.subr.bf16.mxu0 0
        %2123 = vmatpush1.bf16.msra.mxu0 0
        %2124 = vmatprep.subr.bf16.mxu0 0
        %2125 = vmatpush1.bf16.msra.mxu0 0
        %2126 = vmatprep.subr.bf16.mxu0 0
        %2127 = vmatpush1.bf16.msra.mxu0 0
        %2128 = vmatprep.subr.bf16.mxu0 0
        %2129 = vmatpush1.bf16.msra.mxu0 0
        %2130 = vmatprep.subr.bf16.mxu0 0
        %2131 = vmatpush1.bf16.msra.mxu0 0
        %2132 = vmatprep.subr.bf16.mxu0 0
        %2133 = vmatpush1.bf16.msra.mxu0 0
        %2134 = vmatprep.subr.bf16.mxu0 0
        %2135 = vmatpush1.bf16.msra.mxu0 0
        %2136 = vmatprep.subr.bf16.mxu0 0
        %2137 = vmatpush1.bf16.msra.mxu0 0
        %2138 = vmatprep.subr.bf16.mxu0 0
        %2139 = vmatpush1.bf16.msra.mxu0 0
        %2140 = vmatprep.subr.bf16.mxu0 0
        %2141 = vmatpush1.bf16.msra.mxu0 0
        %2142 = vmatprep.subr.bf16.mxu0 0
        %2143 = vmatpush1.bf16.msra.mxu0 0
        %2144 = vmatprep.mubr.bf16.mxu0 0
        %2145 = vmatmul.mubr.bf16.gmra.mrb[0].mxu0 %v2104
        %v2146 = vpop.f32.mrb[0].mxu0
        %v2147 = vadd.f32 0.0, %v2146
        %v2148 = vpop.f32.mrb[0].mxu0
        %v2149 = vadd.f32 0.0, %v2148
        %v2150 = vpop.f32.mrb[0].mxu0
        %v2151 = vadd.f32 0.0, %v2150
        %v2152 = vpop.f32.mrb[0].mxu0
        %v2153 = vadd.f32 0.0, %v2152
        %2154 = vdwg.mxu0
        %v2155 = vadd.f32 %v2086, %v2147
        %v2156 = vadd.f32 %v2087, %v2149
        %v2157 = vadd.f32 %v2088, %v2151
        %v2158 = vadd.f32 %v2089, %v2153
        %s2159 = scalar_lea.vmem %s7, 128
        %v2160 = vld [vmem:[%s2159] sm:$0xff]
        %v2161 = vld [vmem:[%s2159 + $0x8] sm:$0x77]
        %2162 = vrot.lane.b32.xlu0 %v1819, 114
        %v2163 = vpop.permute.xlu0 %2162
        %v2166 = vunpack.c.l.b16 %v2160
        %v2167 = vunpack.c.h.b16 %v2160
        %v2168 = vunpack.c.l.b16 %v2161
        %v2169 = vunpack.c.h.b16 %v2161
        %v2170 = vpack.c.b16 %v2168, %v2166
        %v2171 = vpack.c.b16 %v2169, %v2167
        %v2173 = vsel %vm1632, %v2163, 0
        %v2176 = vsel %vm1636, %v2170, 0
        %v2179 = vsel %vm1636, %v2171, 0
        %2181 = vmatprep.subr.bf16.mxu0 %v2179
        %2182 = vmatpush1.bf16.msra.mxu0 %v2176
        %2183 = vmatprep.subr.bf16.mxu0 0
        %2184 = vmatpush1.bf16.msra.mxu0 0
        %2185 = vmatprep.subr.bf16.mxu0 0
        %2186 = vmatpush1.bf16.msra.mxu0 0
        %2187 = vmatprep.subr.bf16.mxu0 0
        %2188 = vmatpush1.bf16.msra.mxu0 0
        %2189 = vmatprep.subr.bf16.mxu0 0
        %2190 = vmatpush1.bf16.msra.mxu0 0
        %2191 = vmatprep.subr.bf16.mxu0 0
        %2192 = vmatpush1.bf16.msra.mxu0 0
        %2193 = vmatprep.subr.bf16.mxu0 0
        %2194 = vmatpush1.bf16.msra.mxu0 0
        %2195 = vmatprep.subr.bf16.mxu0 0
        %2196 = vmatpush1.bf16.msra.mxu0 0
        %2197 = vmatprep.subr.bf16.mxu0 0
        %2198 = vmatpush1.bf16.msra.mxu0 0
        %2199 = vmatprep.subr.bf16.mxu0 0
        %2200 = vmatpush1.bf16.msra.mxu0 0
        %2201 = vmatprep.subr.bf16.mxu0 0
        %2202 = vmatpush1.bf16.msra.mxu0 0
        %2203 = vmatprep.subr.bf16.mxu0 0
        %2204 = vmatpush1.bf16.msra.mxu0 0
        %2205 = vmatprep.subr.bf16.mxu0 0
        %2206 = vmatpush1.bf16.msra.mxu0 0
        %2207 = vmatprep.subr.bf16.mxu0 0
        %2208 = vmatpush1.bf16.msra.mxu0 0
        %2209 = vmatprep.subr.bf16.mxu0 0
        %2210 = vmatpush1.bf16.msra.mxu0 0
        %2211 = vmatprep.subr.bf16.mxu0 0
        %2212 = vmatpush1.bf16.msra.mxu0 0
        %2213 = vmatprep.mubr.bf16.mxu0 0
        %2214 = vmatmul.mubr.bf16.gmra.mrb[0].mxu0 %v2173
        %v2215 = vpop.f32.mrb[0].mxu0
        %v2216 = vadd.f32 0.0, %v2215
        %v2217 = vpop.f32.mrb[0].mxu0
        %v2218 = vadd.f32 0.0, %v2217
        %v2219 = vpop.f32.mrb[0].mxu0
        %v2220 = vadd.f32 0.0, %v2219
        %v2221 = vpop.f32.mrb[0].mxu0
        %v2222 = vadd.f32 0.0, %v2221
        %2223 = vdwg.mxu0
        %v2224 = vadd.f32 %v2155, %v2216
        %v2225 = vadd.f32 %v2156, %v2218
        %v2226 = vadd.f32 %v2157, %v2220
        %v2227 = vadd.f32 %v2158, %v2222
        %s2228 = scalar_lea.vmem %s7, 144
        %v2229 = vld [vmem:[%s2228] sm:$0xff]
        %v2230 = vld [vmem:[%s2228 + $0x8] sm:$0x77]
        %2231 = vrot.lane.b32.xlu0 %v1887, 114
        %v2232 = vpop.permute.xlu0 %2231
        %v2235 = vunpack.c.l.b16 %v2229
        %v2236 = vunpack.c.h.b16 %v2229
        %v2237 = vunpack.c.l.b16 %v2230
        %v2238 = vunpack.c.h.b16 %v2230
        %v2239 = vpack.c.b16 %v2237, %v2235
        %v2240 = vpack.c.b16 %v2238, %v2236
        %v2242 = vsel %vm1632, %v2232, 0
        %v2245 = vsel %vm1636, %v2239, 0
        %v2248 = vsel %vm1636, %v2240, 0
        %2250 = vmatprep.subr.bf16.mxu0 %v2248
        %2251 = vmatpush1.bf16.msra.mxu0 %v2245
        %2252 = vmatprep.subr.bf16.mxu0 0
        %2253 = vmatpush1.bf16.msra.mxu0 0
        %2254 = vmatprep.subr.bf16.mxu0 0
        %2255 = vmatpush1.bf16.msra.mxu0 0
        %2256 = vmatprep.subr.bf16.mxu0 0
        %2257 = vmatpush1.bf16.msra.mxu0 0
        %2258 = vmatprep.subr.bf16.mxu0 0
        %2259 = vmatpush1.bf16.msra.mxu0 0
        %2260 = vmatprep.subr.bf16.mxu0 0
        %2261 = vmatpush1.bf16.msra.mxu0 0
        %2262 = vmatprep.subr.bf16.mxu0 0
        %2263 = vmatpush1.bf16.msra.mxu0 0
        %2264 = vmatprep.subr.bf16.mxu0 0
        %2265 = vmatpush1.bf16.msra.mxu0 0
        %2266 = vmatprep.subr.bf16.mxu0 0
        %2267 = vmatpush1.bf16.msra.mxu0 0
        %2268 = vmatprep.subr.bf16.mxu0 0
        %2269 = vmatpush1.bf16.msra.mxu0 0
        %2270 = vmatprep.subr.bf16.mxu0 0
        %2271 = vmatpush1.bf16.msra.mxu0 0
        %2272 = vmatprep.subr.bf16.mxu0 0
        %2273 = vmatpush1.bf16.msra.mxu0 0
        %2274 = vmatprep.subr.bf16.mxu0 0
        %2275 = vmatpush1.bf16.msra.mxu0 0
        %2276 = vmatprep.subr.bf16.mxu0 0
        %2277 = vmatpush1.bf16.msra.mxu0 0
        %2278 = vmatprep.subr.bf16.mxu0 0
        %2279 = vmatpush1.bf16.msra.mxu0 0
        %2280 = vmatprep.subr.bf16.mxu0 0
        %2281 = vmatpush1.bf16.msra.mxu0 0
        %2282 = vmatprep.mubr.bf16.mxu0 0
        %2283 = vmatmul.mubr.bf16.gmra.mrb[0].mxu0 %v2242
        %v2284 = vpop.f32.mrb[0].mxu0
        %v2285 = vadd.f32 0.0, %v2284
        %v2286 = vpop.f32.mrb[0].mxu0
        %v2287 = vadd.f32 0.0, %v2286
        %v2288 = vpop.f32.mrb[0].mxu0
        %v2289 = vadd.f32 0.0, %v2288
        %v2290 = vpop.f32.mrb[0].mxu0
        %v2291 = vadd.f32 0.0, %v2290
        %2292 = vdwg.mxu0
        %v2293 = vadd.f32 %v2224, %v2285
        %v2294 = vadd.f32 %v2225, %v2287
        %v2295 = vadd.f32 %v2226, %v2289
        %v2296 = vadd.f32 %v2227, %v2291
        %s2297 = scalar_lea.vmem %s7, 160
        %v2298 = vld [vmem:[%s2297] sm:$0xff]
        %v2299 = vld [vmem:[%s2297 + $0x8] sm:$0x77]
        %2300 = vrot.lane.b32.xlu0 %v1611, 100
        %v2301 = vpop.permute.xlu0 %2300
        %v2304 = vunpack.c.l.b16 %v2298
        %v2305 = vunpack.c.h.b16 %v2298
        %v2306 = vunpack.c.l.b16 %v2299
        %v2307 = vunpack.c.h.b16 %v2299
        %v2308 = vpack.c.b16 %v2306, %v2304
        %v2309 = vpack.c.b16 %v2307, %v2305
        %v2311 = vsel %vm1632, %v2301, 0
        %v2314 = vsel %vm1636, %v2308, 0
        %v2317 = vsel %vm1636, %v2309, 0
        %2319 = vmatprep.subr.bf16.mxu0 %v2317
        %2320 = vmatpush1.bf16.msra.mxu0 %v2314
        %2321 = vmatprep.subr.bf16.mxu0 0
        %2322 = vmatpush1.bf16.msra.mxu0 0
        %2323 = vmatprep.subr.bf16.mxu0 0
        %2324 = vmatpush1.bf16.msra.mxu0 0
        %2325 = vmatprep.subr.bf16.mxu0 0
        %2326 = vmatpush1.bf16.msra.mxu0 0
        %2327 = vmatprep.subr.bf16.mxu0 0
        %2328 = vmatpush1.bf16.msra.mxu0 0
        %2329 = vmatprep.subr.bf16.mxu0 0
        %2330 = vmatpush1.bf16.msra.mxu0 0
        %2331 = vmatprep.subr.bf16.mxu0 0
        %2332 = vmatpush1.bf16.msra.mxu0 0
        %2333 = vmatprep.subr.bf16.mxu0 0
        %2334 = vmatpush1.bf16.msra.mxu0 0
        %2335 = vmatprep.subr.bf16.mxu0 0
        %2336 = vmatpush1.bf16.msra.mxu0 0
        %2337 = vmatprep.subr.bf16.mxu0 0
        %2338 = vmatpush1.bf16.msra.mxu0 0
        %2339 = vmatprep.subr.bf16.mxu0 0
        %2340 = vmatpush1.bf16.msra.mxu0 0
        %2341 = vmatprep.subr.bf16.mxu0 0
        %2342 = vmatpush1.bf16.msra.mxu0 0
        %2343 = vmatprep.subr.bf16.mxu0 0
        %2344 = vmatpush1.bf16.msra.mxu0 0
        %2345 = vmatprep.subr.bf16.mxu0 0
        %2346 = vmatpush1.bf16.msra.mxu0 0
        %2347 = vmatprep.subr.bf16.mxu0 0
        %2348 = vmatpush1.bf16.msra.mxu0 0
        %2349 = vmatprep.subr.bf16.mxu0 0
        %2350 = vmatpush1.bf16.msra.mxu0 0
        %2351 = vmatprep.mubr.bf16.mxu0 0
        %2352 = vmatmul.mubr.bf16.gmra.mrb[0].mxu0 %v2311
        %v2353 = vpop.f32.mrb[0].mxu0
        %v2354 = vadd.f32 0.0, %v2353
        %v2355 = vpop.f32.mrb[0].mxu0
        %v2356 = vadd.f32 0.0, %v2355
        %v2357 = vpop.f32.mrb[0].mxu0
        %v2358 = vadd.f32 0.0, %v2357
        %v2359 = vpop.f32.mrb[0].mxu0
        %v2360 = vadd.f32 0.0, %v2359
        %2361 = vdwg.mxu0
        %v2362 = vadd.f32 %v2293, %v2354
        %v2363 = vadd.f32 %v2294, %v2356
        %v2364 = vadd.f32 %v2295, %v2358
        %v2365 = vadd.f32 %v2296, %v2360
        %s2366 = scalar_lea.vmem %s7, 176
        %v2367 = vld [vmem:[%s2366] sm:$0xff]
        %v2368 = vld [vmem:[%s2366 + $0x8] sm:$0x77]
        %2369 = vrot.lane.b32.xlu0 %v1623, 100
        %v2370 = vpop.permute.xlu0 %2369
        %v2373 = vunpack.c.l.b16 %v2367
        %v2374 = vunpack.c.h.b16 %v2367
        %v2375 = vunpack.c.l.b16 %v2368
        %v2376 = vunpack.c.h.b16 %v2368
        %v2377 = vpack.c.b16 %v2375, %v2373
        %v2378 = vpack.c.b16 %v2376, %v2374
        %v2380 = vsel %vm1632, %v2370, 0
        %v2383 = vsel %vm1636, %v2377, 0
        %v2386 = vsel %vm1636, %v2378, 0
        %2388 = vmatprep.subr.bf16.mxu0 %v2386
        %2389 = vmatpush1.bf16.msra.mxu0 %v2383
        %2390 = vmatprep.subr.bf16.mxu0 0
        %2391 = vmatpush1.bf16.msra.mxu0 0
        %2392 = vmatprep.subr.bf16.mxu0 0
        %2393 = vmatpush1.bf16.msra.mxu0 0
        %2394 = vmatprep.subr.bf16.mxu0 0
        %2395 = vmatpush1.bf16.msra.mxu0 0
        %2396 = vmatprep.subr.bf16.mxu0 0
        %2397 = vmatpush1.bf16.msra.mxu0 0
        %2398 = vmatprep.subr.bf16.mxu0 0
        %2399 = vmatpush1.bf16.msra.mxu0 0
        %2400 = vmatprep.subr.bf16.mxu0 0
        %2401 = vmatpush1.bf16.msra.mxu0 0
        %2402 = vmatprep.subr.bf16.mxu0 0
        %2403 = vmatpush1.bf16.msra.mxu0 0
        %2404 = vmatprep.subr.bf16.mxu0 0
        %2405 = vmatpush1.bf16.msra.mxu0 0
        %2406 = vmatprep.subr.bf16.mxu0 0
        %2407 = vmatpush1.bf16.msra.mxu0 0
        %2408 = vmatprep.subr.bf16.mxu0 0
        %2409 = vmatpush1.bf16.msra.mxu0 0
        %2410 = vmatprep.subr.bf16.mxu0 0
        %2411 = vmatpush1.bf16.msra.mxu0 0
        %2412 = vmatprep.subr.bf16.mxu0 0
        %2413 = vmatpush1.bf16.msra.mxu0 0
        %2414 = vmatprep.subr.bf16.mxu0 0
        %2415 = vmatpush1.bf16.msra.mxu0 0
        %2416 = vmatprep.subr.bf16.mxu0 0
        %2417 = vmatpush1.bf16.msra.mxu0 0
        %2418 = vmatprep.subr.bf16.mxu0 0
        %2419 = vmatpush1.bf16.msra.mxu0 0
        %2420 = vmatprep.mubr.bf16.mxu0 0
        %2421 = vmatmul.mubr.bf16.gmra.mrb[0].mxu0 %v2380
        %v2422 = vpop.f32.mrb[0].mxu0
        %v2423 = vadd.f32 0.0, %v2422
        %v2424 = vpop.f32.mrb[0].mxu0
        %v2425 = vadd.f32 0.0, %v2424
        %v2426 = vpop.f32.mrb[0].mxu0
        %v2427 = vadd.f32 0.0, %v2426
        %v2428 = vpop.f32.mrb[0].mxu0
        %v2429 = vadd.f32 0.0, %v2428
        %2430 = vdwg.mxu0
        %v2431 = vadd.f32 %v2362, %v2423
        %v2432 = vadd.f32 %v2363, %v2425
        %v2433 = vadd.f32 %v2364, %v2427
        %v2434 = vadd.f32 %v2365, %v2429
        %s2435 = scalar_lea.vmem %s7, 192
        %v2436 = vld [vmem:[%s2435] sm:$0xff]
        %v2437 = vld [vmem:[%s2435 + $0x8] sm:$0x77]
        %2438 = vrot.lane.b32.xlu0 %v1749, 100
        %v2439 = vpop.permute.xlu0 %2438
        %v2442 = vunpack.c.l.b16 %v2436
        %v2443 = vunpack.c.h.b16 %v2436
        %v2444 = vunpack.c.l.b16 %v2437
        %v2445 = vunpack.c.h.b16 %v2437
        %v2446 = vpack.c.b16 %v2444, %v2442
        %v2447 = vpack.c.b16 %v2445, %v2443
        %v2449 = vsel %vm1632, %v2439, 0
        %v2452 = vsel %vm1636, %v2446, 0
        %v2455 = vsel %vm1636, %v2447, 0
        %2457 = vmatprep.subr.bf16.mxu0 %v2455
        %2458 = vmatpush1.bf16.msra.mxu0 %v2452
        %2459 = vmatprep.subr.bf16.mxu0 0
        %2460 = vmatpush1.bf16.msra.mxu0 0
        %2461 = vmatprep.subr.bf16.mxu0 0
        %2462 = vmatpush1.bf16.msra.mxu0 0
        %2463 = vmatprep.subr.bf16.mxu0 0
        %2464 = vmatpush1.bf16.msra.mxu0 0
        %2465 = vmatprep.subr.bf16.mxu0 0
        %2466 = vmatpush1.bf16.msra.mxu0 0
        %2467 = vmatprep.subr.bf16.mxu0 0
        %2468 = vmatpush1.bf16.msra.mxu0 0
        %2469 = vmatprep.subr.bf16.mxu0 0
        %2470 = vmatpush1.bf16.msra.mxu0 0
        %2471 = vmatprep.subr.bf16.mxu0 0
        %2472 = vmatpush1.bf16.msra.mxu0 0
        %2473 = vmatprep.subr.bf16.mxu0 0
        %2474 = vmatpush1.bf16.msra.mxu0 0
        %2475 = vmatprep.subr.bf16.mxu0 0
        %2476 = vmatpush1.bf16.msra.mxu0 0
        %2477 = vmatprep.subr.bf16.mxu0 0
        %2478 = vmatpush1.bf16.msra.mxu0 0
        %2479 = vmatprep.subr.bf16.mxu0 0
        %2480 = vmatpush1.bf16.msra.mxu0 0
        %2481 = vmatprep.subr.bf16.mxu0 0
        %2482 = vmatpush1.bf16.msra.mxu0 0
        %2483 = vmatprep.subr.bf16.mxu0 0
        %2484 = vmatpush1.bf16.msra.mxu0 0
        %2485 = vmatprep.subr.bf16.mxu0 0
        %2486 = vmatpush1.bf16.msra.mxu0 0
        %2487 = vmatprep.subr.bf16.mxu0 0
        %2488 = vmatpush1.bf16.msra.mxu0 0
        %2489 = vmatprep.mubr.bf16.mxu0 0
        %2490 = vmatmul.mubr.bf16.gmra.mrb[0].mxu0 %v2449
        %v2491 = vpop.f32.mrb[0].mxu0
        %v2492 = vadd.f32 0.0, %v2491
        %v2493 = vpop.f32.mrb[0].mxu0
        %v2494 = vadd.f32 0.0, %v2493
        %v2495 = vpop.f32.mrb[0].mxu0
        %v2496 = vadd.f32 0.0, %v2495
        %v2497 = vpop.f32.mrb[0].mxu0
        %v2498 = vadd.f32 0.0, %v2497
        %2499 = vdwg.mxu0
        %v2500 = vadd.f32 %v2431, %v2492
        %v2501 = vadd.f32 %v2432, %v2494
        %v2502 = vadd.f32 %v2433, %v2496
        %v2503 = vadd.f32 %v2434, %v2498
        %s2504 = scalar_lea.vmem %s7, 208
        %v2505 = vld [vmem:[%s2504] sm:$0xff]
        %v2506 = vld [vmem:[%s2504 + $0x8] sm:$0x77]
        %2507 = vrot.lane.b32.xlu0 %v1819, 100
        %v2508 = vpop.permute.xlu0 %2507
        %v2511 = vunpack.c.l.b16 %v2505
        %v2512 = vunpack.c.h.b16 %v2505
        %v2513 = vunpack.c.l.b16 %v2506
        %v2514 = vunpack.c.h.b16 %v2506
        %v2515 = vpack.c.b16 %v2513, %v2511
        %v2516 = vpack.c.b16 %v2514, %v2512
        %v2518 = vsel %vm1632, %v2508, 0
        %v2521 = vsel %vm1636, %v2515, 0
        %v2524 = vsel %vm1636, %v2516, 0
        %2526 = vmatprep.subr.bf16.mxu0 %v2524
        %2527 = vmatpush1.bf16.msra.mxu0 %v2521
        %2528 = vmatprep.subr.bf16.mxu0 0
        %2529 = vmatpush1.bf16.msra.mxu0 0
        %2530 = vmatprep.subr.bf16.mxu0 0
        %2531 = vmatpush1.bf16.msra.mxu0 0
        %2532 = vmatprep.subr.bf16.mxu0 0
        %2533 = vmatpush1.bf16.msra.mxu0 0
        %2534 = vmatprep.subr.bf16.mxu0 0
        %2535 = vmatpush1.bf16.msra.mxu0 0
        %2536 = vmatprep.subr.bf16.mxu0 0
        %2537 = vmatpush1.bf16.msra.mxu0 0
        %2538 = vmatprep.subr.bf16.mxu0 0
        %2539 = vmatpush1.bf16.msra.mxu0 0
        %2540 = vmatprep.subr.bf16.mxu0 0
        %2541 = vmatpush1.bf16.msra.mxu0 0
        %2542 = vmatprep.subr.bf16.mxu0 0
        %2543 = vmatpush1.bf16.msra.mxu0 0
        %2544 = vmatprep.subr.bf16.mxu0 0
        %2545 = vmatpush1.bf16.msra.mxu0 0
        %2546 = vmatprep.subr.bf16.mxu0 0
        %2547 = vmatpush1.bf16.msra.mxu0 0
        %2548 = vmatprep.subr.bf16.mxu0 0
        %2549 = vmatpush1.bf16.msra.mxu0 0
        %2550 = vmatprep.subr.bf16.mxu0 0
        %2551 = vmatpush1.bf16.msra.mxu0 0
        %2552 = vmatprep.subr.bf16.mxu0 0
        %2553 = vmatpush1.bf16.msra.mxu0 0
        %2554 = vmatprep.subr.bf16.mxu0 0
        %2555 = vmatpush1.bf16.msra.mxu0 0
        %2556 = vmatprep.subr.bf16.mxu0 0
        %2557 = vmatpush1.bf16.msra.mxu0 0
        %2558 = vmatprep.mubr.bf16.mxu0 0
        %2559 = vmatmul.mubr.bf16.gmra.mrb[0].mxu0 %v2518
        %v2560 = vpop.f32.mrb[0].mxu0
        %v2561 = vadd.f32 0.0, %v2560
        %v2562 = vpop.f32.mrb[0].mxu0
        %v2563 = vadd.f32 0.0, %v2562
        %v2564 = vpop.f32.mrb[0].mxu0
        %v2565 = vadd.f32 0.0, %v2564
        %v2566 = vpop.f32.mrb[0].mxu0
        %v2567 = vadd.f32 0.0, %v2566
        %2568 = vdwg.mxu0
        %v2569 = vadd.f32 %v2500, %v2561
        %v2570 = vadd.f32 %v2501, %v2563
        %v2571 = vadd.f32 %v2502, %v2565
        %v2572 = vadd.f32 %v2503, %v2567
        %s2573 = scalar_lea.vmem %s7, 224
        %v2574 = vld [vmem:[%s2573] sm:$0xff]
        %v2575 = vld [vmem:[%s2573 + $0x8] sm:$0x77]
        %2576 = vrot.lane.b32.xlu0 %v1887, 100
        %v2577 = vpop.permute.xlu0 %2576
        %v2580 = vunpack.c.l.b16 %v2574
        %v2581 = vunpack.c.h.b16 %v2574
        %v2582 = vunpack.c.l.b16 %v2575
        %v2583 = vunpack.c.h.b16 %v2575
        %v2584 = vpack.c.b16 %v2582, %v2580
        %v2585 = vpack.c.b16 %v2583, %v2581
        %v2587 = vsel %vm1632, %v2577, 0
        %v2590 = vsel %vm1636, %v2584, 0
        %v2593 = vsel %vm1636, %v2585, 0
        %2595 = vmatprep.subr.bf16.mxu0 %v2593
        %2596 = vmatpush1.bf16.msra.mxu0 %v2590
        %2597 = vmatprep.subr.bf16.mxu0 0
        %2598 = vmatpush1.bf16.msra.mxu0 0
        %2599 = vmatprep.subr.bf16.mxu0 0
        %2600 = vmatpush1.bf16.msra.mxu0 0
        %2601 = vmatprep.subr.bf16.mxu0 0
        %2602 = vmatpush1.bf16.msra.mxu0 0
        %2603 = vmatprep.subr.bf16.mxu0 0
        %2604 = vmatpush1.bf16.msra.mxu0 0
        %2605 = vmatprep.subr.bf16.mxu0 0
        %2606 = vmatpush1.bf16.msra.mxu0 0
        %2607 = vmatprep.subr.bf16.mxu0 0
        %2608 = vmatpush1.bf16.msra.mxu0 0
        %2609 = vmatprep.subr.bf16.mxu0 0
        %2610 = vmatpush1.bf16.msra.mxu0 0
        %2611 = vmatprep.subr.bf16.mxu0 0
        %2612 = vmatpush1.bf16.msra.mxu0 0
        %2613 = vmatprep.subr.bf16.mxu0 0
        %2614 = vmatpush1.bf16.msra.mxu0 0
        %2615 = vmatprep.subr.bf16.mxu0 0
        %2616 = vmatpush1.bf16.msra.mxu0 0
        %2617 = vmatprep.subr.bf16.mxu0 0
        %2618 = vmatpush1.bf16.msra.mxu0 0
        %2619 = vmatprep.subr.bf16.mxu0 0
        %2620 = vmatpush1.bf16.msra.mxu0 0
        %2621 = vmatprep.subr.bf16.mxu0 0
        %2622 = vmatpush1.bf16.msra.mxu0 0
        %2623 = vmatprep.subr.bf16.mxu0 0
        %2624 = vmatpush1.bf16.msra.mxu0 0
        %2625 = vmatprep.subr.bf16.mxu0 0
        %2626 = vmatpush1.bf16.msra.mxu0 0
        %2627 = vmatprep.mubr.bf16.mxu0 0
        %2628 = vmatmul.mubr.bf16.gmra.mrb[0].mxu0 %v2587
        %v2629 = vpop.f32.mrb[0].mxu0
        %v2630 = vadd.f32 0.0, %v2629
        %v2631 = vpop.f32.mrb[0].mxu0
        %v2632 = vadd.f32 0.0, %v2631
        %v2633 = vpop.f32.mrb[0].mxu0
        %v2634 = vadd.f32 0.0, %v2633
        %v2635 = vpop.f32.mrb[0].mxu0
        %v2636 = vadd.f32 0.0, %v2635
        %2637 = vdwg.mxu0
        %v2638 = vadd.f32 %v2569, %v2630
        %v2639 = vadd.f32 %v2570, %v2632
        %v2640 = vadd.f32 %v2571, %v2634
        %v2641 = vadd.f32 %v2572, %v2636
        %s2642 = scalar_lea.vmem %s7, 240
        %v2643 = vld [vmem:[%s2642] sm:$0xff]
        %v2644 = vld [vmem:[%s2642 + $0x8] sm:$0x77]
        %2645 = vrot.lane.b32.xlu0 %v1611, 86
        %v2646 = vpop.permute.xlu0 %2645
        %v2649 = vunpack.c.l.b16 %v2643
        %v2650 = vunpack.c.h.b16 %v2643
        %v2651 = vunpack.c.l.b16 %v2644
        %v2652 = vunpack.c.h.b16 %v2644
        %v2653 = vpack.c.b16 %v2651, %v2649
        %v2654 = vpack.c.b16 %v2652, %v2650
        %v2656 = vsel %vm1632, %v2646, 0
        %v2659 = vsel %vm1636, %v2653, 0
        %v2662 = vsel %vm1636, %v2654, 0
        %2664 = vmatprep.subr.bf16.mxu0 %v2662
        %2665 = vmatpush1.bf16.msra.mxu0 %v2659
        %2666 = vmatprep.subr.bf16.mxu0 0
        %2667 = vmatpush1.bf16.msra.mxu0 0
        %2668 = vmatprep.subr.bf16.mxu0 0
        %2669 = vmatpush1.bf16.msra.mxu0 0
        %2670 = vmatprep.subr.bf16.mxu0 0
        %2671 = vmatpush1.bf16.msra.mxu0 0
        %2672 = vmatprep.subr.bf16.mxu0 0
        %2673 = vmatpush1.bf16.msra.mxu0 0
        %2674 = vmatprep.subr.bf16.mxu0 0
        %2675 = vmatpush1.bf16.msra.mxu0 0
        %2676 = vmatprep.subr.bf16.mxu0 0
        %2677 = vmatpush1.bf16.msra.mxu0 0
        %2678 = vmatprep.subr.bf16.mxu0 0
        %2679 = vmatpush1.bf16.msra.mxu0 0
        %2680 = vmatprep.subr.bf16.mxu0 0
        %2681 = vmatpush1.bf16.msra.mxu0 0
        %2682 = vmatprep.subr.bf16.mxu0 0
        %2683 = vmatpush1.bf16.msra.mxu0 0
        %2684 = vmatprep.subr.bf16.mxu0 0
        %2685 = vmatpush1.bf16.msra.mxu0 0
        %2686 = vmatprep.subr.bf16.mxu0 0
        %2687 = vmatpush1.bf16.msra.mxu0 0
        %2688 = vmatprep.subr.bf16.mxu0 0
        %2689 = vmatpush1.bf16.msra.mxu0 0
        %2690 = vmatprep.subr.bf16.mxu0 0
        %2691 = vmatpush1.bf16.msra.mxu0 0
        %2692 = vmatprep.subr.bf16.mxu0 0
        %2693 = vmatpush1.bf16.msra.mxu0 0
        %2694 = vmatprep.subr.bf16.mxu0 0
        %2695 = vmatpush1.bf16.msra.mxu0 0
        %2696 = vmatprep.mubr.bf16.mxu0 0
        %2697 = vmatmul.mubr.bf16.gmra.mrb[0].mxu0 %v2656
        %v2698 = vpop.f32.mrb[0].mxu0
        %v2699 = vadd.f32 0.0, %v2698
        %v2700 = vpop.f32.mrb[0].mxu0
        %v2701 = vadd.f32 0.0, %v2700
        %v2702 = vpop.f32.mrb[0].mxu0
        %v2703 = vadd.f32 0.0, %v2702
        %v2704 = vpop.f32.mrb[0].mxu0
        %v2705 = vadd.f32 0.0, %v2704
        %2706 = vdwg.mxu0
        %v2707 = vadd.f32 %v2638, %v2699
        %v2708 = vadd.f32 %v2639, %v2701
        %v2709 = vadd.f32 %v2640, %v2703
        %v2710 = vadd.f32 %v2641, %v2705
        %s2711 = scalar_lea.vmem %s7, 256
        %v2712 = vld [vmem:[%s2711] sm:$0xff]
        %v2713 = vld [vmem:[%s2711 + $0x8] sm:$0x77]
        %2714 = vrot.lane.b32.xlu0 %v1623, 86
        %v2715 = vpop.permute.xlu0 %2714
        %v2718 = vunpack.c.l.b16 %v2712
        %v2719 = vunpack.c.h.b16 %v2712
        %v2720 = vunpack.c.l.b16 %v2713
        %v2721 = vunpack.c.h.b16 %v2713
        %v2722 = vpack.c.b16 %v2720, %v2718
        %v2723 = vpack.c.b16 %v2721, %v2719
        %v2725 = vsel %vm1632, %v2715, 0
        %v2728 = vsel %vm1636, %v2722, 0
        %v2731 = vsel %vm1636, %v2723, 0
        %2733 = vmatprep.subr.bf16.mxu0 %v2731
        %2734 = vmatpush1.bf16.msra.mxu0 %v2728
        %2735 = vmatprep.subr.bf16.mxu0 0
        %2736 = vmatpush1.bf16.msra.mxu0 0
        %2737 = vmatprep.subr.bf16.mxu0 0
        %2738 = vmatpush1.bf16.msra.mxu0 0
        %2739 = vmatprep.subr.bf16.mxu0 0
        %2740 = vmatpush1.bf16.msra.mxu0 0
        %2741 = vmatprep.subr.bf16.mxu0 0
        %2742 = vmatpush1.bf16.msra.mxu0 0
        %2743 = vmatprep.subr.bf16.mxu0 0
        %2744 = vmatpush1.bf16.msra.mxu0 0
        %2745 = vmatprep.subr.bf16.mxu0 0
        %2746 = vmatpush1.bf16.msra.mxu0 0
        %2747 = vmatprep.subr.bf16.mxu0 0
        %2748 = vmatpush1.bf16.msra.mxu0 0
        %2749 = vmatprep.subr.bf16.mxu0 0
        %2750 = vmatpush1.bf16.msra.mxu0 0
        %2751 = vmatprep.subr.bf16.mxu0 0
        %2752 = vmatpush1.bf16.msra.mxu0 0
        %2753 = vmatprep.subr.bf16.mxu0 0
        %2754 = vmatpush1.bf16.msra.mxu0 0
        %2755 = vmatprep.subr.bf16.mxu0 0
        %2756 = vmatpush1.bf16.msra.mxu0 0
        %2757 = vmatprep.subr.bf16.mxu0 0
        %2758 = vmatpush1.bf16.msra.mxu0 0
        %2759 = vmatprep.subr.bf16.mxu0 0
        %2760 = vmatpush1.bf16.msra.mxu0 0
        %2761 = vmatprep.subr.bf16.mxu0 0
        %2762 = vmatpush1.bf16.msra.mxu0 0
        %2763 = vmatprep.subr.bf16.mxu0 0
        %2764 = vmatpush1.bf16.msra.mxu0 0
        %2765 = vmatprep.mubr.bf16.mxu0 0
        %2766 = vmatmul.mubr.bf16.gmra.mrb[0].mxu0 %v2725
        %v2767 = vpop.f32.mrb[0].mxu0
        %v2768 = vadd.f32 0.0, %v2767
        %v2769 = vpop.f32.mrb[0].mxu0
        %v2770 = vadd.f32 0.0, %v2769
        %v2771 = vpop.f32.mrb[0].mxu0
        %v2772 = vadd.f32 0.0, %v2771
        %v2773 = vpop.f32.mrb[0].mxu0
        %v2774 = vadd.f32 0.0, %v2773
        %2775 = vdwg.mxu0
        %v2776 = vadd.f32 %v2707, %v2768
        %v2777 = vadd.f32 %v2708, %v2770
        %v2778 = vadd.f32 %v2709, %v2772
        %v2779 = vadd.f32 %v2710, %v2774
        %s2780 = scalar_lea.vmem %s7, 272
        %v2781 = vld [vmem:[%s2780] sm:$0xff]
        %v2782 = vld [vmem:[%s2780 + $0x8] sm:$0x77]
        %2783 = vrot.lane.b32.xlu0 %v1749, 86
        %v2784 = vpop.permute.xlu0 %2783
        %v2787 = vunpack.c.l.b16 %v2781
        %v2788 = vunpack.c.h.b16 %v2781
        %v2789 = vunpack.c.l.b16 %v2782
        %v2790 = vunpack.c.h.b16 %v2782
        %v2791 = vpack.c.b16 %v2789, %v2787
        %v2792 = vpack.c.b16 %v2790, %v2788
        %v2794 = vsel %vm1632, %v2784, 0
        %v2797 = vsel %vm1636, %v2791, 0
        %v2800 = vsel %vm1636, %v2792, 0
        %2802 = vmatprep.subr.bf16.mxu0 %v2800
        %2803 = vmatpush1.bf16.msra.mxu0 %v2797
        %2804 = vmatprep.subr.bf16.mxu0 0
        %2805 = vmatpush1.bf16.msra.mxu0 0
        %2806 = vmatprep.subr.bf16.mxu0 0
        %2807 = vmatpush1.bf16.msra.mxu0 0
        %2808 = vmatprep.subr.bf16.mxu0 0
        %2809 = vmatpush1.bf16.msra.mxu0 0
        %2810 = vmatprep.subr.bf16.mxu0 0
        %2811 = vmatpush1.bf16.msra.mxu0 0
        %2812 = vmatprep.subr.bf16.mxu0 0
        %2813 = vmatpush1.bf16.msra.mxu0 0
        %2814 = vmatprep.subr.bf16.mxu0 0
        %2815 = vmatpush1.bf16.msra.mxu0 0
        %2816 = vmatprep.subr.bf16.mxu0 0
        %2817 = vmatpush1.bf16.msra.mxu0 0
        %2818 = vmatprep.subr.bf16.mxu0 0
        %2819 = vmatpush1.bf16.msra.mxu0 0
        %2820 = vmatprep.subr.bf16.mxu0 0
        %2821 = vmatpush1.bf16.msra.mxu0 0
        %2822 = vmatprep.subr.bf16.mxu0 0
        %2823 = vmatpush1.bf16.msra.mxu0 0
        %2824 = vmatprep.subr.bf16.mxu0 0
        %2825 = vmatpush1.bf16.msra.mxu0 0
        %2826 = vmatprep.subr.bf16.mxu0 0
        %2827 = vmatpush1.bf16.msra.mxu0 0
        %2828 = vmatprep.subr.bf16.mxu0 0
        %2829 = vmatpush1.bf16.msra.mxu0 0
        %2830 = vmatprep.subr.bf16.mxu0 0
        %2831 = vmatpush1.bf16.msra.mxu0 0
        %2832 = vmatprep.subr.bf16.mxu0 0
        %2833 = vmatpush1.bf16.msra.mxu0 0
        %2834 = vmatprep.mubr.bf16.mxu0 0
        %2835 = vmatmul.mubr.bf16.gmra.mrb[0].mxu0 %v2794
        %v2836 = vpop.f32.mrb[0].mxu0
        %v2837 = vadd.f32 0.0, %v2836
        %v2838 = vpop.f32.mrb[0].mxu0
        %v2839 = vadd.f32 0.0, %v2838
        %v2840 = vpop.f32.mrb[0].mxu0
        %v2841 = vadd.f32 0.0, %v2840
        %v2842 = vpop.f32.mrb[0].mxu0
        %v2843 = vadd.f32 0.0, %v2842
        %2844 = vdwg.mxu0
        %v2845 = vadd.f32 %v2776, %v2837
        %v2846 = vadd.f32 %v2777, %v2839
        %v2847 = vadd.f32 %v2778, %v2841
        %v2848 = vadd.f32 %v2779, %v2843
        %s2849 = scalar_lea.vmem %s7, 288
        %v2850 = vld [vmem:[%s2849] sm:$0xff]
        %v2851 = vld [vmem:[%s2849 + $0x8] sm:$0x77]
        %2852 = vrot.lane.b32.xlu0 %v1819, 86
        %v2853 = vpop.permute.xlu0 %2852
        %v2856 = vunpack.c.l.b16 %v2850
        %v2857 = vunpack.c.h.b16 %v2850
        %v2858 = vunpack.c.l.b16 %v2851
        %v2859 = vunpack.c.h.b16 %v2851
        %v2860 = vpack.c.b16 %v2858, %v2856
        %v2861 = vpack.c.b16 %v2859, %v2857
        %v2863 = vsel %vm1632, %v2853, 0
        %v2866 = vsel %vm1636, %v2860, 0
        %v2869 = vsel %vm1636, %v2861, 0
        %2871 = vmatprep.subr.bf16.mxu0 %v2869
        %2872 = vmatpush1.bf16.msra.mxu0 %v2866
        %2873 = vmatprep.subr.bf16.mxu0 0
        %2874 = vmatpush1.bf16.msra.mxu0 0
        %2875 = vmatprep.subr.bf16.mxu0 0
        %2876 = vmatpush1.bf16.msra.mxu0 0
        %2877 = vmatprep.subr.bf16.mxu0 0
        %2878 = vmatpush1.bf16.msra.mxu0 0
        %2879 = vmatprep.subr.bf16.mxu0 0
        %2880 = vmatpush1.bf16.msra.mxu0 0
        %2881 = vmatprep.subr.bf16.mxu0 0
        %2882 = vmatpush1.bf16.msra.mxu0 0
        %2883 = vmatprep.subr.bf16.mxu0 0
        %2884 = vmatpush1.bf16.msra.mxu0 0
        %2885 = vmatprep.subr.bf16.mxu0 0
        %2886 = vmatpush1.bf16.msra.mxu0 0
        %2887 = vmatprep.subr.bf16.mxu0 0
        %2888 = vmatpush1.bf16.msra.mxu0 0
        %2889 = vmatprep.subr.bf16.mxu0 0
        %2890 = vmatpush1.bf16.msra.mxu0 0
        %2891 = vmatprep.subr.bf16.mxu0 0
        %2892 = vmatpush1.bf16.msra.mxu0 0
        %2893 = vmatprep.subr.bf16.mxu0 0
        %2894 = vmatpush1.bf16.msra.mxu0 0
        %2895 = vmatprep.subr.bf16.mxu0 0
        %2896 = vmatpush1.bf16.msra.mxu0 0
        %2897 = vmatprep.subr.bf16.mxu0 0
        %2898 = vmatpush1.bf16.msra.mxu0 0
        %2899 = vmatprep.subr.bf16.mxu0 0
        %2900 = vmatpush1.bf16.msra.mxu0 0
        %2901 = vmatprep.subr.bf16.mxu0 0
        %2902 = vmatpush1.bf16.msra.mxu0 0
        %2903 = vmatprep.mubr.bf16.mxu0 0
        %2904 = vmatmul.mubr.bf16.gmra.mrb[0].mxu0 %v2863
        %v2905 = vpop.f32.mrb[0].mxu0
        %v2906 = vadd.f32 0.0, %v2905
        %v2907 = vpop.f32.mrb[0].mxu0
        %v2908 = vadd.f32 0.0, %v2907
        %v2909 = vpop.f32.mrb[0].mxu0
        %v2910 = vadd.f32 0.0, %v2909
        %v2911 = vpop.f32.mrb[0].mxu0
        %v2912 = vadd.f32 0.0, %v2911
        %2913 = vdwg.mxu0
        %v2914 = vadd.f32 %v2845, %v2906
        %v2915 = vadd.f32 %v2846, %v2908
        %v2916 = vadd.f32 %v2847, %v2910
        %v2917 = vadd.f32 %v2848, %v2912
        %s2918 = scalar_lea.vmem %s7, 304
        %v2919 = vld [vmem:[%s2918] sm:$0xff]
        %v2920 = vld [vmem:[%s2918 + $0x8] sm:$0x77]
        %2921 = vrot.lane.b32.xlu0 %v1887, 86
        %v2922 = vpop.permute.xlu0 %2921
        %v2925 = vunpack.c.l.b16 %v2919
        %v2926 = vunpack.c.h.b16 %v2919
        %v2927 = vunpack.c.l.b16 %v2920
        %v2928 = vunpack.c.h.b16 %v2920
        %v2929 = vpack.c.b16 %v2927, %v2925
        %v2930 = vpack.c.b16 %v2928, %v2926
        %v2932 = vsel %vm1632, %v2922, 0
        %v2935 = vsel %vm1636, %v2929, 0
        %v2938 = vsel %vm1636, %v2930, 0
        %2940 = vmatprep.subr.bf16.mxu0 %v2938
        %2941 = vmatpush1.bf16.msra.mxu0 %v2935
        %2942 = vmatprep.subr.bf16.mxu0 0
        %2943 = vmatpush1.bf16.msra.mxu0 0
        %2944 = vmatprep.subr.bf16.mxu0 0
        %2945 = vmatpush1.bf16.msra.mxu0 0
        %2946 = vmatprep.subr.bf16.mxu0 0
        %2947 = vmatpush1.bf16.msra.mxu0 0
        %2948 = vmatprep.subr.bf16.mxu0 0
        %2949 = vmatpush1.bf16.msra.mxu0 0
        %2950 = vmatprep.subr.bf16.mxu0 0
        %2951 = vmatpush1.bf16.msra.mxu0 0
        %2952 = vmatprep.subr.bf16.mxu0 0
        %2953 = vmatpush1.bf16.msra.mxu0 0
        %2954 = vmatprep.subr.bf16.mxu0 0
        %2955 = vmatpush1.bf16.msra.mxu0 0
        %2956 = vmatprep.subr.bf16.mxu0 0
        %2957 = vmatpush1.bf16.msra.mxu0 0
        %2958 = vmatprep.subr.bf16.mxu0 0
        %2959 = vmatpush1.bf16.msra.mxu0 0
        %2960 = vmatprep.subr.bf16.mxu0 0
        %2961 = vmatpush1.bf16.msra.mxu0 0
        %2962 = vmatprep.subr.bf16.mxu0 0
        %2963 = vmatpush1.bf16.msra.mxu0 0
        %2964 = vmatprep.subr.bf16.mxu0 0
        %2965 = vmatpush1.bf16.msra.mxu0 0
        %2966 = vmatprep.subr.bf16.mxu0 0
        %2967 = vmatpush1.bf16.msra.mxu0 0
        %2968 = vmatprep.subr.bf16.mxu0 0
        %2969 = vmatpush1.bf16.msra.mxu0 0
        %2970 = vmatprep.subr.bf16.mxu0 0
        %2971 = vmatpush1.bf16.msra.mxu0 0
        %2972 = vmatprep.mubr.bf16.mxu0 0
        %2973 = vmatmul.mubr.bf16.gmra.mrb[0].mxu0 %v2932
        %v2974 = vpop.f32.mrb[0].mxu0
        %v2975 = vadd.f32 0.0, %v2974
        %v2976 = vpop.f32.mrb[0].mxu0
        %v2977 = vadd.f32 0.0, %v2976
        %v2978 = vpop.f32.mrb[0].mxu0
        %v2979 = vadd.f32 0.0, %v2978
        %v2980 = vpop.f32.mrb[0].mxu0
        %v2981 = vadd.f32 0.0, %v2980
        %2982 = vdwg.mxu0
        %v2983 = vadd.f32 %v2914, %v2975
        %v2984 = vadd.f32 %v2915, %v2977
        %v2985 = vadd.f32 %v2916, %v2979
        %v2986 = vadd.f32 %v2917, %v2981
        %s2987 = scalar_lea.vmem %s7, 320
        %v2988 = vld [vmem:[%s2987] sm:$0xff]
        %v2989 = vld [vmem:[%s2987 + $0x8] sm:$0x77]
        %2990 = vrot.lane.b32.xlu0 %v1611, 72
        %v2991 = vpop.permute.xlu0 %2990
        %v2994 = vunpack.c.l.b16 %v2988
        %v2995 = vunpack.c.h.b16 %v2988
        %v2996 = vunpack.c.l.b16 %v2989
        %v2997 = vunpack.c.h.b16 %v2989
        %v2998 = vpack.c.b16 %v2996, %v2994
        %v2999 = vpack.c.b16 %v2997, %v2995
        %v3001 = vsel %vm1632, %v2991, 0
        %v3004 = vsel %vm1636, %v2998, 0
        %v3007 = vsel %vm1636, %v2999, 0
        %3009 = vmatprep.subr.bf16.mxu0 %v3007
        %3010 = vmatpush1.bf16.msra.mxu0 %v3004
        %3011 = vmatprep.subr.bf16.mxu0 0
        %3012 = vmatpush1.bf16.msra.mxu0 0
        %3013 = vmatprep.subr.bf16.mxu0 0
        %3014 = vmatpush1.bf16.msra.mxu0 0
        %3015 = vmatprep.subr.bf16.mxu0 0
        %3016 = vmatpush1.bf16.msra.mxu0 0
        %3017 = vmatprep.subr.bf16.mxu0 0
        %3018 = vmatpush1.bf16.msra.mxu0 0
        %3019 = vmatprep.subr.bf16.mxu0 0
        %3020 = vmatpush1.bf16.msra.mxu0 0
        %3021 = vmatprep.subr.bf16.mxu0 0
        %3022 = vmatpush1.bf16.msra.mxu0 0
        %3023 = vmatprep.subr.bf16.mxu0 0
        %3024 = vmatpush1.bf16.msra.mxu0 0
        %3025 = vmatprep.subr.bf16.mxu0 0
        %3026 = vmatpush1.bf16.msra.mxu0 0
        %3027 = vmatprep.subr.bf16.mxu0 0
        %3028 = vmatpush1.bf16.msra.mxu0 0
        %3029 = vmatprep.subr.bf16.mxu0 0
        %3030 = vmatpush1.bf16.msra.mxu0 0
        %3031 = vmatprep.subr.bf16.mxu0 0
        %3032 = vmatpush1.bf16.msra.mxu0 0
        %3033 = vmatprep.subr.bf16.mxu0 0
        %3034 = vmatpush1.bf16.msra.mxu0 0
        %3035 = vmatprep.subr.bf16.mxu0 0
        %3036 = vmatpush1.bf16.msra.mxu0 0
        %3037 = vmatprep.subr.bf16.mxu0 0
        %3038 = vmatpush1.bf16.msra.mxu0 0
        %3039 = vmatprep.subr.bf16.mxu0 0
        %3040 = vmatpush1.bf16.msra.mxu0 0
        %3041 = vmatprep.mubr.bf16.mxu0 0
        %3042 = vmatmul.mubr.bf16.gmra.mrb[0].mxu0 %v3001
        %v3043 = vpop.f32.mrb[0].mxu0
        %v3044 = vadd.f32 0.0, %v3043
        %v3045 = vpop.f32.mrb[0].mxu0
        %v3046 = vadd.f32 0.0, %v3045
        %v3047 = vpop.f32.mrb[0].mxu0
        %v3048 = vadd.f32 0.0, %v3047
        %v3049 = vpop.f32.mrb[0].mxu0
        %v3050 = vadd.f32 0.0, %v3049
        %3051 = vdwg.mxu0
        %v3052 = vadd.f32 %v2983, %v3044
        %v3053 = vadd.f32 %v2984, %v3046
        %v3054 = vadd.f32 %v2985, %v3048
        %v3055 = vadd.f32 %v2986, %v3050
        %s3056 = scalar_lea.vmem %s7, 336
        %v3057 = vld [vmem:[%s3056] sm:$0xff]
        %v3058 = vld [vmem:[%s3056 + $0x8] sm:$0x77]
        %3059 = vrot.lane.b32.xlu0 %v1623, 72
        %v3060 = vpop.permute.xlu0 %3059
        %v3063 = vunpack.c.l.b16 %v3057
        %v3064 = vunpack.c.h.b16 %v3057
        %v3065 = vunpack.c.l.b16 %v3058
        %v3066 = vunpack.c.h.b16 %v3058
        %v3067 = vpack.c.b16 %v3065, %v3063
        %v3068 = vpack.c.b16 %v3066, %v3064
        %v3070 = vsel %vm1632, %v3060, 0
        %v3073 = vsel %vm1636, %v3067, 0
        %v3076 = vsel %vm1636, %v3068, 0
        %3078 = vmatprep.subr.bf16.mxu0 %v3076
        %3079 = vmatpush1.bf16.msra.mxu0 %v3073
        %3080 = vmatprep.subr.bf16.mxu0 0
        %3081 = vmatpush1.bf16.msra.mxu0 0
        %3082 = vmatprep.subr.bf16.mxu0 0
        %3083 = vmatpush1.bf16.msra.mxu0 0
        %3084 = vmatprep.subr.bf16.mxu0 0
        %3085 = vmatpush1.bf16.msra.mxu0 0
        %3086 = vmatprep.subr.bf16.mxu0 0
        %3087 = vmatpush1.bf16.msra.mxu0 0
        %3088 = vmatprep.subr.bf16.mxu0 0
        %3089 = vmatpush1.bf16.msra.mxu0 0
        %3090 = vmatprep.subr.bf16.mxu0 0
        %3091 = vmatpush1.bf16.msra.mxu0 0
        %3092 = vmatprep.subr.bf16.mxu0 0
        %3093 = vmatpush1.bf16.msra.mxu0 0
        %3094 = vmatprep.subr.bf16.mxu0 0
        %3095 = vmatpush1.bf16.msra.mxu0 0
        %3096 = vmatprep.subr.bf16.mxu0 0
        %3097 = vmatpush1.bf16.msra.mxu0 0
        %3098 = vmatprep.subr.bf16.mxu0 0
        %3099 = vmatpush1.bf16.msra.mxu0 0
        %3100 = vmatprep.subr.bf16.mxu0 0
        %3101 = vmatpush1.bf16.msra.mxu0 0
        %3102 = vmatprep.subr.bf16.mxu0 0
        %3103 = vmatpush1.bf16.msra.mxu0 0
        %3104 = vmatprep.subr.bf16.mxu0 0
        %3105 = vmatpush1.bf16.msra.mxu0 0
        %3106 = vmatprep.subr.bf16.mxu0 0
        %3107 = vmatpush1.bf16.msra.mxu0 0
        %3108 = vmatprep.subr.bf16.mxu0 0
        %3109 = vmatpush1.bf16.msra.mxu0 0
        %3110 = vmatprep.mubr.bf16.mxu0 0
        %3111 = vmatmul.mubr.bf16.gmra.mrb[0].mxu0 %v3070
        %v3112 = vpop.f32.mrb[0].mxu0
        %v3113 = vadd.f32 0.0, %v3112
        %v3114 = vpop.f32.mrb[0].mxu0
        %v3115 = vadd.f32 0.0, %v3114
        %v3116 = vpop.f32.mrb[0].mxu0
        %v3117 = vadd.f32 0.0, %v3116
        %v3118 = vpop.f32.mrb[0].mxu0
        %v3119 = vadd.f32 0.0, %v3118
        %3120 = vdwg.mxu0
        %v3121 = vadd.f32 %v3052, %v3113
        %v3122 = vadd.f32 %v3053, %v3115
        %v3123 = vadd.f32 %v3054, %v3117
        %v3124 = vadd.f32 %v3055, %v3119
        %s3125 = scalar_lea.vmem %s7, 352
        %v3126 = vld [vmem:[%s3125] sm:$0xff]
        %v3127 = vld [vmem:[%s3125 + $0x8] sm:$0x77]
        %3128 = vrot.lane.b32.xlu0 %v1749, 72
        %v3129 = vpop.permute.xlu0 %3128
        %v3132 = vunpack.c.l.b16 %v3126
        %v3133 = vunpack.c.h.b16 %v3126
        %v3134 = vunpack.c.l.b16 %v3127
        %v3135 = vunpack.c.h.b16 %v3127
        %v3136 = vpack.c.b16 %v3134, %v3132
        %v3137 = vpack.c.b16 %v3135, %v3133
        %v3139 = vsel %vm1632, %v3129, 0
        %v3142 = vsel %vm1636, %v3136, 0
        %v3145 = vsel %vm1636, %v3137, 0
        %3147 = vmatprep.subr.bf16.mxu0 %v3145
        %3148 = vmatpush1.bf16.msra.mxu0 %v3142
        %3149 = vmatprep.subr.bf16.mxu0 0
        %3150 = vmatpush1.bf16.msra.mxu0 0
        %3151 = vmatprep.subr.bf16.mxu0 0
        %3152 = vmatpush1.bf16.msra.mxu0 0
        %3153 = vmatprep.subr.bf16.mxu0 0
        %3154 = vmatpush1.bf16.msra.mxu0 0
        %3155 = vmatprep.subr.bf16.mxu0 0
        %3156 = vmatpush1.bf16.msra.mxu0 0
        %3157 = vmatprep.subr.bf16.mxu0 0
        %3158 = vmatpush1.bf16.msra.mxu0 0
        %3159 = vmatprep.subr.bf16.mxu0 0
        %3160 = vmatpush1.bf16.msra.mxu0 0
        %3161 = vmatprep.subr.bf16.mxu0 0
        %3162 = vmatpush1.bf16.msra.mxu0 0
        %3163 = vmatprep.subr.bf16.mxu0 0
        %3164 = vmatpush1.bf16.msra.mxu0 0
        %3165 = vmatprep.subr.bf16.mxu0 0
        %3166 = vmatpush1.bf16.msra.mxu0 0
        %3167 = vmatprep.subr.bf16.mxu0 0
        %3168 = vmatpush1.bf16.msra.mxu0 0
        %3169 = vmatprep.subr.bf16.mxu0 0
        %3170 = vmatpush1.bf16.msra.mxu0 0
        %3171 = vmatprep.subr.bf16.mxu0 0
        %3172 = vmatpush1.bf16.msra.mxu0 0
        %3173 = vmatprep.subr.bf16.mxu0 0
        %3174 = vmatpush1.bf16.msra.mxu0 0
        %3175 = vmatprep.subr.bf16.mxu0 0
        %3176 = vmatpush1.bf16.msra.mxu0 0
        %3177 = vmatprep.subr.bf16.mxu0 0
        %3178 = vmatpush1.bf16.msra.mxu0 0
        %3179 = vmatprep.mubr.bf16.mxu0 0
        %3180 = vmatmul.mubr.bf16.gmra.mrb[0].mxu0 %v3139
        %v3181 = vpop.f32.mrb[0].mxu0
        %v3182 = vadd.f32 0.0, %v3181
        %v3183 = vpop.f32.mrb[0].mxu0
        %v3184 = vadd.f32 0.0, %v3183
        %v3185 = vpop.f32.mrb[0].mxu0
        %v3186 = vadd.f32 0.0, %v3185
        %v3187 = vpop.f32.mrb[0].mxu0
        %v3188 = vadd.f32 0.0, %v3187
        %3189 = vdwg.mxu0
        %v3190 = vadd.f32 %v3121, %v3182
        %v3191 = vadd.f32 %v3122, %v3184
        %v3192 = vadd.f32 %v3123, %v3186
        %v3193 = vadd.f32 %v3124, %v3188
        %s3194 = scalar_lea.vmem %s7, 368
        %v3195 = vld [vmem:[%s3194] sm:$0xff]
        %v3196 = vld [vmem:[%s3194 + $0x8] sm:$0x77]
        %3197 = vrot.lane.b32.xlu0 %v1819, 72
        %v3198 = vpop.permute.xlu0 %3197
        %v3201 = vunpack.c.l.b16 %v3195
        %v3202 = vunpack.c.h.b16 %v3195
        %v3203 = vunpack.c.l.b16 %v3196
        %v3204 = vunpack.c.h.b16 %v3196
        %v3205 = vpack.c.b16 %v3203, %v3201
        %v3206 = vpack.c.b16 %v3204, %v3202
        %v3208 = vsel %vm1632, %v3198, 0
        %v3211 = vsel %vm1636, %v3205, 0
        %v3214 = vsel %vm1636, %v3206, 0
        %3216 = vmatprep.subr.bf16.mxu0 %v3214
        %3217 = vmatpush1.bf16.msra.mxu0 %v3211
        %3218 = vmatprep.subr.bf16.mxu0 0
        %3219 = vmatpush1.bf16.msra.mxu0 0
        %3220 = vmatprep.subr.bf16.mxu0 0
        %3221 = vmatpush1.bf16.msra.mxu0 0
        %3222 = vmatprep.subr.bf16.mxu0 0
        %3223 = vmatpush1.bf16.msra.mxu0 0
        %3224 = vmatprep.subr.bf16.mxu0 0
        %3225 = vmatpush1.bf16.msra.mxu0 0
        %3226 = vmatprep.subr.bf16.mxu0 0
        %3227 = vmatpush1.bf16.msra.mxu0 0
        %3228 = vmatprep.subr.bf16.mxu0 0
        %3229 = vmatpush1.bf16.msra.mxu0 0
        %3230 = vmatprep.subr.bf16.mxu0 0
        %3231 = vmatpush1.bf16.msra.mxu0 0
        %3232 = vmatprep.subr.bf16.mxu0 0
        %3233 = vmatpush1.bf16.msra.mxu0 0
        %3234 = vmatprep.subr.bf16.mxu0 0
        %3235 = vmatpush1.bf16.msra.mxu0 0
        %3236 = vmatprep.subr.bf16.mxu0 0
        %3237 = vmatpush1.bf16.msra.mxu0 0
        %3238 = vmatprep.subr.bf16.mxu0 0
        %3239 = vmatpush1.bf16.msra.mxu0 0
        %3240 = vmatprep.subr.bf16.mxu0 0
        %3241 = vmatpush1.bf16.msra.mxu0 0
        %3242 = vmatprep.subr.bf16.mxu0 0
        %3243 = vmatpush1.bf16.msra.mxu0 0
        %3244 = vmatprep.subr.bf16.mxu0 0
        %3245 = vmatpush1.bf16.msra.mxu0 0
        %3246 = vmatprep.subr.bf16.mxu0 0
        %3247 = vmatpush1.bf16.msra.mxu0 0
        %3248 = vmatprep.mubr.bf16.mxu0 0
        %3249 = vmatmul.mubr.bf16.gmra.mrb[0].mxu0 %v3208
        %v3250 = vpop.f32.mrb[0].mxu0
        %v3251 = vadd.f32 0.0, %v3250
        %v3252 = vpop.f32.mrb[0].mxu0
        %v3253 = vadd.f32 0.0, %v3252
        %v3254 = vpop.f32.mrb[0].mxu0
        %v3255 = vadd.f32 0.0, %v3254
        %v3256 = vpop.f32.mrb[0].mxu0
        %v3257 = vadd.f32 0.0, %v3256
        %3258 = vdwg.mxu0
        %v3259 = vadd.f32 %v3190, %v3251
        %v3260 = vadd.f32 %v3191, %v3253
        %v3261 = vadd.f32 %v3192, %v3255
        %v3262 = vadd.f32 %v3193, %v3257
        %s3263 = scalar_lea.vmem %s7, 384
        %v3264 = vld [vmem:[%s3263] sm:$0xff]
        %v3265 = vld [vmem:[%s3263 + $0x8] sm:$0x77]
        %3266 = vrot.lane.b32.xlu0 %v1887, 72
        %v3267 = vpop.permute.xlu0 %3266
        %v3270 = vunpack.c.l.b16 %v3264
        %v3271 = vunpack.c.h.b16 %v3264
        %v3272 = vunpack.c.l.b16 %v3265
        %v3273 = vunpack.c.h.b16 %v3265
        %v3274 = vpack.c.b16 %v3272, %v3270
        %v3275 = vpack.c.b16 %v3273, %v3271
        %v3277 = vsel %vm1632, %v3267, 0
        %v3280 = vsel %vm1636, %v3274, 0
        %v3283 = vsel %vm1636, %v3275, 0
        %3285 = vmatprep.subr.bf16.mxu0 %v3283
        %3286 = vmatpush1.bf16.msra.mxu0 %v3280
        %3287 = vmatprep.subr.bf16.mxu0 0
        %3288 = vmatpush1.bf16.msra.mxu0 0
        %3289 = vmatprep.subr.bf16.mxu0 0
        %3290 = vmatpush1.bf16.msra.mxu0 0
        %3291 = vmatprep.subr.bf16.mxu0 0
        %3292 = vmatpush1.bf16.msra.mxu0 0
        %3293 = vmatprep.subr.bf16.mxu0 0
        %3294 = vmatpush1.bf16.msra.mxu0 0
        %3295 = vmatprep.subr.bf16.mxu0 0
        %3296 = vmatpush1.bf16.msra.mxu0 0
        %3297 = vmatprep.subr.bf16.mxu0 0
        %3298 = vmatpush1.bf16.msra.mxu0 0
        %3299 = vmatprep.subr.bf16.mxu0 0
        %3300 = vmatpush1.bf16.msra.mxu0 0
        %3301 = vmatprep.subr.bf16.mxu0 0
        %3302 = vmatpush1.bf16.msra.mxu0 0
        %3303 = vmatprep.subr.bf16.mxu0 0
        %3304 = vmatpush1.bf16.msra.mxu0 0
        %3305 = vmatprep.subr.bf16.mxu0 0
        %3306 = vmatpush1.bf16.msra.mxu0 0
        %3307 = vmatprep.subr.bf16.mxu0 0
        %3308 = vmatpush1.bf16.msra.mxu0 0
        %3309 = vmatprep.subr.bf16.mxu0 0
        %3310 = vmatpush1.bf16.msra.mxu0 0
        %3311 = vmatprep.subr.bf16.mxu0 0
        %3312 = vmatpush1.bf16.msra.mxu0 0
        %3313 = vmatprep.subr.bf16.mxu0 0
        %3314 = vmatpush1.bf16.msra.mxu0 0
        %3315 = vmatprep.subr.bf16.mxu0 0
        %3316 = vmatpush1.bf16.msra.mxu0 0
        %3317 = vmatprep.mubr.bf16.mxu0 0
        %3318 = vmatmul.mubr.bf16.gmra.mrb[0].mxu0 %v3277
        %v3319 = vpop.f32.mrb[0].mxu0
        %v3320 = vadd.f32 0.0, %v3319
        %v3321 = vpop.f32.mrb[0].mxu0
        %v3322 = vadd.f32 0.0, %v3321
        %v3323 = vpop.f32.mrb[0].mxu0
        %v3324 = vadd.f32 0.0, %v3323
        %v3325 = vpop.f32.mrb[0].mxu0
        %v3326 = vadd.f32 0.0, %v3325
        %3327 = vdwg.mxu0
        %v3328 = vadd.f32 %v3259, %v3320
        %v3329 = vadd.f32 %v3260, %v3322
        %v3330 = vadd.f32 %v3261, %v3324
        %v3331 = vadd.f32 %v3262, %v3326
        %s3332 = scalar_lea.vmem %s7, 400
        %v3333 = vld [vmem:[%s3332] sm:$0xff]
        %v3334 = vld [vmem:[%s3332 + $0x8] sm:$0x77]
        %3335 = vrot.lane.b32.xlu0 %v1611, 58
        %v3336 = vpop.permute.xlu0 %3335
        %v3339 = vunpack.c.l.b16 %v3333
        %v3340 = vunpack.c.h.b16 %v3333
        %v3341 = vunpack.c.l.b16 %v3334
        %v3342 = vunpack.c.h.b16 %v3334
        %v3343 = vpack.c.b16 %v3341, %v3339
        %v3344 = vpack.c.b16 %v3342, %v3340
        %v3346 = vsel %vm1632, %v3336, 0
        %v3349 = vsel %vm1636, %v3343, 0
        %v3352 = vsel %vm1636, %v3344, 0
        %3354 = vmatprep.subr.bf16.mxu0 %v3352
        %3355 = vmatpush1.bf16.msra.mxu0 %v3349
        %3356 = vmatprep.subr.bf16.mxu0 0
        %3357 = vmatpush1.bf16.msra.mxu0 0
        %3358 = vmatprep.subr.bf16.mxu0 0
        %3359 = vmatpush1.bf16.msra.mxu0 0
        %3360 = vmatprep.subr.bf16.mxu0 0
        %3361 = vmatpush1.bf16.msra.mxu0 0
        %3362 = vmatprep.subr.bf16.mxu0 0
        %3363 = vmatpush1.bf16.msra.mxu0 0
        %3364 = vmatprep.subr.bf16.mxu0 0
        %3365 = vmatpush1.bf16.msra.mxu0 0
        %3366 = vmatprep.subr.bf16.mxu0 0
        %3367 = vmatpush1.bf16.msra.mxu0 0
        %3368 = vmatprep.subr.bf16.mxu0 0
        %3369 = vmatpush1.bf16.msra.mxu0 0
        %3370 = vmatprep.subr.bf16.mxu0 0
        %3371 = vmatpush1.bf16.msra.mxu0 0
        %3372 = vmatprep.subr.bf16.mxu0 0
        %3373 = vmatpush1.bf16.msra.mxu0 0
        %3374 = vmatprep.subr.bf16.mxu0 0
        %3375 = vmatpush1.bf16.msra.mxu0 0
        %3376 = vmatprep.subr.bf16.mxu0 0
        %3377 = vmatpush1.bf16.msra.mxu0 0
        %3378 = vmatprep.subr.bf16.mxu0 0
        %3379 = vmatpush1.bf16.msra.mxu0 0
        %3380 = vmatprep.subr.bf16.mxu0 0
        %3381 = vmatpush1.bf16.msra.mxu0 0
        %3382 = vmatprep.subr.bf16.mxu0 0
        %3383 = vmatpush1.bf16.msra.mxu0 0
        %3384 = vmatprep.subr.bf16.mxu0 0
        %3385 = vmatpush1.bf16.msra.mxu0 0
        %3386 = vmatprep.mubr.bf16.mxu0 0
        %3387 = vmatmul.mubr.bf16.gmra.mrb[0].mxu0 %v3346
        %v3388 = vpop.f32.mrb[0].mxu0
        %v3389 = vadd.f32 0.0, %v3388
        %v3390 = vpop.f32.mrb[0].mxu0
        %v3391 = vadd.f32 0.0, %v3390
        %v3392 = vpop.f32.mrb[0].mxu0
        %v3393 = vadd.f32 0.0, %v3392
        %v3394 = vpop.f32.mrb[0].mxu0
        %v3395 = vadd.f32 0.0, %v3394
        %3396 = vdwg.mxu0
        %v3397 = vadd.f32 %v3328, %v3389
        %v3398 = vadd.f32 %v3329, %v3391
        %v3399 = vadd.f32 %v3330, %v3393
        %v3400 = vadd.f32 %v3331, %v3395
        %s3401 = scalar_lea.vmem %s7, 416
        %v3402 = vld [vmem:[%s3401] sm:$0xff]
        %v3403 = vld [vmem:[%s3401 + $0x8] sm:$0x77]
        %3404 = vrot.lane.b32.xlu0 %v1623, 58
        %v3405 = vpop.permute.xlu0 %3404
        %v3408 = vunpack.c.l.b16 %v3402
        %v3409 = vunpack.c.h.b16 %v3402
        %v3410 = vunpack.c.l.b16 %v3403
        %v3411 = vunpack.c.h.b16 %v3403
        %v3412 = vpack.c.b16 %v3410, %v3408
        %v3413 = vpack.c.b16 %v3411, %v3409
        %v3415 = vsel %vm1632, %v3405, 0
        %v3418 = vsel %vm1636, %v3412, 0
        %v3421 = vsel %vm1636, %v3413, 0
        %3423 = vmatprep.subr.bf16.mxu0 %v3421
        %3424 = vmatpush1.bf16.msra.mxu0 %v3418
        %3425 = vmatprep.subr.bf16.mxu0 0
        %3426 = vmatpush1.bf16.msra.mxu0 0
        %3427 = vmatprep.subr.bf16.mxu0 0
        %3428 = vmatpush1.bf16.msra.mxu0 0
        %3429 = vmatprep.subr.bf16.mxu0 0
        %3430 = vmatpush1.bf16.msra.mxu0 0
        %3431 = vmatprep.subr.bf16.mxu0 0
        %3432 = vmatpush1.bf16.msra.mxu0 0
        %3433 = vmatprep.subr.bf16.mxu0 0
        %3434 = vmatpush1.bf16.msra.mxu0 0
        %3435 = vmatprep.subr.bf16.mxu0 0
        %3436 = vmatpush1.bf16.msra.mxu0 0
        %3437 = vmatprep.subr.bf16.mxu0 0
        %3438 = vmatpush1.bf16.msra.mxu0 0
        %3439 = vmatprep.subr.bf16.mxu0 0
        %3440 = vmatpush1.bf16.msra.mxu0 0
        %3441 = vmatprep.subr.bf16.mxu0 0
        %3442 = vmatpush1.bf16.msra.mxu0 0
        %3443 = vmatprep.subr.bf16.mxu0 0
        %3444 = vmatpush1.bf16.msra.mxu0 0
        %3445 = vmatprep.subr.bf16.mxu0 0
        %3446 = vmatpush1.bf16.msra.mxu0 0
        %3447 = vmatprep.subr.bf16.mxu0 0
        %3448 = vmatpush1.bf16.msra.mxu0 0
        %3449 = vmatprep.subr.bf16.mxu0 0
        %3450 = vmatpush1.bf16.msra.mxu0 0
        %3451 = vmatprep.subr.bf16.mxu0 0
        %3452 = vmatpush1.bf16.msra.mxu0 0
        %3453 = vmatprep.subr.bf16.mxu0 0
        %3454 = vmatpush1.bf16.msra.mxu0 0
        %3455 = vmatprep.mubr.bf16.mxu0 0
        %3456 = vmatmul.mubr.bf16.gmra.mrb[0].mxu0 %v3415
        %v3457 = vpop.f32.mrb[0].mxu0
        %v3458 = vadd.f32 0.0, %v3457
        %v3459 = vpop.f32.mrb[0].mxu0
        %v3460 = vadd.f32 0.0, %v3459
        %v3461 = vpop.f32.mrb[0].mxu0
        %v3462 = vadd.f32 0.0, %v3461
        %v3463 = vpop.f32.mrb[0].mxu0
        %v3464 = vadd.f32 0.0, %v3463
        %3465 = vdwg.mxu0
        %v3466 = vadd.f32 %v3397, %v3458
        %v3467 = vadd.f32 %v3398, %v3460
        %v3468 = vadd.f32 %v3399, %v3462
        %v3469 = vadd.f32 %v3400, %v3464
        %s3470 = scalar_lea.vmem %s7, 432
        %v3471 = vld [vmem:[%s3470] sm:$0xff]
        %v3472 = vld [vmem:[%s3470 + $0x8] sm:$0x77]
        %3473 = vrot.lane.b32.xlu0 %v1749, 58
        %v3474 = vpop.permute.xlu0 %3473
        %v3477 = vunpack.c.l.b16 %v3471
        %v3478 = vunpack.c.h.b16 %v3471
        %v3479 = vunpack.c.l.b16 %v3472
        %v3480 = vunpack.c.h.b16 %v3472
        %v3481 = vpack.c.b16 %v3479, %v3477
        %v3482 = vpack.c.b16 %v3480, %v3478
        %v3484 = vsel %vm1632, %v3474, 0
        %v3487 = vsel %vm1636, %v3481, 0
        %v3490 = vsel %vm1636, %v3482, 0
        %3492 = vmatprep.subr.bf16.mxu0 %v3490
        %3493 = vmatpush1.bf16.msra.mxu0 %v3487
        %3494 = vmatprep.subr.bf16.mxu0 0
        %3495 = vmatpush1.bf16.msra.mxu0 0
        %3496 = vmatprep.subr.bf16.mxu0 0
        %3497 = vmatpush1.bf16.msra.mxu0 0
        %3498 = vmatprep.subr.bf16.mxu0 0
        %3499 = vmatpush1.bf16.msra.mxu0 0
        %3500 = vmatprep.subr.bf16.mxu0 0
        %3501 = vmatpush1.bf16.msra.mxu0 0
        %3502 = vmatprep.subr.bf16.mxu0 0
        %3503 = vmatpush1.bf16.msra.mxu0 0
        %3504 = vmatprep.subr.bf16.mxu0 0
        %3505 = vmatpush1.bf16.msra.mxu0 0
        %3506 = vmatprep.subr.bf16.mxu0 0
        %3507 = vmatpush1.bf16.msra.mxu0 0
        %3508 = vmatprep.subr.bf16.mxu0 0
        %3509 = vmatpush1.bf16.msra.mxu0 0
        %3510 = vmatprep.subr.bf16.mxu0 0
        %3511 = vmatpush1.bf16.msra.mxu0 0
        %3512 = vmatprep.subr.bf16.mxu0 0
        %3513 = vmatpush1.bf16.msra.mxu0 0
        %3514 = vmatprep.subr.bf16.mxu0 0
        %3515 = vmatpush1.bf16.msra.mxu0 0
        %3516 = vmatprep.subr.bf16.mxu0 0
        %3517 = vmatpush1.bf16.msra.mxu0 0
        %3518 = vmatprep.subr.bf16.mxu0 0
        %3519 = vmatpush1.bf16.msra.mxu0 0
        %3520 = vmatprep.subr.bf16.mxu0 0
        %3521 = vmatpush1.bf16.msra.mxu0 0
        %3522 = vmatprep.subr.bf16.mxu0 0
        %3523 = vmatpush1.bf16.msra.mxu0 0
        %3524 = vmatprep.mubr.bf16.mxu0 0
        %3525 = vmatmul.mubr.bf16.gmra.mrb[0].mxu0 %v3484
        %v3526 = vpop.f32.mrb[0].mxu0
        %v3527 = vadd.f32 0.0, %v3526
        %v3528 = vpop.f32.mrb[0].mxu0
        %v3529 = vadd.f32 0.0, %v3528
        %v3530 = vpop.f32.mrb[0].mxu0
        %v3531 = vadd.f32 0.0, %v3530
        %v3532 = vpop.f32.mrb[0].mxu0
        %v3533 = vadd.f32 0.0, %v3532
        %3534 = vdwg.mxu0
        %v3535 = vadd.f32 %v3466, %v3527
        %v3536 = vadd.f32 %v3467, %v3529
        %v3537 = vadd.f32 %v3468, %v3531
        %v3538 = vadd.f32 %v3469, %v3533
        %s3539 = scalar_lea.vmem %s7, 448
        %v3540 = vld [vmem:[%s3539] sm:$0xff]
        %v3541 = vld [vmem:[%s3539 + $0x8] sm:$0x77]
        %3542 = vrot.lane.b32.xlu0 %v1819, 58
        %v3543 = vpop.permute.xlu0 %3542
        %v3546 = vunpack.c.l.b16 %v3540
        %v3547 = vunpack.c.h.b16 %v3540
        %v3548 = vunpack.c.l.b16 %v3541
        %v3549 = vunpack.c.h.b16 %v3541
        %v3550 = vpack.c.b16 %v3548, %v3546
        %v3551 = vpack.c.b16 %v3549, %v3547
        %v3553 = vsel %vm1632, %v3543, 0
        %v3556 = vsel %vm1636, %v3550, 0
        %v3559 = vsel %vm1636, %v3551, 0
        %3561 = vmatprep.subr.bf16.mxu0 %v3559
        %3562 = vmatpush1.bf16.msra.mxu0 %v3556
        %3563 = vmatprep.subr.bf16.mxu0 0
        %3564 = vmatpush1.bf16.msra.mxu0 0
        %3565 = vmatprep.subr.bf16.mxu0 0
        %3566 = vmatpush1.bf16.msra.mxu0 0
        %3567 = vmatprep.subr.bf16.mxu0 0
        %3568 = vmatpush1.bf16.msra.mxu0 0
        %3569 = vmatprep.subr.bf16.mxu0 0
        %3570 = vmatpush1.bf16.msra.mxu0 0
        %3571 = vmatprep.subr.bf16.mxu0 0
        %3572 = vmatpush1.bf16.msra.mxu0 0
        %3573 = vmatprep.subr.bf16.mxu0 0
        %3574 = vmatpush1.bf16.msra.mxu0 0
        %3575 = vmatprep.subr.bf16.mxu0 0
        %3576 = vmatpush1.bf16.msra.mxu0 0
        %3577 = vmatprep.subr.bf16.mxu0 0
        %3578 = vmatpush1.bf16.msra.mxu0 0
        %3579 = vmatprep.subr.bf16.mxu0 0
        %3580 = vmatpush1.bf16.msra.mxu0 0
        %3581 = vmatprep.subr.bf16.mxu0 0
        %3582 = vmatpush1.bf16.msra.mxu0 0
        %3583 = vmatprep.subr.bf16.mxu0 0
        %3584 = vmatpush1.bf16.msra.mxu0 0
        %3585 = vmatprep.subr.bf16.mxu0 0
        %3586 = vmatpush1.bf16.msra.mxu0 0
        %3587 = vmatprep.subr.bf16.mxu0 0
        %3588 = vmatpush1.bf16.msra.mxu0 0
        %3589 = vmatprep.subr.bf16.mxu0 0
        %3590 = vmatpush1.bf16.msra.mxu0 0
        %3591 = vmatprep.subr.bf16.mxu0 0
        %3592 = vmatpush1.bf16.msra.mxu0 0
        %3593 = vmatprep.mubr.bf16.mxu0 0
        %3594 = vmatmul.mubr.bf16.gmra.mrb[0].mxu0 %v3553
        %v3595 = vpop.f32.mrb[0].mxu0
        %v3596 = vadd.f32 0.0, %v3595
        %v3597 = vpop.f32.mrb[0].mxu0
        %v3598 = vadd.f32 0.0, %v3597
        %v3599 = vpop.f32.mrb[0].mxu0
        %v3600 = vadd.f32 0.0, %v3599
        %v3601 = vpop.f32.mrb[0].mxu0
        %v3602 = vadd.f32 0.0, %v3601
        %3603 = vdwg.mxu0
        %v3604 = vadd.f32 %v3535, %v3596
        %v3605 = vadd.f32 %v3536, %v3598
        %v3606 = vadd.f32 %v3537, %v3600
        %v3607 = vadd.f32 %v3538, %v3602
        %s3608 = scalar_lea.vmem %s7, 464
        %v3609 = vld [vmem:[%s3608] sm:$0xff]
        %v3610 = vld [vmem:[%s3608 + $0x8] sm:$0x77]
        %3611 = vrot.lane.b32.xlu0 %v1887, 58
        %v3612 = vpop.permute.xlu0 %3611
        %v3615 = vunpack.c.l.b16 %v3609
        %v3616 = vunpack.c.h.b16 %v3609
        %v3617 = vunpack.c.l.b16 %v3610
        %v3618 = vunpack.c.h.b16 %v3610
        %v3619 = vpack.c.b16 %v3617, %v3615
        %v3620 = vpack.c.b16 %v3618, %v3616
        %v3622 = vsel %vm1632, %v3612, 0
        %v3625 = vsel %vm1636, %v3619, 0
        %v3628 = vsel %vm1636, %v3620, 0
        %3630 = vmatprep.subr.bf16.mxu0 %v3628
        %3631 = vmatpush1.bf16.msra.mxu0 %v3625
        %3632 = vmatprep.subr.bf16.mxu0 0
        %3633 = vmatpush1.bf16.msra.mxu0 0
        %3634 = vmatprep.subr.bf16.mxu0 0
        %3635 = vmatpush1.bf16.msra.mxu0 0
        %3636 = vmatprep.subr.bf16.mxu0 0
        %3637 = vmatpush1.bf16.msra.mxu0 0
        %3638 = vmatprep.subr.bf16.mxu0 0
        %3639 = vmatpush1.bf16.msra.mxu0 0
        %3640 = vmatprep.subr.bf16.mxu0 0
        %3641 = vmatpush1.bf16.msra.mxu0 0
        %3642 = vmatprep.subr.bf16.mxu0 0
        %3643 = vmatpush1.bf16.msra.mxu0 0
        %3644 = vmatprep.subr.bf16.mxu0 0
        %3645 = vmatpush1.bf16.msra.mxu0 0
        %3646 = vmatprep.subr.bf16.mxu0 0
        %3647 = vmatpush1.bf16.msra.mxu0 0
        %3648 = vmatprep.subr.bf16.mxu0 0
        %3649 = vmatpush1.bf16.msra.mxu0 0
        %3650 = vmatprep.subr.bf16.mxu0 0
        %3651 = vmatpush1.bf16.msra.mxu0 0
        %3652 = vmatprep.subr.bf16.mxu0 0
        %3653 = vmatpush1.bf16.msra.mxu0 0
        %3654 = vmatprep.subr.bf16.mxu0 0
        %3655 = vmatpush1.bf16.msra.mxu0 0
        %3656 = vmatprep.subr.bf16.mxu0 0
        %3657 = vmatpush1.bf16.msra.mxu0 0
        %3658 = vmatprep.subr.bf16.mxu0 0
        %3659 = vmatpush1.bf16.msra.mxu0 0
        %3660 = vmatprep.subr.bf16.mxu0 0
        %3661 = vmatpush1.bf16.msra.mxu0 0
        %3662 = vmatprep.mubr.bf16.mxu0 0
        %3663 = vmatmul.mubr.bf16.gmra.mrb[0].mxu0 %v3622
        %v3664 = vpop.f32.mrb[0].mxu0
        %v3665 = vadd.f32 0.0, %v3664
        %v3666 = vpop.f32.mrb[0].mxu0
        %v3667 = vadd.f32 0.0, %v3666
        %v3668 = vpop.f32.mrb[0].mxu0
        %v3669 = vadd.f32 0.0, %v3668
        %v3670 = vpop.f32.mrb[0].mxu0
        %v3671 = vadd.f32 0.0, %v3670
        %3672 = vdwg.mxu0
        %v3673 = vadd.f32 %v3604, %v3665
        %v3674 = vadd.f32 %v3605, %v3667
        %v3675 = vadd.f32 %v3606, %v3669
        %v3676 = vadd.f32 %v3607, %v3671
        %v3677 = vld [vmem:[#allocation11] sm:$0x1f]
        %vm3678 = vcmask 80896
        %v3680 = vsel %vm3678, %v3677, 0
        %vm3682 = vcmask 1041408
        %v3684 = vsel %vm3682, %v3675, 0
        %v3687 = vsel %vm3682, %v3676, 0
        %3689 = vmatprep.subr.mxu0 %v3674
        %3690 = vmatpush1.msra.mxu0 %v3673
        %3691 = vmatprep.subr.mxu0 %v3687
        %3692 = vmatpush1.msra.mxu0 %v3684
        %3693 = vmatprep.subr.mxu0 0.0
        %3694 = vmatpush1.msra.mxu0 0.0
        %3695 = vmatprep.subr.mxu0 0.0
        %3696 = vmatpush1.msra.mxu0 0.0
        %3697 = vmatprep.subr.mxu0 0.0
        %3698 = vmatpush1.msra.mxu0 0.0
        %3699 = vmatprep.subr.mxu0 0.0
        %3700 = vmatpush1.msra.mxu0 0.0
        %3701 = vmatprep.subr.mxu0 0.0
        %3702 = vmatpush1.msra.mxu0 0.0
        %3703 = vmatprep.subr.mxu0 0.0
        %3704 = vmatpush1.msra.mxu0 0.0
        %3705 = vmatprep.subr.mxu0 0.0
        %3706 = vmatpush1.msra.mxu0 0.0
        %3707 = vmatprep.subr.mxu0 0.0
        %3708 = vmatpush1.msra.mxu0 0.0
        %3709 = vmatprep.subr.mxu0 0.0
        %3710 = vmatpush1.msra.mxu0 0.0
        %3711 = vmatprep.subr.mxu0 0.0
        %3712 = vmatpush1.msra.mxu0 0.0
        %3713 = vmatprep.subr.mxu0 0.0
        %3714 = vmatpush1.msra.mxu0 0.0
        %3715 = vmatprep.subr.mxu0 0.0
        %3716 = vmatpush1.msra.mxu0 0.0
        %3717 = vmatprep.subr.mxu0 0.0
        %3718 = vmatpush1.msra.mxu0 0.0
        %3719 = vmatprep.subr.mxu0 0.0
        %3720 = vmatpush1.msra.mxu0 0.0
        %3721 = vmatprep.subr.mxu0 0.0
        %3722 = vmatpush1.msra.mxu0 0.0
        %3723 = vmatprep.subr.mxu0 0.0
        %3724 = vmatpush1.msra.mxu0 0.0
        %3725 = vmatprep.subr.mxu0 0.0
        %3726 = vmatpush1.msra.mxu0 0.0
        %3727 = vmatprep.subr.mxu0 0.0
        %3728 = vmatpush1.msra.mxu0 0.0
        %3729 = vmatprep.subr.mxu0 0.0
        %3730 = vmatpush1.msra.mxu0 0.0
        %3731 = vmatprep.subr.mxu0 0.0
        %3732 = vmatpush1.msra.mxu0 0.0
        %3733 = vmatprep.subr.mxu0 0.0
        %3734 = vmatpush1.msra.mxu0 0.0
        %3735 = vmatprep.subr.mxu0 0.0
        %3736 = vmatpush1.msra.mxu0 0.0
        %3737 = vmatprep.subr.mxu0 0.0
        %3738 = vmatpush1.msra.mxu0 0.0
        %3739 = vmatprep.subr.mxu0 0.0
        %3740 = vmatpush1.msra.mxu0 0.0
        %3741 = vmatprep.subr.mxu0 0.0
        %3742 = vmatpush1.msra.mxu0 0.0
        %3743 = vmatprep.subr.mxu0 0.0
        %3744 = vmatpush1.msra.mxu0 0.0
        %3745 = vmatprep.subr.mxu0 0.0
        %3746 = vmatpush1.msra.mxu0 0.0
        %3747 = vmatprep.subr.mxu0 0.0
        %3748 = vmatpush1.msra.mxu0 0.0
        %3749 = vmatprep.subr.mxu0 0.0
        %3750 = vmatpush1.msra.mxu0 0.0
        %3751 = vmatprep.subr.mxu0 0.0
        %3752 = vmatpush1.msra.mxu0 0.0
        %3753 = vmatprep.mubr.f32.mxu0 0.0
        %3754 = vmatmul.mubr.f32.gmra.mrb[0].mxu0 %v3680
        %v3755 = vpop.f32.mrb[0].mxu0
        %v3756 = vadd.f32 0.0, %v3755
        %v3757 = vpop.f32.mrb[0].mxu0
        %v3758 = vadd.f32 0.0, %v3757
        %3759 = vdwg.mxu0
        %v3760 = vld [vmem:[#allocation13] sm:$0x1f]
        %v3762 = vsel %vm3678, %v3760, 0
        %3764 = vmatprep.subr.mxu0 %v3674
        %3765 = vmatpush1.msra.mxu0 %v3673
        %3766 = vmatprep.subr.mxu0 %v3687
        %3767 = vmatpush1.msra.mxu0 %v3684
        %3768 = vmatprep.subr.mxu0 0.0
        %3769 = vmatpush1.msra.mxu0 0.0
        %3770 = vmatprep.subr.mxu0 0.0
        %3771 = vmatpush1.msra.mxu0 0.0
        %3772 = vmatprep.subr.mxu0 0.0
        %3773 = vmatpush1.msra.mxu0 0.0
        %3774 = vmatprep.subr.mxu0 0.0
        %3775 = vmatpush1.msra.mxu0 0.0
        %3776 = vmatprep.subr.mxu0 0.0
        %3777 = vmatpush1.msra.mxu0 0.0
        %3778 = vmatprep.subr.mxu0 0.0
        %3779 = vmatpush1.msra.mxu0 0.0
        %3780 = vmatprep.subr.mxu0 0.0
        %3781 = vmatpush1.msra.mxu0 0.0
        %3782 = vmatprep.subr.mxu0 0.0
        %3783 = vmatpush1.msra.mxu0 0.0
        %3784 = vmatprep.subr.mxu0 0.0
        %3785 = vmatpush1.msra.mxu0 0.0
        %3786 = vmatprep.subr.mxu0 0.0
        %3787 = vmatpush1.msra.mxu0 0.0
        %3788 = vmatprep.subr.mxu0 0.0
        %3789 = vmatpush1.msra.mxu0 0.0
        %3790 = vmatprep.subr.mxu0 0.0
        %3791 = vmatpush1.msra.mxu0 0.0
        %3792 = vmatprep.subr.mxu0 0.0
        %3793 = vmatpush1.msra.mxu0 0.0
        %3794 = vmatprep.subr.mxu0 0.0
        %3795 = vmatpush1.msra.mxu0 0.0
        %3796 = vmatprep.subr.mxu0 0.0
        %3797 = vmatpush1.msra.mxu0 0.0
        %3798 = vmatprep.subr.mxu0 0.0
        %3799 = vmatpush1.msra.mxu0 0.0
        %3800 = vmatprep.subr.mxu0 0.0
        %3801 = vmatpush1.msra.mxu0 0.0
        %3802 = vmatprep.subr.mxu0 0.0
        %3803 = vmatpush1.msra.mxu0 0.0
        %3804 = vmatprep.subr.mxu0 0.0
        %3805 = vmatpush1.msra.mxu0 0.0
        %3806 = vmatprep.subr.mxu0 0.0
        %3807 = vmatpush1.msra.mxu0 0.0
        %3808 = vmatprep.subr.mxu0 0.0
        %3809 = vmatpush1.msra.mxu0 0.0
        %3810 = vmatprep.subr.mxu0 0.0
        %3811 = vmatpush1.msra.mxu0 0.0
        %3812 = vmatprep.subr.mxu0 0.0
        %3813 = vmatpush1.msra.mxu0 0.0
        %3814 = vmatprep.subr.mxu0 0.0
        %3815 = vmatpush1.msra.mxu0 0.0
        %3816 = vmatprep.subr.mxu0 0.0
        %3817 = vmatpush1.msra.mxu0 0.0
        %3818 = vmatprep.subr.mxu0 0.0
        %3819 = vmatpush1.msra.mxu0 0.0
        %3820 = vmatprep.subr.mxu0 0.0
        %3821 = vmatpush1.msra.mxu0 0.0
        %3822 = vmatprep.subr.mxu0 0.0
        %3823 = vmatpush1.msra.mxu0 0.0
        %3824 = vmatprep.subr.mxu0 0.0
        %3825 = vmatpush1.msra.mxu0 0.0
        %3826 = vmatprep.subr.mxu0 0.0
        %3827 = vmatpush1.msra.mxu0 0.0
        %3828 = vmatprep.mubr.f32.mxu0 0.0
        %3829 = vmatmul.mubr.f32.gmra.mrb[0].mxu0 %v3762
        %v3830 = vpop.f32.mrb[0].mxu0
        %v3831 = vadd.f32 0.0, %v3830
        %v3832 = vpop.f32.mrb[0].mxu0
        %v3833 = vadd.f32 0.0, %v3832
        %3834 = vdwg.mxu0
        %v3835 = vmax.f32 %v3756, %v3831
        %v3836 = vmax.f32 %v3758, %v3833
        %v3837 = vld [vmem:[#allocation14] sm:$0xff]
        %v3838 = vld [vmem:[#allocation14 + $0x8] sm:$0xff]
        %v3839 = vld [vmem:[#allocation14 + $0x10] sm:$0xff]
        %v3840 = vld [vmem:[#allocation14 + $0x18] sm:$0xff]
        %v3841 = vld [vmem:[#allocation14 + $0x20] sm:$0xff]
        %v3842 = vld [vmem:[#allocation14 + $0x28] sm:$0xff]
        %v3843 = vld [vmem:[#allocation14 + $0x30] sm:$0xff]
        %v3844 = vld [vmem:[#allocation14 + $0x38] sm:$0xff]
        %v3845 = vld [vmem:[#allocation14 + $0x40] sm:$0xff]
        %v3846 = vld [vmem:[#allocation14 + $0x48] sm:$0xff]
        %v3847 = vld [vmem:[#allocation14 + $0x50] sm:$0xff]
        %v3848 = vld [vmem:[#allocation14 + $0x58] sm:$0xff]
        %v3849 = vld [vmem:[#allocation14 + $0x60] sm:$0xff]
        %v3850 = vld [vmem:[#allocation14 + $0x68] sm:$0xff]
        %v3851 = vld [vmem:[#allocation14 + $0x70] sm:$0xff]
        %v3852 = vld [vmem:[#allocation14 + $0x78] sm:$0xff]
        %v3853 = vld [vmem:[#allocation14 + $0x80] sm:$0xff]
        %v3854 = vld [vmem:[#allocation14 + $0x88] sm:$0xff]
        %v3855 = vld [vmem:[#allocation14 + $0x90] sm:$0xff]
        %v3856 = vld [vmem:[#allocation14 + $0x98] sm:$0xff]
        %v3858 = vsel %vm784, %v3836, 0
        %3860 = vmatprep.subr.mxu0 0.0
        %3861 = vmatpush1.msra.mxu0 %v3837
        %3862 = vmatprep.subr.mxu0 0.0
        %3863 = vmatpush1.msra.mxu0 %v3838
        %3864 = vmatprep.subr.mxu0 0.0
        %3865 = vmatpush1.msra.mxu0 %v3839
        %3866 = vmatprep.subr.mxu0 0.0
        %3867 = vmatpush1.msra.mxu0 %v3840
        %3868 = vmatprep.subr.mxu0 0.0
        %3869 = vmatpush1.msra.mxu0 %v3841
        %3870 = vmatprep.subr.mxu0 0.0
        %3871 = vmatpush1.msra.mxu0 %v3842
        %3872 = vmatprep.subr.mxu0 0.0
        %3873 = vmatpush1.msra.mxu0 %v3843
        %3874 = vmatprep.subr.mxu0 0.0
        %3875 = vmatpush1.msra.mxu0 %v3844
        %3876 = vmatprep.subr.mxu0 0.0
        %3877 = vmatpush1.msra.mxu0 %v3845
        %3878 = vmatprep.subr.mxu0 0.0
        %3879 = vmatpush1.msra.mxu0 %v3846
        %3880 = vmatprep.subr.mxu0 0.0
        %3881 = vmatpush1.msra.mxu0 %v3847
        %3882 = vmatprep.subr.mxu0 0.0
        %3883 = vmatpush1.msra.mxu0 %v3848
        %3884 = vmatprep.subr.mxu0 0.0
        %3885 = vmatpush1.msra.mxu0 %v3849
        %3886 = vmatprep.subr.mxu0 0.0
        %3887 = vmatpush1.msra.mxu0 %v3850
        %3888 = vmatprep.subr.mxu0 0.0
        %3889 = vmatpush1.msra.mxu0 %v3851
        %3890 = vmatprep.subr.mxu0 0.0
        %3891 = vmatpush1.msra.mxu0 %v3852
        %3892 = vmatprep.subr.mxu0 0.0
        %3893 = vmatpush1.msra.mxu0 %v3853
        %3894 = vmatprep.subr.mxu0 0.0
        %3895 = vmatpush1.msra.mxu0 %v3854
        %3896 = vmatprep.subr.mxu0 0.0
        %3897 = vmatpush1.msra.mxu0 %v3855
        %3898 = vmatprep.subr.mxu0 0.0
        %3899 = vmatpush1.msra.mxu0 %v3856
        %3900 = vmatprep.subr.mxu0 0.0
        %3901 = vmatpush1.msra.mxu0 0.0
        %3902 = vmatprep.subr.mxu0 0.0
        %3903 = vmatpush1.msra.mxu0 0.0
        %3904 = vmatprep.subr.mxu0 0.0
        %3905 = vmatpush1.msra.mxu0 0.0
        %3906 = vmatprep.subr.mxu0 0.0
        %3907 = vmatpush1.msra.mxu0 0.0
        %3908 = vmatprep.subr.mxu0 0.0
        %3909 = vmatpush1.msra.mxu0 0.0
        %3910 = vmatprep.subr.mxu0 0.0
        %3911 = vmatpush1.msra.mxu0 0.0
        %3912 = vmatprep.subr.mxu0 0.0
        %3913 = vmatpush1.msra.mxu0 0.0
        %3914 = vmatprep.subr.mxu0 0.0
        %3915 = vmatpush1.msra.mxu0 0.0
        %3916 = vmatprep.subr.mxu0 0.0
        %3917 = vmatpush1.msra.mxu0 0.0
        %3918 = vmatprep.subr.mxu0 0.0
        %3919 = vmatpush1.msra.mxu0 0.0
        %3920 = vmatprep.subr.mxu0 0.0
        %3921 = vmatpush1.msra.mxu0 0.0
        %3922 = vmatprep.subr.mxu0 0.0
        %3923 = vmatpush1.msra.mxu0 0.0
        %3924 = vmatprep.mubr.f32.mxu0 %v3858
        %3925 = vmatmul.mubr.f32.gmra.mrb[0].mxu0 %v3835
        %v3926 = vpop.f32.mrb[0].mxu0
        %v3927 = vadd.f32 0.0, %v3926
        %v3928 = vpop.f32.mrb[0].mxu0
        %3929 = vdwg.mxu0
        %v3930 = vld [vmem:[#allocation16] sm:$0xff]
        %v3931 = vld [vmem:[#allocation16 + $0x8] sm:$0xff]
        %v3932 = vld [vmem:[#allocation16 + $0x10] sm:$0xff]
        %v3933 = vld [vmem:[#allocation16 + $0x18] sm:$0xff]
        %v3934 = vld [vmem:[#allocation16 + $0x20] sm:$0xff]
        %v3935 = vld [vmem:[#allocation16 + $0x28] sm:$0xff]
        %v3936 = vld [vmem:[#allocation16 + $0x30] sm:$0xff]
        %v3937 = vld [vmem:[#allocation16 + $0x38] sm:$0xff]
        %v3938 = vld [vmem:[#allocation16 + $0x40] sm:$0xff]
        %v3939 = vld [vmem:[#allocation16 + $0x48] sm:$0xff]
        %v3940 = vld [vmem:[#allocation16 + $0x50] sm:$0xff]
        %v3941 = vld [vmem:[#allocation16 + $0x58] sm:$0xff]
        %v3942 = vld [vmem:[#allocation16 + $0x60] sm:$0xff]
        %v3943 = vld [vmem:[#allocation16 + $0x68] sm:$0xff]
        %v3944 = vld [vmem:[#allocation16 + $0x70] sm:$0xff]
        %v3945 = vld [vmem:[#allocation16 + $0x78] sm:$0xff]
        %v3946 = vld [vmem:[#allocation16 + $0x80] sm:$0xff]
        %v3947 = vld [vmem:[#allocation16 + $0x88] sm:$0xff]
        %v3948 = vld [vmem:[#allocation16 + $0x90] sm:$0xff]
        %v3949 = vld [vmem:[#allocation16 + $0x98] sm:$0xff]
        %3950 = vmatprep.subr.mxu0 0.0
        %3951 = vmatpush1.msra.mxu0 %v3930
        %3952 = vmatprep.subr.mxu0 0.0
        %3953 = vmatpush1.msra.mxu0 %v3931
        %3954 = vmatprep.subr.mxu0 0.0
        %3955 = vmatpush1.msra.mxu0 %v3932
        %3956 = vmatprep.subr.mxu0 0.0
        %3957 = vmatpush1.msra.mxu0 %v3933
        %3958 = vmatprep.subr.mxu0 0.0
        %3959 = vmatpush1.msra.mxu0 %v3934
        %3960 = vmatprep.subr.mxu0 0.0
        %3961 = vmatpush1.msra.mxu0 %v3935
        %3962 = vmatprep.subr.mxu0 0.0
        %3963 = vmatpush1.msra.mxu0 %v3936
        %3964 = vmatprep.subr.mxu0 0.0
        %3965 = vmatpush1.msra.mxu0 %v3937
        %3966 = vmatprep.subr.mxu0 0.0
        %3967 = vmatpush1.msra.mxu0 %v3938
        %3968 = vmatprep.subr.mxu0 0.0
        %3969 = vmatpush1.msra.mxu0 %v3939
        %3970 = vmatprep.subr.mxu0 0.0
        %3971 = vmatpush1.msra.mxu0 %v3940
        %3972 = vmatprep.subr.mxu0 0.0
        %3973 = vmatpush1.msra.mxu0 %v3941
        %3974 = vmatprep.subr.mxu0 0.0
        %3975 = vmatpush1.msra.mxu0 %v3942
        %3976 = vmatprep.subr.mxu0 0.0
        %3977 = vmatpush1.msra.mxu0 %v3943
        %3978 = vmatprep.subr.mxu0 0.0
        %3979 = vmatpush1.msra.mxu0 %v3944
        %3980 = vmatprep.subr.mxu0 0.0
        %3981 = vmatpush1.msra.mxu0 %v3945
        %3982 = vmatprep.subr.mxu0 0.0
        %3983 = vmatpush1.msra.mxu0 %v3946
        %3984 = vmatprep.subr.mxu0 0.0
        %3985 = vmatpush1.msra.mxu0 %v3947
        %3986 = vmatprep.subr.mxu0 0.0
        %3987 = vmatpush1.msra.mxu0 %v3948
        %3988 = vmatprep.subr.mxu0 0.0
        %3989 = vmatpush1.msra.mxu0 %v3949
        %3990 = vmatprep.subr.mxu0 0.0
        %3991 = vmatpush1.msra.mxu0 0.0
        %3992 = vmatprep.subr.mxu0 0.0
        %3993 = vmatpush1.msra.mxu0 0.0
        %3994 = vmatprep.subr.mxu0 0.0
        %3995 = vmatpush1.msra.mxu0 0.0
        %3996 = vmatprep.subr.mxu0 0.0
        %3997 = vmatpush1.msra.mxu0 0.0
        %3998 = vmatprep.subr.mxu0 0.0
        %3999 = vmatpush1.msra.mxu0 0.0
        %4000 = vmatprep.subr.mxu0 0.0
        %4001 = vmatpush1.msra.mxu0 0.0
        %4002 = vmatprep.subr.mxu0 0.0
        %4003 = vmatpush1.msra.mxu0 0.0
        %4004 = vmatprep.subr.mxu0 0.0
        %4005 = vmatpush1.msra.mxu0 0.0
        %4006 = vmatprep.subr.mxu0 0.0
        %4007 = vmatpush1.msra.mxu0 0.0
        %4008 = vmatprep.subr.mxu0 0.0
        %4009 = vmatpush1.msra.mxu0 0.0
        %4010 = vmatprep.subr.mxu0 0.0
        %4011 = vmatpush1.msra.mxu0 0.0
        %4012 = vmatprep.subr.mxu0 0.0
        %4013 = vmatpush1.msra.mxu0 0.0
        %4014 = vmatprep.mubr.f32.mxu0 %v3858
        %4015 = vmatmul.mubr.f32.gmra.mrb[0].mxu0 %v3835
        %v4016 = vpop.f32.mrb[0].mxu0
        %v4017 = vadd.f32 0.0, %v4016
        %v4018 = vpop.f32.mrb[0].mxu0
        %4019 = vdwg.mxu0
        %v4020 = vmax.f32 %v3927, %v4017
        %v4021 = vld [vmem:[%s8] sm:$0x1]
        %v4023 = vlaneseq
        %v4024 = vshrl.u32 %v4023, 7
        %v4025 = vsub.s32 0, %v4024
        %v4026 = vrot.slane %v4021, %v4025
        %v4028 = vadd.f32 %v4020, %v4026
        %v4029 = vmax.f32 %v4028, 0.0
        %v4030 = vpack.c.bf16 %v4029, %v4029
        %v4031 = vld [vmem:[#allocation17] sm:$0xf]
        %v4032 = vld [vmem:[#allocation17 + $0x4] sm:$0xf]
        %v4033 = vld [vmem:[#allocation17 + $0x8] sm:$0xf]
        %v4034 = vld [vmem:[#allocation17 + $0xc] sm:$0xf]
        %v4035 = vld [vmem:[#allocation17 + $0x10] sm:$0xf]
        %v4036 = vld [vmem:[#allocation17 + $0x14] sm:$0xf]
        %v4037 = vld [vmem:[#allocation17 + $0x18] sm:$0xf]
        %v4038 = vld [vmem:[#allocation17 + $0x1c] sm:$0xf]
        %v4039 = vld [vmem:[#allocation17 + $0x20] sm:$0xf]
        %v4040 = vld [vmem:[#allocation17 + $0x24] sm:$0xf]
        %s4041 = scalar_lea.vmem [#allocation17], 40
        %v4042 = vld [vmem:[%s4041] sm:$0xf]
        %v4043 = vld [vmem:[%s4041 + $0x4] sm:$0xf]
        %v4044 = vld [vmem:[%s4041 + $0x8] sm:$0xf]
        %v4045 = vld [vmem:[%s4041 + $0xc] sm:$0xf]
        %v4046 = vld [vmem:[%s4041 + $0x10] sm:$0xf]
        %v4047 = vld [vmem:[%s4041 + $0x14] sm:$0xf]
        %v4048 = vld [vmem:[%s4041 + $0x18] sm:$0xf]
        %v4049 = vld [vmem:[%s4041 + $0x1c] sm:$0xf]
        %v4050 = vld [vmem:[%s4041 + $0x20] sm:$0xf]
        %v4051 = vld [vmem:[%s4041 + $0x24] sm:$0xf]
        %v4053 = vshrl.u32 %v4030, 16
        %v4065 = vunpack.c.l.b16 %v4042
        %v4066 = vunpack.c.l.b16 %v4043
        %v4067 = vunpack.c.l.b16 %v4044
        %v4068 = vunpack.c.l.b16 %v4045
        %v4069 = vunpack.c.l.b16 %v4046
        %v4070 = vunpack.c.l.b16 %v4047
        %v4071 = vunpack.c.l.b16 %v4048
        %v4072 = vunpack.c.l.b16 %v4049
        %v4073 = vunpack.c.l.b16 %v4050
        %v4074 = vunpack.c.l.b16 %v4051
        %v4075 = vpack.c.b16 %v4066, %v4065
        %v4076 = vpack.c.b16 %v4068, %v4067
        %v4077 = vpack.c.b16 %v4070, %v4069
        %v4078 = vpack.c.b16 %v4072, %v4071
        %v4079 = vpack.c.b16 %v4074, %v4073
        %vm4085 = vcmask 654336
        %v4087 = vsel %vm4085, %v4053, 0
        %4089 = vmatprep.subr.bf16.mxu0 0
        %4090 = vmatpush1.bf16.msra.mxu0 %v4075
        %4091 = vmatprep.subr.bf16.mxu0 0
        %4092 = vmatpush1.bf16.msra.mxu0 %v4076
        %4093 = vmatprep.subr.bf16.mxu0 0
        %4094 = vmatpush1.bf16.msra.mxu0 %v4077
        %4095 = vmatprep.subr.bf16.mxu0 0
        %4096 = vmatpush1.bf16.msra.mxu0 %v4078
        %4097 = vmatprep.subr.bf16.mxu0 0
        %4098 = vmatpush1.bf16.msra.mxu0 %v4079
        %4099 = vmatprep.subr.bf16.mxu0 0
        %4100 = vmatpush1.bf16.msra.mxu0 0
        %4101 = vmatprep.subr.bf16.mxu0 0
        %4102 = vmatpush1.bf16.msra.mxu0 0
        %4103 = vmatprep.subr.bf16.mxu0 0
        %4104 = vmatpush1.bf16.msra.mxu0 0
        %4105 = vmatprep.subr.bf16.mxu0 0
        %4106 = vmatpush1.bf16.msra.mxu0 0
        %4107 = vmatprep.subr.bf16.mxu0 0
        %4108 = vmatpush1.bf16.msra.mxu0 0
        %4109 = vmatprep.subr.bf16.mxu0 0
        %4110 = vmatpush1.bf16.msra.mxu0 0
        %4111 = vmatprep.subr.bf16.mxu0 0
        %4112 = vmatpush1.bf16.msra.mxu0 0
        %4113 = vmatprep.subr.bf16.mxu0 0
        %4114 = vmatpush1.bf16.msra.mxu0 0
        %4115 = vmatprep.subr.bf16.mxu0 0
        %4116 = vmatpush1.bf16.msra.mxu0 0
        %4117 = vmatprep.subr.bf16.mxu0 0
        %4118 = vmatpush1.bf16.msra.mxu0 0
        %4119 = vmatprep.subr.bf16.mxu0 0
        %4120 = vmatpush1.bf16.msra.mxu0 0
        %4121 = vmatprep.mubr.bf16.mxu0 0
        %4122 = vmatmul.mubr.bf16.gmra.mrb[0].mxu0 %v4087
        %v4123 = vpop.f32.mrb[0].mxu0
        %v4124 = vadd.f32 0.0, %v4123
        %v4125 = vpop.f32.mrb[0].mxu0
        %v4126 = vpop.f32.mrb[0].mxu0
        %v4127 = vpop.f32.mrb[0].mxu0
        %4128 = vdwg.mxu0
        %v4139 = vunpack.c.l.b16 %v4031
        %v4140 = vunpack.c.l.b16 %v4032
        %v4141 = vunpack.c.l.b16 %v4033
        %v4142 = vunpack.c.l.b16 %v4034
        %v4143 = vunpack.c.l.b16 %v4035
        %v4144 = vunpack.c.l.b16 %v4036
        %v4145 = vunpack.c.l.b16 %v4037
        %v4146 = vunpack.c.l.b16 %v4038
        %v4147 = vunpack.c.l.b16 %v4039
        %v4148 = vunpack.c.l.b16 %v4040
        %v4149 = vpack.c.b16 %v4140, %v4139
        %v4150 = vpack.c.b16 %v4142, %v4141
        %v4151 = vpack.c.b16 %v4144, %v4143
        %v4152 = vpack.c.b16 %v4146, %v4145
        %v4153 = vpack.c.b16 %v4148, %v4147
        %v4159 = vsel %vm4085, %v4030, 0
        %4161 = vmatprep.subr.bf16.mxu0 0
        %4162 = vmatpush1.bf16.msra.mxu0 %v4149
        %4163 = vmatprep.subr.bf16.mxu0 0
        %4164 = vmatpush1.bf16.msra.mxu0 %v4150
        %4165 = vmatprep.subr.bf16.mxu0 0
        %4166 = vmatpush1.bf16.msra.mxu0 %v4151
        %4167 = vmatprep.subr.bf16.mxu0 0
        %4168 = vmatpush1.bf16.msra.mxu0 %v4152
        %4169 = vmatprep.subr.bf16.mxu0 0
        %4170 = vmatpush1.bf16.msra.mxu0 %v4153
        %4171 = vmatprep.subr.bf16.mxu0 0
        %4172 = vmatpush1.bf16.msra.mxu0 0
        %4173 = vmatprep.subr.bf16.mxu0 0
        %4174 = vmatpush1.bf16.msra.mxu0 0
        %4175 = vmatprep.subr.bf16.mxu0 0
        %4176 = vmatpush1.bf16.msra.mxu0 0
        %4177 = vmatprep.subr.bf16.mxu0 0
        %4178 = vmatpush1.bf16.msra.mxu0 0
        %4179 = vmatprep.subr.bf16.mxu0 0
        %4180 = vmatpush1.bf16.msra.mxu0 0
        %4181 = vmatprep.subr.bf16.mxu0 0
        %4182 = vmatpush1.bf16.msra.mxu0 0
        %4183 = vmatprep.subr.bf16.mxu0 0
        %4184 = vmatpush1.bf16.msra.mxu0 0
        %4185 = vmatprep.subr.bf16.mxu0 0
        %4186 = vmatpush1.bf16.msra.mxu0 0
        %4187 = vmatprep.subr.bf16.mxu0 0
        %4188 = vmatpush1.bf16.msra.mxu0 0
        %4189 = vmatprep.subr.bf16.mxu0 0
        %4190 = vmatpush1.bf16.msra.mxu0 0
        %4191 = vmatprep.subr.bf16.mxu0 0
        %4192 = vmatpush1.bf16.msra.mxu0 0
        %4193 = vmatprep.mubr.bf16.mxu0 0
        %4194 = vmatmul.mubr.bf16.gmra.mrb[0].mxu0 %v4159
        %v4195 = vpop.f32.mrb[0].mxu0
        %v4196 = vadd.f32 %v4124, %v4195
        %v4197 = vpop.f32.mrb[0].mxu0
        %v4198 = vpop.f32.mrb[0].mxu0
        %v4199 = vpop.f32.mrb[0].mxu0
        %4200 = vdwg.mxu0
        %s4201 = scalar_lea.vmem [#allocation17], 80
        %v4202 = vld [vmem:[%s4201] sm:$0xf]
        %v4203 = vld [vmem:[%s4201 + $0x4] sm:$0xf]
        %v4204 = vld [vmem:[%s4201 + $0x8] sm:$0xf]
        %v4205 = vld [vmem:[%s4201 + $0xc] sm:$0xf]
        %v4206 = vld [vmem:[%s4201 + $0x10] sm:$0xf]
        %v4207 = vld [vmem:[%s4201 + $0x14] sm:$0xf]
        %v4208 = vld [vmem:[%s4201 + $0x18] sm:$0xf]
        %v4209 = vld [vmem:[%s4201 + $0x1c] sm:$0xf]
        %v4210 = vld [vmem:[%s4201 + $0x20] sm:$0xf]
        %v4211 = vld [vmem:[%s4201 + $0x24] sm:$0xf]
        %v4213 = vrot.slane %v4030, 1
        %v4224 = vunpack.c.l.b16 %v4202
        %v4225 = vunpack.c.l.b16 %v4203
        %v4226 = vunpack.c.l.b16 %v4204
        %v4227 = vunpack.c.l.b16 %v4205
        %v4228 = vunpack.c.l.b16 %v4206
        %v4229 = vunpack.c.l.b16 %v4207
        %v4230 = vunpack.c.l.b16 %v4208
        %v4231 = vunpack.c.l.b16 %v4209
        %v4232 = vunpack.c.l.b16 %v4210
        %v4233 = vunpack.c.l.b16 %v4211
        %v4234 = vpack.c.b16 %v4225, %v4224
        %v4235 = vpack.c.b16 %v4227, %v4226
        %v4236 = vpack.c.b16 %v4229, %v4228
        %v4237 = vpack.c.b16 %v4231, %v4230
        %v4238 = vpack.c.b16 %v4233, %v4232
        %v4245 = vsel %vm4085, %v4213, 0
        %4247 = vmatprep.subr.bf16.mxu0 0
        %4248 = vmatpush1.bf16.msra.mxu0 %v4234
        %4249 = vmatprep.subr.bf16.mxu0 0
        %4250 = vmatpush1.bf16.msra.mxu0 %v4235
        %4251 = vmatprep.subr.bf16.mxu0 0
        %4252 = vmatpush1.bf16.msra.mxu0 %v4236
        %4253 = vmatprep.subr.bf16.mxu0 0
        %4254 = vmatpush1.bf16.msra.mxu0 %v4237
        %4255 = vmatprep.subr.bf16.mxu0 0
        %4256 = vmatpush1.bf16.msra.mxu0 %v4238
        %4257 = vmatprep.subr.bf16.mxu0 0
        %4258 = vmatpush1.bf16.msra.mxu0 0
        %4259 = vmatprep.subr.bf16.mxu0 0
        %4260 = vmatpush1.bf16.msra.mxu0 0
        %4261 = vmatprep.subr.bf16.mxu0 0
        %4262 = vmatpush1.bf16.msra.mxu0 0
        %4263 = vmatprep.subr.bf16.mxu0 0
        %4264 = vmatpush1.bf16.msra.mxu0 0
        %4265 = vmatprep.subr.bf16.mxu0 0
        %4266 = vmatpush1.bf16.msra.mxu0 0
        %4267 = vmatprep.subr.bf16.mxu0 0
        %4268 = vmatpush1.bf16.msra.mxu0 0
        %4269 = vmatprep.subr.bf16.mxu0 0
        %4270 = vmatpush1.bf16.msra.mxu0 0
        %4271 = vmatprep.subr.bf16.mxu0 0
        %4272 = vmatpush1.bf16.msra.mxu0 0
        %4273 = vmatprep.subr.bf16.mxu0 0
        %4274 = vmatpush1.bf16.msra.mxu0 0
        %4275 = vmatprep.subr.bf16.mxu0 0
        %4276 = vmatpush1.bf16.msra.mxu0 0
        %4277 = vmatprep.subr.bf16.mxu0 0
        %4278 = vmatpush1.bf16.msra.mxu0 0
        %4279 = vmatprep.mubr.bf16.mxu0 0
        %4280 = vmatmul.mubr.bf16.gmra.mrb[0].mxu0 %v4245
        %v4281 = vpop.f32.mrb[0].mxu0
        %v4282 = vadd.f32 0.0, %v4281
        %v4283 = vpop.f32.mrb[0].mxu0
        %v4284 = vpop.f32.mrb[0].mxu0
        %v4285 = vpop.f32.mrb[0].mxu0
        %4286 = vdwg.mxu0
        %v4287 = vadd.f32 %v4196, %v4282
        %s4288 = scalar_lea.vmem [#allocation17], 120
        %v4289 = vld [vmem:[%s4288] sm:$0xf]
        %v4290 = vld [vmem:[%s4288 + $0x4] sm:$0xf]
        %v4291 = vld [vmem:[%s4288 + $0x8] sm:$0xf]
        %v4292 = vld [vmem:[%s4288 + $0xc] sm:$0xf]
        %v4293 = vld [vmem:[%s4288 + $0x10] sm:$0xf]
        %v4294 = vld [vmem:[%s4288 + $0x14] sm:$0xf]
        %v4295 = vld [vmem:[%s4288 + $0x18] sm:$0xf]
        %v4296 = vld [vmem:[%s4288 + $0x1c] sm:$0xf]
        %v4297 = vld [vmem:[%s4288 + $0x20] sm:$0xf]
        %v4298 = vld [vmem:[%s4288 + $0x24] sm:$0xf]
        %v4299 = vrot.slane %v4053, 1
        %v4310 = vunpack.c.l.b16 %v4289
        %v4311 = vunpack.c.l.b16 %v4290
        %v4312 = vunpack.c.l.b16 %v4291
        %v4313 = vunpack.c.l.b16 %v4292
        %v4314 = vunpack.c.l.b16 %v4293
        %v4315 = vunpack.c.l.b16 %v4294
        %v4316 = vunpack.c.l.b16 %v4295
        %v4317 = vunpack.c.l.b16 %v4296
        %v4318 = vunpack.c.l.b16 %v4297
        %v4319 = vunpack.c.l.b16 %v4298
        %v4320 = vpack.c.b16 %v4311, %v4310
        %v4321 = vpack.c.b16 %v4313, %v4312
        %v4322 = vpack.c.b16 %v4315, %v4314
        %v4323 = vpack.c.b16 %v4317, %v4316
        %v4324 = vpack.c.b16 %v4319, %v4318
        %v4331 = vsel %vm4085, %v4299, 0
        %4333 = vmatprep.subr.bf16.mxu0 0
        %4334 = vmatpush1.bf16.msra.mxu0 %v4320
        %4335 = vmatprep.subr.bf16.mxu0 0
        %4336 = vmatpush1.bf16.msra.mxu0 %v4321
        %4337 = vmatprep.subr.bf16.mxu0 0
        %4338 = vmatpush1.bf16.msra.mxu0 %v4322
        %4339 = vmatprep.subr.bf16.mxu0 0
        %4340 = vmatpush1.bf16.msra.mxu0 %v4323
        %4341 = vmatprep.subr.bf16.mxu0 0
        %4342 = vmatpush1.bf16.msra.mxu0 %v4324
        %4343 = vmatprep.subr.bf16.mxu0 0
        %4344 = vmatpush1.bf16.msra.mxu0 0
        %4345 = vmatprep.subr.bf16.mxu0 0
        %4346 = vmatpush1.bf16.msra.mxu0 0
        %4347 = vmatprep.subr.bf16.mxu0 0
        %4348 = vmatpush1.bf16.msra.mxu0 0
        %4349 = vmatprep.subr.bf16.mxu0 0
        %4350 = vmatpush1.bf16.msra.mxu0 0
        %4351 = vmatprep.subr.bf16.mxu0 0
        %4352 = vmatpush1.bf16.msra.mxu0 0
        %4353 = vmatprep.subr.bf16.mxu0 0
        %4354 = vmatpush1.bf16.msra.mxu0 0
        %4355 = vmatprep.subr.bf16.mxu0 0
        %4356 = vmatpush1.bf16.msra.mxu0 0
        %4357 = vmatprep.subr.bf16.mxu0 0
        %4358 = vmatpush1.bf16.msra.mxu0 0
        %4359 = vmatprep.subr.bf16.mxu0 0
        %4360 = vmatpush1.bf16.msra.mxu0 0
        %4361 = vmatprep.subr.bf16.mxu0 0
        %4362 = vmatpush1.bf16.msra.mxu0 0
        %4363 = vmatprep.subr.bf16.mxu0 0
        %4364 = vmatpush1.bf16.msra.mxu0 0
        %4365 = vmatprep.mubr.bf16.mxu0 0
        %4366 = vmatmul.mubr.bf16.gmra.mrb[0].mxu0 %v4331
        %v4367 = vpop.f32.mrb[0].mxu0
        %v4368 = vadd.f32 0.0, %v4367
        %v4369 = vpop.f32.mrb[0].mxu0
        %v4370 = vpop.f32.mrb[0].mxu0
        %v4371 = vpop.f32.mrb[0].mxu0
        %4372 = vdwg.mxu0
        %v4373 = vadd.f32 %v4287, %v4368
        %s4374 = scalar_lea.vmem [#allocation17], 160
        %v4375 = vld [vmem:[%s4374] sm:$0xf]
        %v4376 = vld [vmem:[%s4374 + $0x4] sm:$0xf]
        %v4377 = vld [vmem:[%s4374 + $0x8] sm:$0xf]
        %v4378 = vld [vmem:[%s4374 + $0xc] sm:$0xf]
        %v4379 = vld [vmem:[%s4374 + $0x10] sm:$0xf]
        %v4380 = vld [vmem:[%s4374 + $0x14] sm:$0xf]
        %v4381 = vld [vmem:[%s4374 + $0x18] sm:$0xf]
        %v4382 = vld [vmem:[%s4374 + $0x1c] sm:$0xf]
        %v4383 = vld [vmem:[%s4374 + $0x20] sm:$0xf]
        %v4384 = vld [vmem:[%s4374 + $0x24] sm:$0xf]
        %v4385 = vrot.slane %v4030, 2
        %v4396 = vunpack.c.l.b16 %v4375
        %v4397 = vunpack.c.l.b16 %v4376
        %v4398 = vunpack.c.l.b16 %v4377
        %v4399 = vunpack.c.l.b16 %v4378
        %v4400 = vunpack.c.l.b16 %v4379
        %v4401 = vunpack.c.l.b16 %v4380
        %v4402 = vunpack.c.l.b16 %v4381
        %v4403 = vunpack.c.l.b16 %v4382
        %v4404 = vunpack.c.l.b16 %v4383
        %v4405 = vunpack.c.l.b16 %v4384
        %v4406 = vpack.c.b16 %v4397, %v4396
        %v4407 = vpack.c.b16 %v4399, %v4398
        %v4408 = vpack.c.b16 %v4401, %v4400
        %v4409 = vpack.c.b16 %v4403, %v4402
        %v4410 = vpack.c.b16 %v4405, %v4404
        %v4417 = vsel %vm4085, %v4385, 0
        %4419 = vmatprep.subr.bf16.mxu0 0
        %4420 = vmatpush1.bf16.msra.mxu0 %v4406
        %4421 = vmatprep.subr.bf16.mxu0 0
        %4422 = vmatpush1.bf16.msra.mxu0 %v4407
        %4423 = vmatprep.subr.bf16.mxu0 0
        %4424 = vmatpush1.bf16.msra.mxu0 %v4408
        %4425 = vmatprep.subr.bf16.mxu0 0
        %4426 = vmatpush1.bf16.msra.mxu0 %v4409
        %4427 = vmatprep.subr.bf16.mxu0 0
        %4428 = vmatpush1.bf16.msra.mxu0 %v4410
        %4429 = vmatprep.subr.bf16.mxu0 0
        %4430 = vmatpush1.bf16.msra.mxu0 0
        %4431 = vmatprep.subr.bf16.mxu0 0
        %4432 = vmatpush1.bf16.msra.mxu0 0
        %4433 = vmatprep.subr.bf16.mxu0 0
        %4434 = vmatpush1.bf16.msra.mxu0 0
        %4435 = vmatprep.subr.bf16.mxu0 0
        %4436 = vmatpush1.bf16.msra.mxu0 0
        %4437 = vmatprep.subr.bf16.mxu0 0
        %4438 = vmatpush1.bf16.msra.mxu0 0
        %4439 = vmatprep.subr.bf16.mxu0 0
        %4440 = vmatpush1.bf16.msra.mxu0 0
        %4441 = vmatprep.subr.bf16.mxu0 0
        %4442 = vmatpush1.bf16.msra.mxu0 0
        %4443 = vmatprep.subr.bf16.mxu0 0
        %4444 = vmatpush1.bf16.msra.mxu0 0
        %4445 = vmatprep.subr.bf16.mxu0 0
        %4446 = vmatpush1.bf16.msra.mxu0 0
        %4447 = vmatprep.subr.bf16.mxu0 0
        %4448 = vmatpush1.bf16.msra.mxu0 0
        %4449 = vmatprep.subr.bf16.mxu0 0
        %4450 = vmatpush1.bf16.msra.mxu0 0
        %4451 = vmatprep.mubr.bf16.mxu0 0
        %4452 = vmatmul.mubr.bf16.gmra.mrb[0].mxu0 %v4417
        %v4453 = vpop.f32.mrb[0].mxu0
        %v4454 = vadd.f32 0.0, %v4453
        %v4455 = vpop.f32.mrb[0].mxu0
        %v4456 = vpop.f32.mrb[0].mxu0
        %v4457 = vpop.f32.mrb[0].mxu0
        %4458 = vdwg.mxu0
        %v4459 = vadd.f32 %v4373, %v4454
        %v4460 = vld [vmem:[%s14] sm:$0x1]
        %v4461 = vadd.f32 %v4459, %v4460
        %v4462 = vmax.f32 %v4461, 0.0
        %v4463 = vpack.c.bf16 %v4462, %v4462
        %v4464 = vld [vmem:[%s15] sm:$0xf]
        %v4465 = vld [vmem:[%s15 + $0x4] sm:$0xf]
        %v4466 = vld [vmem:[%s15 + $0x8] sm:$0xf]
        %v4467 = vld [vmem:[%s15 + $0xc] sm:$0xf]
        %v4468 = vld [vmem:[%s15 + $0x10] sm:$0xf]
        %v4469 = vld [vmem:[%s15 + $0x14] sm:$0xf]
        %v4470 = vld [vmem:[%s15 + $0x18] sm:$0xf]
        %v4471 = vld [vmem:[%s15 + $0x1c] sm:$0xf]
        %v4472 = vld [vmem:[%s15 + $0x20] sm:$0xf]
        %v4473 = vld [vmem:[%s15 + $0x24] sm:$0xf]
        %v4474 = vld [vmem:[%s15 + $0x28] sm:$0xf]
        %v4475 = vld [vmem:[%s15 + $0x2c] sm:$0xf]
        %v4476 = vld [vmem:[%s15 + $0x30] sm:$0xf]
        %v4477 = vld [vmem:[%s15 + $0x34] sm:$0xf]
        %v4478 = vld [vmem:[%s15 + $0x38] sm:$0xf]
        %v4479 = vld [vmem:[%s16] sm:$0x1]
        %v4495 = vunpack.c.l.b16 %v4464
        %v4496 = vunpack.c.l.b16 %v4465
        %v4497 = vunpack.c.l.b16 %v4466
        %v4498 = vunpack.c.l.b16 %v4467
        %v4499 = vunpack.c.l.b16 %v4468
        %v4500 = vunpack.c.l.b16 %v4469
        %v4501 = vunpack.c.l.b16 %v4470
        %v4502 = vunpack.c.l.b16 %v4471
        %v4503 = vunpack.c.l.b16 %v4472
        %v4504 = vunpack.c.l.b16 %v4473
        %v4505 = vunpack.c.l.b16 %v4474
        %v4506 = vunpack.c.l.b16 %v4475
        %v4507 = vunpack.c.l.b16 %v4476
        %v4508 = vunpack.c.l.b16 %v4477
        %v4509 = vunpack.c.l.b16 %v4478
        %v4510 = vpack.c.b16 %v4496, %v4495
        %v4511 = vpack.c.b16 %v4498, %v4497
        %v4512 = vpack.c.b16 %v4500, %v4499
        %v4513 = vpack.c.b16 %v4502, %v4501
        %v4514 = vpack.c.b16 %v4504, %v4503
        %v4515 = vpack.c.b16 %v4506, %v4505
        %v4516 = vpack.c.b16 %v4508, %v4507
        %v4517 = vpack.c.b16 %v4509, %v4509
        %vm4525 = vcmask 982016
        %v4527 = vsel %vm4525, %v4463, 0
        %v4530 = vsel %vm1226, %v4517, 0
        %4532 = vmatprep.subr.bf16.mxu0 0
        %4533 = vmatpush1.bf16.msra.mxu0 %v4510
        %4534 = vmatprep.subr.bf16.mxu0 0
        %4535 = vmatpush1.bf16.msra.mxu0 %v4511
        %4536 = vmatprep.subr.bf16.mxu0 0
        %4537 = vmatpush1.bf16.msra.mxu0 %v4512
        %4538 = vmatprep.subr.bf16.mxu0 0
        %4539 = vmatpush1.bf16.msra.mxu0 %v4513
        %4540 = vmatprep.subr.bf16.mxu0 0
        %4541 = vmatpush1.bf16.msra.mxu0 %v4514
        %4542 = vmatprep.subr.bf16.mxu0 0
        %4543 = vmatpush1.bf16.msra.mxu0 %v4515
        %4544 = vmatprep.subr.bf16.mxu0 0
        %4545 = vmatpush1.bf16.msra.mxu0 %v4516
        %4546 = vmatprep.subr.bf16.mxu0 0
        %4547 = vmatpush1.bf16.msra.mxu0 %v4530
        %4548 = vmatprep.subr.bf16.mxu0 0
        %4549 = vmatpush1.bf16.msra.mxu0 0
        %4550 = vmatprep.subr.bf16.mxu0 0
        %4551 = vmatpush1.bf16.msra.mxu0 0
        %4552 = vmatprep.subr.bf16.mxu0 0
        %4553 = vmatpush1.bf16.msra.mxu0 0
        %4554 = vmatprep.subr.bf16.mxu0 0
        %4555 = vmatpush1.bf16.msra.mxu0 0
        %4556 = vmatprep.subr.bf16.mxu0 0
        %4557 = vmatpush1.bf16.msra.mxu0 0
        %4558 = vmatprep.subr.bf16.mxu0 0
        %4559 = vmatpush1.bf16.msra.mxu0 0
        %4560 = vmatprep.subr.bf16.mxu0 0
        %4561 = vmatpush1.bf16.msra.mxu0 0
        %4562 = vmatprep.subr.bf16.mxu0 0
        %4563 = vmatpush1.bf16.msra.mxu0 0
        %4564 = vmatprep.mubr.bf16.mxu0 0
        %4565 = vmatmul.mubr.bf16.gmra.mrb[0].mxu0 %v4527
        %v4566 = vpop.f32.mrb[0].mxu0
        %v4567 = vadd.f32 %v4479, %v4566
        %v4568 = vpop.f32.mrb[0].mxu0
        %v4569 = vpop.f32.mrb[0].mxu0
        %v4570 = vpop.f32.mrb[0].mxu0
        %4571 = vdwg.mxu0
        %v4572 = vmax.f32 %v4567, 0.0
        %v4573 = vpack.c.bf16 %v4572, %v4572
        %v4574 = vld [vmem:[%s17] sm:$0xf]
        %v4575 = vld [vmem:[%s17 + $0x4] sm:$0xf]
        %v4576 = vld [vmem:[%s17 + $0x8] sm:$0xf]
        %v4577 = vld [vmem:[%s17 + $0xc] sm:$0xf]
        %v4578 = vld [vmem:[%s17 + $0x10] sm:$0xf]
        %v4579 = vld [vmem:[%s17 + $0x14] sm:$0xf]
        %v4580 = vld [vmem:[%s17 + $0x18] sm:$0xf]
        %v4581 = vld [vmem:[%s17 + $0x1c] sm:$0xf]
        %v4582 = vld [vmem:[%s17 + $0x20] sm:$0xf]
        %v4583 = vld [vmem:[%s17 + $0x24] sm:$0xf]
        %v4584 = vld [vmem:[%s17 + $0x28] sm:$0x3]
        %v4585 = vld [vmem:[%s18] sm:$0x1]
        %v4597 = vunpack.c.l.b16 %v4574
        %v4598 = vunpack.c.l.b16 %v4575
        %v4599 = vunpack.c.l.b16 %v4576
        %v4600 = vunpack.c.l.b16 %v4577
        %v4601 = vunpack.c.l.b16 %v4578
        %v4602 = vunpack.c.l.b16 %v4579
        %v4603 = vunpack.c.l.b16 %v4580
        %v4604 = vunpack.c.l.b16 %v4581
        %v4605 = vunpack.c.l.b16 %v4582
        %v4606 = vunpack.c.l.b16 %v4583
        %v4607 = vunpack.c.l.b16 %v4584
        %v4608 = vpack.c.b16 %v4598, %v4597
        %v4609 = vpack.c.b16 %v4600, %v4599
        %v4610 = vpack.c.b16 %v4602, %v4601
        %v4611 = vpack.c.b16 %v4604, %v4603
        %v4612 = vpack.c.b16 %v4606, %v4605
        %v4613 = vpack.c.b16 %v4607, %v4607
        %vm4619 = vcmask 687104
        %v4621 = vsel %vm4619, %v4573, 0
        %v4624 = vsel %vm3682, %v4613, 0
        %4626 = vmatprep.subr.bf16.mxu0 0
        %4627 = vmatpush1.bf16.msra.mxu0 %v4608
        %4628 = vmatprep.subr.bf16.mxu0 0
        %4629 = vmatpush1.bf16.msra.mxu0 %v4609
        %4630 = vmatprep.subr.bf16.mxu0 0
        %4631 = vmatpush1.bf16.msra.mxu0 %v4610
        %4632 = vmatprep.subr.bf16.mxu0 0
        %4633 = vmatpush1.bf16.msra.mxu0 %v4611
        %4634 = vmatprep.subr.bf16.mxu0 0
        %4635 = vmatpush1.bf16.msra.mxu0 %v4612
        %4636 = vmatprep.subr.bf16.mxu0 0
        %4637 = vmatpush1.bf16.msra.mxu0 %v4624
        %4638 = vmatprep.subr.bf16.mxu0 0
        %4639 = vmatpush1.bf16.msra.mxu0 0
        %4640 = vmatprep.subr.bf16.mxu0 0
        %4641 = vmatpush1.bf16.msra.mxu0 0
        %4642 = vmatprep.subr.bf16.mxu0 0
        %4643 = vmatpush1.bf16.msra.mxu0 0
        %4644 = vmatprep.subr.bf16.mxu0 0
        %4645 = vmatpush1.bf16.msra.mxu0 0
        %4646 = vmatprep.subr.bf16.mxu0 0
        %4647 = vmatpush1.bf16.msra.mxu0 0
        %4648 = vmatprep.subr.bf16.mxu0 0
        %4649 = vmatpush1.bf16.msra.mxu0 0
        %4650 = vmatprep.subr.bf16.mxu0 0
        %4651 = vmatpush1.bf16.msra.mxu0 0
        %4652 = vmatprep.subr.bf16.mxu0 0
        %4653 = vmatpush1.bf16.msra.mxu0 0
        %4654 = vmatprep.subr.bf16.mxu0 0
        %4655 = vmatpush1.bf16.msra.mxu0 0
        %4656 = vmatprep.subr.bf16.mxu0 0
        %4657 = vmatpush1.bf16.msra.mxu0 0
        %4658 = vmatprep.mubr.bf16.mxu0 0
        %4659 = vmatmul.mubr.bf16.gmra.mrb[0].mxu0 %v4621
        %v4660 = vpop.f32.mrb[0].mxu0
        %v4661 = vadd.f32 %v4585, %v4660
        %v4662 = vpop.f32.mrb[0].mxu0
        %v4663 = vpop.f32.mrb[0].mxu0
        %v4664 = vpop.f32.mrb[0].mxu0
        %4665 = vdwg.mxu0
        %vm4666 = vcmask 73728
        %4667 = vst.msk [vmem:[%s736] sm:$0x1] %vm4666, %v4661
        %s4668 = sand.u32 %s451, 1
        %s4669 = scalar_lea.sflag [#allocation4], %s4668
        %s4670 = sand.u32 %s451, 1
        %s4671 = scalar_lea.vmem [#allocation19], %s4670
        // Predicated region
        $region137: #{lenet_forward.1} parent=95 // pred_check
          %p4672 = pneg %p461
        $region138: #{lenet_forward.1} parent=95 // pred_check_branch
          %4674 = sbr.rel (%p4672) target = $region140
        $region139: #{lenet_forward.1} parent=95 // pred_region
          %s4676 = ssub.s32 16, 16
          %4677 = vsyncadd %s4669, %s4676
          %s4678 = smul.addr %s39, 16
          %s4679 = scalar_lea.hbm %s19, %s4678
          %s4681 = sshll.u32 %s4671, 4
          %s4682 = int_to_ptr.vmem [resolvable:$true] %s4681
          %4684 = dma.vmem_to_hbm [thread:$0]  %s4682, 16, %s4679, %s4669
        $region140: #{lenet_forward.1} parent=95 // pred_fallthru
          _
      $region96: #{lenet_forward.1} parent=5 // pred_fallthru
        _
      %p4685 = scmp.le.s32.totalorder 2, %s34
      // Predicated region
      $region141: #{lenet_forward.1} parent=5 // pred_check
        %p4686 = pneg %p4685
      $region142: #{lenet_forward.1} parent=5 // pred_check_branch
        %4688 = sbr.rel (%p4686) target = $region144
      $region143: #{lenet_forward.1} parent=5 // pred_region
        %s4689 = ssub.s32 %s34, 2
        // Predicated region
        $region145: #{lenet_forward.1} parent=143 // pred_check
          %p4690 = pneg %p467
        $region146: #{lenet_forward.1} parent=143 // pred_check_branch
          %4692 = sbr.rel (%p4690) target = $region148
        $region147: #{lenet_forward.1} parent=143 // pred_region
          %s4693 = sand.u32 %s452, 1
          %s4694 = scalar_lea.sflag [#allocation4], %s4693
          %s4695 = sand.u32 %s452, 1
          %s4696 = scalar_lea.vmem [#allocation19], %s4695
          %4697 = dma.done %s4694, 16
        $region148: #{lenet_forward.1} parent=143 // pred_fallthru
          _
      $region144: #{lenet_forward.1} parent=5 // pred_fallthru
        _
    $region6: #{lenet_forward.1} parent=1 // loop_footer
      %s38 = sadd.s32 1, %s34
    $region7: #{lenet_forward.1} parent=1 // loop_footer_branch
      %33 = sbr.rel target = $region3
    $region8: #{lenet_forward.1} parent=1 // loop_exit
      _
    %4698 = vsyncpa [#allocation3], 1
    %s4699 = scalar_lea.sflag [#allocation3], 1
    %4700 = vsyncpa %s4699, 1
    %4701 = vsyncpa [#allocation6], 1
    %4702 = vsyncpa [#allocation9], 1
    %4703 = vsyncpa [#allocation12], 1
    %4704 = vsyncpa [#allocation15], 1
    %4705 = vsyncpa [#allocation18], 1
    %4706 = vsyncpa [#allocation4], 1
    %s4707 = scalar_lea.sflag [#allocation4], 1
    %4708 = vsyncpa %s4707, 1

</llo_original>
